<compile_context>
chip_gen: v7x
topology: tpu7x:2x2x1
jax: 0.10.0
libtpu: 0.0.40
codegen_flags: <defaults>
</compile_context>

<pallas_src>
import math

import jax
import jax.numpy as jnp
from jax.experimental import pallas as pl
from jax.experimental.pallas import tpu as pltpu

# ---------------- config (small synthetic shapes) ----------------
B, S, H = 2, 8, 32          # batch, seq_len, hidden_size
NUM_HEADS = 4
DH = H // NUM_HEADS
NUM_BLOCKS = 2              # args.num_blocks
FF = 4 * H
LAMBDA_UNCERTAINTY = 0.001  # args.lambda_uncertainty
EPS = 1e-12
GELU_C = math.sqrt(2.0 / math.pi)
NEG_BIG = -1000000000.0
SCALE = 1.0 / math.sqrt(DH)


def _layernorm(x, g, b):
    # TF-style LayerNorm (eps inside sqrt); single pass over centered values.
    u = jnp.mean(x, axis=-1, keepdims=True)
    xc = x - u
    s = jnp.mean(xc * xc, axis=-1, keepdims=True)
    return g * (xc * jax.lax.rsqrt(s + EPS)) + b


# ---------------- fused kernel: prep + NUM_BLOCKS (unrolled) blocks + final LN ----------------
def fused_kernel(rep_ref, xt_ref, tse_ref, lam_ref, scal_ref,
                 tew1_ref, teb1_ref, tew2_ref, cvec_ref,
                 wqkv_ref, bqkv_ref, wo_ref, w1_ref, b1_ref, w2_ref, bvec_ref,
                 rep_out_ref, te_out_ref):
    cvec = cvec_ref[...]                         # (8,H): rows = [t2v_n_w, t2v_n_b,
                                                 #   t2v_d_w, t2v_d_b, te_b2, lnf_w, lnf_b, pad]

    # ---- time_embed: Linear(H,4H) -> SiLU -> Linear(4H,H) on sinusoidal timestep emb ----
    h = jnp.dot(tse_ref[...], tew1_ref[...],
                preferred_element_type=jnp.float32) + teb1_ref[...]
    h = h * jax.nn.sigmoid(h)                                        # SiLU
    emb_t = jnp.dot(h, tew2_ref[...],
                    preferred_element_type=jnp.float32) + cvec[4:5, :]
    x_t_new = xt_ref[...] + emb_t                                    # x_t = x_t + emb_t, (1,H)

    # ---- Time2Vec('sin'): columns [0, H-2] are sin(tau*w+b), last column is linear ----
    scal = scal_ref[...]                                             # (S,8) packed scalars
    tau_n = scal[:, 0:1]
    tau_d = scal[:, 1:2]
    is_masked = scal[:, 2:3] == 0.0                                  # (S,1) query-position mask
    lin_n = tau_n * cvec[0:1, :] + cvec[1:2, :]                      # (S,H)
    lin_d = tau_d * cvec[2:3, :] + cvec[3:4, :]                      # (S,H)
    last_col = jax.lax.broadcasted_iota(jnp.int32, (S, H), 1) == (H - 1)
    te_all = jnp.where(last_col,
                       0.7 * lin_n + 0.3 * lin_d,
                       0.7 * jnp.sin(lin_n) + 0.3 * jnp.sin(lin_d))
    te_out_ref[...] = te_all                                         # time_emb_all (row -1 = target)

    # rep_item + lambda_uncertainty * x_t.unsqueeze(1) + time_emb_all
    x = rep_ref[...] + lam_ref[...] * x_t_new + te_all               # (S,H)

    # ---- Transformer_rep: NUM_BLOCKS pre-LN blocks, statically unrolled ----
    for blk in range(NUM_BLOCKS):
        bv = bvec_ref[blk]                       # (8,H): [ln1_w, ln1_b, bo, ln2_w, ln2_b, b2, 0, 0]
        wo_blk = wo_ref[blk]                     # (H,H)

        xn = _layernorm(x, bv[0:1, :], bv[1:2, :])
        # fused Q/K/V: one (S,H)x(H,3H) matmul + one bias add
        qkv = jnp.dot(xn, wqkv_ref[blk],
                      preferred_element_type=jnp.float32) + bqkv_ref[blk]     # (S,3H)

        attn = jnp.zeros((S, H), jnp.float32)
        for hd in range(NUM_HEADS):              # static unroll, 2-D matmuls only
            qh = qkv[:, hd * DH:(hd + 1) * DH]
            kh = qkv[:, H + hd * DH:H + (hd + 1) * DH]
            vh = qkv[:, 2 * H + hd * DH:2 * H + (hd + 1) * DH]
            corr = jnp.einsum('qd,kd->qk', qh, kh,
                              preferred_element_type=jnp.float32) * SCALE     # (S,S)
            # masked_fill(mask==0, -1e9): whole query row masked (matches reference broadcast)
            corr = jnp.where(is_masked, NEG_BIG, corr)
            m = jnp.max(corr, axis=-1, keepdims=True)
            e = jnp.exp(corr - m)
            p = e / jnp.sum(e, axis=-1, keepdims=True)               # exact softmax
            hv = jnp.einsum('qk,kd->qd', p, vh,
                            preferred_element_type=jnp.float32)      # (S,DH)
            # fold W_o into the head accumulation (sublane-aligned row slice, no lane concat)
            attn = attn + jnp.dot(hv, wo_blk[hd * DH:(hd + 1) * DH, :],
                                  preferred_element_type=jnp.float32)
        x = x + attn + bv[2:3, :]                                    # residual (+ W_o bias)

        xn2 = _layernorm(x, bv[3:4, :], bv[4:5, :])
        h1 = jnp.dot(xn2, w1_ref[blk],
                     preferred_element_type=jnp.float32) + b1_ref[blk]
        act = 0.5 * h1 * (1.0 + jnp.tanh(GELU_C * (h1 + 0.044715 * h1 * h1 * h1)))
        ffn = jnp.dot(act, w2_ref[blk],
                      preferred_element_type=jnp.float32) + bv[5:6, :]
        x = x + ffn                                                  # residual

    # ---- final LayerNorm (norm_diffu_rep); output slice done in the wrapper ----
    rep_out_ref[...] = _layernorm(x, cvec[5:6, :], cvec[6:7, :])


# ---------------- BlockSpec helpers (grid = (B,)) ----------------
def _batch_spec(*trail):
    n = len(trail)
    return pl.BlockSpec((None,) + tuple(trail), lambda b, n=n: (b,) + (0,) * n)


def _shared_spec(*shape):
    n = len(shape)
    return pl.BlockSpec(tuple(shape), lambda b, n=n: (0,) * n)


def diffu_xstart_pallas(params, rep_item, xt3, tse3, lam_noise, scal3):
    in_specs = [
        _batch_spec(S, H),                          # rep_item
        _batch_spec(1, H),                          # x_t
        _batch_spec(1, H),                          # timestep embedding
        _batch_spec(S, H),                          # lambda noise
        _batch_spec(S, 8),                          # packed [tau_norm | tau_day | mask | pad]
        _shared_spec(H, FF),                        # time_embed w1
        _shared_spec(1, FF),                        # time_embed b1
        _shared_spec(FF, H),                        # time_embed w2
        _shared_spec(8, H),                         # packed shared vectors
        _shared_spec(NUM_BLOCKS, H, 3 * H),         # fused wqkv
        _shared_spec(NUM_BLOCKS, 1, 3 * H),         # fused bqkv
        _shared_spec(NUM_BLOCKS, H, H),             # wo
        _shared_spec(NUM_BLOCKS, H, FF),            # ffn w1
        _shared_spec(NUM_BLOCKS, 1, FF),            # ffn b1
        _shared_spec(NUM_BLOCKS, FF, H),            # ffn w2
        _shared_spec(NUM_BLOCKS, 8, H),             # packed per-block vectors
    ]
    out_specs = (
        _batch_spec(S, H),    # rep_diffu
        _batch_spec(S, H),    # time_emb_all (row -1 is time_target)
    )
    out_shape = (
        jax.ShapeDtypeStruct((B, S, H), jnp.float32),
        jax.ShapeDtypeStruct((B, S, H), jnp.float32),
    )
    inputs = (rep_item, xt3, tse3, lam_noise, scal3,
              params['te_w1'], params['te_b1'], params['te_w2'], params['const_vec'],
              params['wqkv'], params['bqkv'], params['wo'],
              params['w1'], params['b1'], params['w2'], params['blk_vecs'])
    return pl.pallas_call(
        fused_kernel,
        out_shape=out_shape,
        grid=(B,),
        in_specs=in_specs,
        out_specs=out_specs,
        compiler_params=pltpu.CompilerParams(
            dimension_semantics=("parallel",)),      # one batch element per TC on v7x megacore
    )(*inputs)


# ---------------- parameters (deterministic synthetic init, packed/stacked) ----------------
def init_params(key):
    keys = iter(jax.random.split(key, 32))

    def lin(k, *shape, scale=0.05):
        return jax.random.normal(k, shape, jnp.float32) * scale

    def t2v_rows():
        # Time2Vec ('sin', in_features=1, out_dim=H): pack [w | w0] -> (1,H), [b | b0] -> (1,H)
        w = jax.random.normal(next(keys), (1, H - 1), jnp.float32)
        w0 = jax.random.normal(next(keys), (1, 1), jnp.float32)
        b = jax.random.normal(next(keys), (1, H - 1), jnp.float32)
        b0 = jax.random.normal(next(keys), (1, 1), jnp.float32)
        return jnp.concatenate([w, w0], 1), jnp.concatenate([b, b0], 1)

    wn, bn = t2v_rows()
    wd, bd = t2v_rows()

    params = {}
    # time_embed MLP
    params['te_w1'] = lin(next(keys), H, FF)
    params['te_b1'] = jnp.zeros((1, FF), jnp.float32)
    params['te_w2'] = lin(next(keys), FF, H)
    te_b2 = jnp.zeros((1, H), jnp.float32)
    # norm_diffu_rep
    lnf_w = jnp.ones((1, H), jnp.float32)
    lnf_b = jnp.zeros((1, H), jnp.float32)
    # one shared 8-sublane tile of (1,H) vectors
    params['const_vec'] = jnp.concatenate(
        [wn, bn, wd, bd, te_b2, lnf_w, lnf_b, jnp.zeros((1, H), jnp.float32)], axis=0)

    # Transformer_rep blocks, stacked along a leading NUM_BLOCKS axis
    wq = lin(next(keys), NUM_BLOCKS, H, H)
    wk = lin(next(keys), NUM_BLOCKS, H, H)
    wv = lin(next(keys), NUM_BLOCKS, H, H)
    params['wqkv'] = jnp.concatenate([wq, wk, wv], axis=-1)           # (NB, H, 3H)
    params['bqkv'] = jnp.zeros((NUM_BLOCKS, 1, 3 * H), jnp.float32)   # (NB, 1, 3H)
    params['wo'] = lin(next(keys), NUM_BLOCKS, H, H)
    params['w1'] = lin(next(keys), NUM_BLOCKS, H, FF)
    params['b1'] = jnp.zeros((NUM_BLOCKS, 1, FF), jnp.float32)
    params['w2'] = lin(next(keys), NUM_BLOCKS, FF, H)

    ones_h = jnp.ones((NUM_BLOCKS, 1, H), jnp.float32)
    zeros_h = jnp.zeros((NUM_BLOCKS, 1, H), jnp.float32)
    # packed per-block 8-sublane tile: [ln1_w, ln1_b, bo, ln2_w, ln2_b, b2, pad, pad]
    params['blk_vecs'] = jnp.concatenate(
        [ones_h, zeros_h, zeros_h, ones_h, zeros_h, zeros_h, zeros_h, zeros_h], axis=1)
    return params


# ---------------- glue (host-side pieces of forward) ----------------
def timestep_embedding(t, dim, max_period=10000):
    half = dim // 2
    freqs = jnp.exp(-math.log(max_period) * jnp.arange(half, dtype=jnp.float32) / half)
    args = t.astype(jnp.float32)[:, None] * freqs[None]
    emb = jnp.concatenate([jnp.cos(args), jnp.sin(args)], axis=-1)
    if dim % 2:
        emb = jnp.concatenate([emb, jnp.zeros_like(emb[:, :1])], axis=-1)
    return emb


@jax.jit
def diffu_xstart_forward(params, rep_item, x_t, t, timestamps, mask_seq, item_tag, noise_key):
    ts_emb = timestep_embedding(t, H)                                        # (B,H)
    # lambda_uncertainty ~ Normal(mean=lam, std=lam), same shape as rep_item
    lam_noise = (LAMBDA_UNCERTAINTY
                 + LAMBDA_UNCERTAINTY * jax.random.normal(noise_key, rep_item.shape, jnp.float32))
    # TODO(synk): get_norm_time96 / get_day_norm7 / datetime.fromtimestamp are not defined in the
    # reference source; approximated here with UTC arithmetic (quarter-hour-of-day/96, weekday/7).
    secs_of_day = jnp.mod(timestamps, 86400)
    tau_norm = (secs_of_day // 900).astype(jnp.float32) / 96.0               # (B,S)
    weekday = jnp.mod(timestamps // 86400 + 3, 7)                            # Monday = 0
    tau_day = weekday.astype(jnp.float32) / 7.0                              # (B,S)
    # pack the three (B,S) scalar streams into one (B,S,8) tile
    scal = jnp.stack([tau_norm, tau_day, mask_seq.astype(jnp.float32)], axis=-1)
    scal = jnp.pad(scal, ((0, 0), (0, 0), (0, 8 - scal.shape[-1])))

    rep_diffu, te_all = diffu_xstart_pallas(
        params, rep_item,
        x_t[:, None, :],                       # (B,1,H)
        ts_emb[:, None, :],                    # (B,1,H)
        lam_noise,                             # (B,S,H)
        scal)                                  # (B,S,8)
    time_target = te_all[:, -1, :]                                           # (B,H)
    out = rep_diffu[:, -2, :] + time_target                                  # (B,H)
    return out, rep_diffu, item_tag, time_target


# ---------------- main ----------------
if __name__ == "__main__":
    key = jax.random.PRNGKey(0)
    k_param, k_rep, k_xt, k_noise = jax.random.split(key, 4)
    params = init_params(k_param)

    rep_item = jax.random.normal(k_rep, (B, S, H), jnp.float32)
    x_t = jax.random.normal(k_xt, (B, H), jnp.float32)
    t = jnp.array([5.0, 37.0], jnp.float32)                                  # diffusion timesteps
    timestamps = (1700000000 + 3600 * jnp.arange(B * S, dtype=jnp.int32)).reshape(B, S)
    mask_seq = jnp.ones((B, S), jnp.float32).at[0, 0].set(0.0)
    item_tag = jnp.arange(B * S, dtype=jnp.int32).reshape(B, S)

    out, rep_diffu, tag, time_target = diffu_xstart_forward(
        params, rep_item, x_t, t, timestamps, mask_seq, item_tag, k_noise)
    jax.block_until_ready((out, rep_diffu, time_target))

    assert out.shape == (B, H)
    assert rep_diffu.shape == (B, S, H)
    assert time_target.shape == (B, H)
    assert jnp.all(jnp.isfinite(out)) and jnp.all(jnp.isfinite(rep_diffu))
    print("KERNEL_OK")
</pallas_src>

<mosaic_0001>
module attributes {stable_mosaic.version = 11 : i64} {
  func.func @fused_kernel(%arg0: i32, %arg1: memref<1x8x32xf32, #tpu.memory_space<vmem>>, %arg2: memref<1x1x32xf32, #tpu.memory_space<vmem>>, %arg3: memref<1x1x32xf32, #tpu.memory_space<vmem>>, %arg4: memref<1x8x32xf32, #tpu.memory_space<vmem>>, %arg5: memref<1x8x8xf32, #tpu.memory_space<vmem>>, %arg6: memref<32x128xf32, #tpu.memory_space<vmem>>, %arg7: memref<1x128xf32, #tpu.memory_space<vmem>>, %arg8: memref<128x32xf32, #tpu.memory_space<vmem>>, %arg9: memref<8x32xf32, #tpu.memory_space<vmem>>, %arg10: memref<2x32x96xf32, #tpu.memory_space<vmem>>, %arg11: memref<2x1x96xf32, #tpu.memory_space<vmem>>, %arg12: memref<2x32x32xf32, #tpu.memory_space<vmem>>, %arg13: memref<2x32x128xf32, #tpu.memory_space<vmem>>, %arg14: memref<2x1x128xf32, #tpu.memory_space<vmem>>, %arg15: memref<2x128x32xf32, #tpu.memory_space<vmem>>, %arg16: memref<2x8x32xf32, #tpu.memory_space<vmem>>, %arg17: memref<1x8x32xf32, #tpu.memory_space<vmem>>, %arg18: memref<1x8x32xf32, #tpu.memory_space<vmem>>) attributes {dimension_semantics = [#tpu.dimension_semantics<parallel>], iteration_bounds = array<i64: 2>, scalar_prefetch = 0 : i64, scratch_operands = 0 : i64, tpu.core_type = #tpu.core_type<tc>, window_params = [{transform_indices = @transform_0, window_bounds = array<i64: 1, 8, 32>}, {transform_indices = @transform_1, window_bounds = array<i64: 1, 1, 32>}, {transform_indices = @transform_2, window_bounds = array<i64: 1, 1, 32>}, {transform_indices = @transform_3, window_bounds = array<i64: 1, 8, 32>}, {transform_indices = @transform_4, window_bounds = array<i64: 1, 8, 8>}, {pipeline_mode = #tpu.pipeline_mode<synchronous>, transform_indices = @transform_5, window_bounds = array<i64: 32, 128>}, {pipeline_mode = #tpu.pipeline_mode<synchronous>, transform_indices = @transform_6, window_bounds = array<i64: 1, 128>}, {pipeline_mode = #tpu.pipeline_mode<synchronous>, transform_indices = @transform_7, window_bounds = array<i64: 128, 32>}, {pipeline_mode = #tpu.pipeline_mode<synchronous>, transform_indices = @transform_8, window_bounds = array<i64: 8, 32>}, {pipeline_mode = #tpu.pipeline_mode<synchronous>, transform_indices = @transform_9, window_bounds = array<i64: 2, 32, 96>}, {pipeline_mode = #tpu.pipeline_mode<synchronous>, transform_indices = @transform_10, window_bounds = array<i64: 2, 1, 96>}, {pipeline_mode = #tpu.pipeline_mode<synchronous>, transform_indices = @transform_11, window_bounds = array<i64: 2, 32, 32>}, {pipeline_mode = #tpu.pipeline_mode<synchronous>, transform_indices = @transform_12, window_bounds = array<i64: 2, 32, 128>}, {pipeline_mode = #tpu.pipeline_mode<synchronous>, transform_indices = @transform_13, window_bounds = array<i64: 2, 1, 128>}, {pipeline_mode = #tpu.pipeline_mode<synchronous>, transform_indices = @transform_14, window_bounds = array<i64: 2, 128, 32>}, {pipeline_mode = #tpu.pipeline_mode<synchronous>, transform_indices = @transform_15, window_bounds = array<i64: 2, 8, 32>}, {transform_indices = @transform_16, window_bounds = array<i64: 1, 8, 32>}, {transform_indices = @transform_17, window_bounds = array<i64: 1, 8, 32>}]} {
    %c0 = arith.constant 0 : index
    %c0_0 = arith.constant 0 : index
    %0 = vector.load %arg9[%c0, %c0_0] : memref<8x32xf32, #tpu.memory_space<vmem>>, vector<8x32xf32>
    %c0_1 = arith.constant 0 : index
    %c0_2 = arith.constant 0 : index
    %c0_3 = arith.constant 0 : index
    %1 = vector.load %arg3[%c0_1, %c0_2, %c0_3] : memref<1x1x32xf32, #tpu.memory_space<vmem>>, vector<1x1x32xf32>
    %2 = vector.shape_cast %1 : vector<1x1x32xf32> to vector<1x32xf32>
    %c0_4 = arith.constant 0 : index
    %c0_5 = arith.constant 0 : index
    %3 = vector.load %arg6[%c0_4, %c0_5] : memref<32x128xf32, #tpu.memory_space<vmem>>, vector<32x128xf32>
    %cst = arith.constant dense<0.000000e+00> : vector<1x128xf32>
    %4 = tpu.matmul %2, %3, %cst {dimension_numbers = #tpu.dot_dimension_numbers<[1], [0], [0], [1], [0, 0, 1, 1], [], []>} : vector<1x32xf32>, vector<32x128xf32>, vector<1x128xf32> -> vector<1x128xf32>
    %c0_6 = arith.constant 0 : index
    %c0_7 = arith.constant 0 : index
    %5 = vector.load %arg7[%c0_6, %c0_7] : memref<1x128xf32, #tpu.memory_space<vmem>>, vector<1x128xf32>
    %6 = arith.addf %4, %5 : vector<1x128xf32>
    %7 = arith.negf %6 : vector<1x128xf32>
    %8 = math.exp %7 : vector<1x128xf32>
    %cst_8 = arith.constant 1.000000e+00 : f32
    %9 = vector.broadcast %cst_8 : f32 to vector<1x128xf32>
    %10 = arith.addf %9, %8 : vector<1x128xf32>
    %11 = arith.divf %9, %10 : vector<1x128xf32>
    %12 = arith.mulf %6, %11 : vector<1x128xf32>
    %c0_9 = arith.constant 0 : index
    %c0_10 = arith.constant 0 : index
    %13 = vector.load %arg8[%c0_9, %c0_10] : memref<128x32xf32, #tpu.memory_space<vmem>>, vector<128x32xf32>
    %cst_11 = arith.constant dense<0.000000e+00> : vector<1x32xf32>
    %14 = tpu.matmul %12, %13, %cst_11 {dimension_numbers = #tpu.dot_dimension_numbers<[1], [0], [0], [1], [0, 0, 1, 1], [], []>} : vector<1x128xf32>, vector<128x32xf32>, vector<1x32xf32> -> vector<1x32xf32>
    %15 = vector.extract_strided_slice %0 {offsets = [4, 0], sizes = [1, 32], strides = [1, 1]} : vector<8x32xf32> to vector<1x32xf32>
    %16 = arith.addf %14, %15 : vector<1x32xf32>
    %c0_12 = arith.constant 0 : index
    %c0_13 = arith.constant 0 : index
    %c0_14 = arith.constant 0 : index
    %17 = vector.load %arg2[%c0_12, %c0_13, %c0_14] : memref<1x1x32xf32, #tpu.memory_space<vmem>>, vector<1x1x32xf32>
    %18 = vector.shape_cast %17 : vector<1x1x32xf32> to vector<1x32xf32>
    %19 = arith.addf %18, %16 : vector<1x32xf32>
    %c0_15 = arith.constant 0 : index
    %c0_16 = arith.constant 0 : index
    %c0_17 = arith.constant 0 : index
    %20 = vector.load %arg5[%c0_15, %c0_16, %c0_17] : memref<1x8x8xf32, #tpu.memory_space<vmem>>, vector<1x8x8xf32>
    %21 = vector.shape_cast %20 : vector<1x8x8xf32> to vector<8x8xf32>
    %22 = vector.extract_strided_slice %21 {offsets = [0, 0], sizes = [8, 1], strides = [1, 1]} : vector<8x8xf32> to vector<8x1xf32>
    %23 = vector.extract_strided_slice %21 {offsets = [0, 1], sizes = [8, 1], strides = [1, 1]} : vector<8x8xf32> to vector<8x1xf32>
    %24 = vector.extract_strided_slice %21 {offsets = [0, 2], sizes = [8, 1], strides = [1, 1]} : vector<8x8xf32> to vector<8x1xf32>
    %cst_18 = arith.constant 0.000000e+00 : f32
    %25 = vector.broadcast %cst_18 : f32 to vector<8x1xf32>
    %26 = arith.cmpf oeq, %24, %25 : vector<8x1xf32>
    %27 = vector.extract_strided_slice %0 {offsets = [0, 0], sizes = [1, 32], strides = [1, 1]} : vector<8x32xf32> to vector<1x32xf32>
    %28 = vector.broadcast %22 : vector<8x1xf32> to vector<8x32xf32>
    %29 = vector.broadcast %27 : vector<1x32xf32> to vector<8x32xf32>
    %30 = arith.mulf %28, %29 : vector<8x32xf32>
    %31 = vector.extract_strided_slice %0 {offsets = [1, 0], sizes = [1, 32], strides = [1, 1]} : vector<8x32xf32> to vector<1x32xf32>
    %32 = vector.broadcast %31 : vector<1x32xf32> to vector<8x32xf32>
    %33 = arith.addf %30, %32 : vector<8x32xf32>
    %34 = vector.extract_strided_slice %0 {offsets = [2, 0], sizes = [1, 32], strides = [1, 1]} : vector<8x32xf32> to vector<1x32xf32>
    %35 = vector.broadcast %23 : vector<8x1xf32> to vector<8x32xf32>
    %36 = vector.broadcast %34 : vector<1x32xf32> to vector<8x32xf32>
    %37 = arith.mulf %35, %36 : vector<8x32xf32>
    %38 = vector.extract_strided_slice %0 {offsets = [3, 0], sizes = [1, 32], strides = [1, 1]} : vector<8x32xf32> to vector<1x32xf32>
    %39 = vector.broadcast %38 : vector<1x32xf32> to vector<8x32xf32>
    %40 = arith.addf %37, %39 : vector<8x32xf32>
    %41 = tpu.iota {dimensions = array<i32: 1>} : vector<8x32xi32>
    %c31_i32 = arith.constant 31 : i32
    %42 = vector.broadcast %c31_i32 : i32 to vector<8x32xi32>
    %43 = arith.cmpi eq, %41, %42 : vector<8x32xi32>
    %cst_19 = arith.constant 0.699999988 : f32
    %44 = vector.broadcast %cst_19 : f32 to vector<8x32xf32>
    %45 = arith.mulf %44, %33 : vector<8x32xf32>
    %cst_20 = arith.constant 3.000000e-01 : f32
    %46 = vector.broadcast %cst_20 : f32 to vector<8x32xf32>
    %47 = arith.mulf %46, %40 : vector<8x32xf32>
    %48 = arith.addf %45, %47 : vector<8x32xf32>
    %49 = math.sin %33 : vector<8x32xf32>
    %cst_21 = arith.constant 0.699999988 : f32
    %50 = vector.broadcast %cst_21 : f32 to vector<8x32xf32>
    %51 = arith.mulf %50, %49 : vector<8x32xf32>
    %52 = math.sin %40 : vector<8x32xf32>
    %cst_22 = arith.constant 3.000000e-01 : f32
    %53 = vector.broadcast %cst_22 : f32 to vector<8x32xf32>
    %54 = arith.mulf %53, %52 : vector<8x32xf32>
    %55 = arith.addf %51, %54 : vector<8x32xf32>
    %56 = arith.select %43, %48, %55 : vector<8x32xi1>, vector<8x32xf32>
    %c0_23 = arith.constant 0 : index
    %c0_24 = arith.constant 0 : index
    %c0_25 = arith.constant 0 : index
    %57 = vector.load %arg18[%c0_23, %c0_24, %c0_25] : memref<1x8x32xf32, #tpu.memory_space<vmem>>, vector<1x8x32xf32>
    %58 = vector.shape_cast %57 : vector<1x8x32xf32> to vector<8x32xf32>
    %59 = vector.shape_cast %56 : vector<8x32xf32> to vector<1x8x32xf32>
    tpu.vector_store %arg18[%c0_23, %c0_24, %c0_25], %59 {strides = array<i32>} : memref<1x8x32xf32, #tpu.memory_space<vmem>>, vector<1x8x32xf32>,
    %c0_26 = arith.constant 0 : index
    %c0_27 = arith.constant 0 : index
    %c0_28 = arith.constant 0 : index
    %60 = vector.load %arg1[%c0_26, %c0_27, %c0_28] : memref<1x8x32xf32, #tpu.memory_space<vmem>>, vector<1x8x32xf32>
    %61 = vector.shape_cast %60 : vector<1x8x32xf32> to vector<8x32xf32>
    %c0_29 = arith.constant 0 : index
    %c0_30 = arith.constant 0 : index
    %c0_31 = arith.constant 0 : index
    %62 = vector.load %arg4[%c0_29, %c0_30, %c0_31] : memref<1x8x32xf32, #tpu.memory_space<vmem>>, vector<1x8x32xf32>
    %63 = vector.shape_cast %62 : vector<1x8x32xf32> to vector<8x32xf32>
    %64 = vector.broadcast %19 : vector<1x32xf32> to vector<8x32xf32>
    %65 = arith.mulf %63, %64 : vector<8x32xf32>
    %66 = arith.addf %61, %65 : vector<8x32xf32>
    %67 = arith.addf %66, %56 : vector<8x32xf32>
    %c0_32 = arith.constant 0 : index
    %c0_33 = arith.constant 0 : index
    %c0_34 = arith.constant 0 : index
    %68 = vector.load %arg16[%c0_32, %c0_33, %c0_34] : memref<2x8x32xf32, #tpu.memory_space<vmem>>, vector<1x8x32xf32>
    %69 = vector.shape_cast %68 : vector<1x8x32xf32> to vector<8x32xf32>
    %c0_35 = arith.constant 0 : index
    %c0_36 = arith.constant 0 : index
    %c0_37 = arith.constant 0 : index
    %70 = vector.load %arg12[%c0_35, %c0_36, %c0_37] : memref<2x32x32xf32, #tpu.memory_space<vmem>>, vector<1x32x32xf32>
    %71 = vector.shape_cast %70 : vector<1x32x32xf32> to vector<32x32xf32>
    %72 = vector.extract_strided_slice %69 {offsets = [0, 0], sizes = [1, 32], strides = [1, 1]} : vector<8x32xf32> to vector<1x32xf32>
    %73 = vector.extract_strided_slice %69 {offsets = [1, 0], sizes = [1, 32], strides = [1, 1]} : vector<8x32xf32> to vector<1x32xf32>
    %cst_38 = arith.constant dense<0.000000e+00> : vector<8xf32>
    %74 = vector.multi_reduction <add>, %67, %cst_38 [1] : vector<8x32xf32> to vector<8xf32>
    %75 = vector.shape_cast %74 : vector<8xf32> to vector<8x1xf32>
    %cst_39 = arith.constant 3.200000e+01 : f32
    %76 = vector.broadcast %cst_39 : f32 to vector<8x1xf32>
    %77 = arith.divf %75, %76 : vector<8x1xf32>
    %78 = vector.broadcast %77 : vector<8x1xf32> to vector<8x32xf32>
    %79 = arith.subf %67, %78 : vector<8x32xf32>
    %80 = arith.mulf %79, %79 : vector<8x32xf32>
    %cst_40 = arith.constant dense<0.000000e+00> : vector<8xf32>
    %81 = vector.multi_reduction <add>, %80, %cst_40 [1] : vector<8x32xf32> to vector<8xf32>
    %82 = vector.shape_cast %81 : vector<8xf32> to vector<8x1xf32>
    %cst_41 = arith.constant 3.200000e+01 : f32
    %83 = vector.broadcast %cst_41 : f32 to vector<8x1xf32>
    %84 = arith.divf %82, %83 : vector<8x1xf32>
    %cst_42 = arith.constant 9.99999996E-13 : f32
    %85 = vector.broadcast %cst_42 : f32 to vector<8x1xf32>
    %86 = arith.addf %84, %85 : vector<8x1xf32>
    %87 = math.rsqrt %86 : vector<8x1xf32>
    %88 = vector.broadcast %87 : vector<8x1xf32> to vector<8x32xf32>
    %89 = arith.mulf %79, %88 : vector<8x32xf32>
    %90 = vector.broadcast %72 : vector<1x32xf32> to vector<8x32xf32>
    %91 = arith.mulf %90, %89 : vector<8x32xf32>
    %92 = vector.broadcast %73 : vector<1x32xf32> to vector<8x32xf32>
    %93 = arith.addf %91, %92 : vector<8x32xf32>
    %c0_43 = arith.constant 0 : index
    %c0_44 = arith.constant 0 : index
    %c0_45 = arith.constant 0 : index
    %94 = vector.load %arg10[%c0_43, %c0_44, %c0_45] : memref<2x32x96xf32, #tpu.memory_space<vmem>>, vector<1x32x96xf32>
    %95 = vector.shape_cast %94 : vector<1x32x96xf32> to vector<32x96xf32>
    %cst_46 = arith.constant dense<0.000000e+00> : vector<8x96xf32>
    %96 = tpu.matmul %93, %95, %cst_46 {dimension_numbers = #tpu.dot_dimension_numbers<[1], [0], [0], [1], [0, 0, 1, 1], [], []>} : vector<8x32xf32>, vector<32x96xf32>, vector<8x96xf32> -> vector<8x96xf32>
    %c0_47 = arith.constant 0 : index
    %c0_48 = arith.constant 0 : index
    %c0_49 = arith.constant 0 : index
    %97 = vector.load %arg11[%c0_47, %c0_48, %c0_49] : memref<2x1x96xf32, #tpu.memory_space<vmem>>, vector<1x1x96xf32>
    %98 = vector.shape_cast %97 : vector<1x1x96xf32> to vector<1x96xf32>
    %99 = vector.broadcast %98 : vector<1x96xf32> to vector<8x96xf32>
    %100 = arith.addf %96, %99 : vector<8x96xf32>
    %cst_50 = arith.constant 0.000000e+00 : f32
    %101 = vector.broadcast %cst_50 : f32 to vector<8x32xf32>
    %102 = vector.extract_strided_slice %100 {offsets = [0, 0], sizes = [8, 8], strides = [1, 1]} : vector<8x96xf32> to vector<8x8xf32>
    %103 = vector.extract_strided_slice %100 {offsets = [0, 32], sizes = [8, 8], strides = [1, 1]} : vector<8x96xf32> to vector<8x8xf32>
    %104 = vector.extract_strided_slice %100 {offsets = [0, 64], sizes = [8, 8], strides = [1, 1]} : vector<8x96xf32> to vector<8x8xf32>
    "tpu.trace_start"() <{level = 10 : i32, message = "qd,kd->qk"}> : () -> ()
    %cst_51 = arith.constant dense<0.000000e+00> : vector<8x8xf32>
    %105 = tpu.matmul %102, %103, %cst_51 {dimension_numbers = #tpu.dot_dimension_numbers<[1], [1], [0], [0], [0, 0, 1, 0], [], []>} : vector<8x8xf32>, vector<8x8xf32>, vector<8x8xf32> -> vector<8x8xf32>
    "tpu.trace_stop"() : () -> ()
    %cst_52 = arith.constant 0.353553385 : f32
    %106 = vector.broadcast %cst_52 : f32 to vector<8x8xf32>
    %107 = arith.mulf %105, %106 : vector<8x8xf32>
    %cst_53 = arith.constant -1.000000e+09 : f32
    %108 = vector.shape_cast %26 : vector<8x1xi1> to vector<8x1xi1>
    %109 = vector.broadcast %108 : vector<8x1xi1> to vector<8x8xi1>
    %110 = vector.broadcast %cst_53 : f32 to vector<8x8xf32>
    %111 = arith.select %109, %110, %107 : vector<8x8xi1>, vector<8x8xf32>
    %cst_54 = arith.constant dense<0xFF800000> : vector<8xf32>
    %112 = vector.multi_reduction <maximumf>, %111, %cst_54 [1] : vector<8x8xf32> to vector<8xf32>
    %113 = vector.shape_cast %112 : vector<8xf32> to vector<8x1xf32>
    %114 = vector.broadcast %113 : vector<8x1xf32> to vector<8x8xf32>
    %115 = arith.subf %111, %114 : vector<8x8xf32>
    %116 = math.exp %115 : vector<8x8xf32>
    %cst_55 = arith.constant dense<0.000000e+00> : vector<8xf32>
    %117 = vector.multi_reduction <add>, %116, %cst_55 [1] : vector<8x8xf32> to vector<8xf32>
    %118 = vector.shape_cast %117 : vector<8xf32> to vector<8x1xf32>
    %119 = vector.broadcast %118 : vector<8x1xf32> to vector<8x8xf32>
    %120 = arith.divf %116, %119 : vector<8x8xf32>
    "tpu.trace_start"() <{level = 10 : i32, message = "qk,kd->qd"}> : () -> ()
    %cst_56 = arith.constant dense<0.000000e+00> : vector<8x8xf32>
    %121 = tpu.matmul %120, %104, %cst_56 {dimension_numbers = #tpu.dot_dimension_numbers<[1], [0], [0], [1], [0, 0, 1, 1], [], []>} : vector<8x8xf32>, vector<8x8xf32>, vector<8x8xf32> -> vector<8x8xf32>
    "tpu.trace_stop"() : () -> ()
    %122 = vector.extract_strided_slice %71 {offsets = [0, 0], sizes = [8, 32], strides = [1, 1]} : vector<32x32xf32> to vector<8x32xf32>
    %cst_57 = arith.constant dense<0.000000e+00> : vector<8x32xf32>
    %123 = tpu.matmul %121, %122, %cst_57 {dimension_numbers = #tpu.dot_dimension_numbers<[1], [0], [0], [1], [0, 0, 1, 1], [], []>} : vector<8x8xf32>, vector<8x32xf32>, vector<8x32xf32> -> vector<8x32xf32>
    %124 = arith.addf %101, %123 : vector<8x32xf32>
    %125 = vector.extract_strided_slice %100 {offsets = [0, 8], sizes = [8, 8], strides = [1, 1]} : vector<8x96xf32> to vector<8x8xf32>
    %126 = vector.extract_strided_slice %100 {offsets = [0, 40], sizes = [8, 8], strides = [1, 1]} : vector<8x96xf32> to vector<8x8xf32>
    %127 = vector.extract_strided_slice %100 {offsets = [0, 72], sizes = [8, 8], strides = [1, 1]} : vector<8x96xf32> to vector<8x8xf32>
    "tpu.trace_start"() <{level = 10 : i32, message = "qd,kd->qk"}> : () -> ()
    %cst_58 = arith.constant dense<0.000000e+00> : vector<8x8xf32>
    %128 = tpu.matmul %125, %126, %cst_58 {dimension_numbers = #tpu.dot_dimension_numbers<[1], [1], [0], [0], [0, 0, 1, 0], [], []>} : vector<8x8xf32>, vector<8x8xf32>, vector<8x8xf32> -> vector<8x8xf32>
    "tpu.trace_stop"() : () -> ()
    %cst_59 = arith.constant 0.353553385 : f32
    %129 = vector.broadcast %cst_59 : f32 to vector<8x8xf32>
    %130 = arith.mulf %128, %129 : vector<8x8xf32>
    %cst_60 = arith.constant -1.000000e+09 : f32
    %131 = vector.shape_cast %26 : vector<8x1xi1> to vector<8x1xi1>
    %132 = vector.broadcast %131 : vector<8x1xi1> to vector<8x8xi1>
    %133 = vector.broadcast %cst_60 : f32 to vector<8x8xf32>
    %134 = arith.select %132, %133, %130 : vector<8x8xi1>, vector<8x8xf32>
    %cst_61 = arith.constant dense<0xFF800000> : vector<8xf32>
    %135 = vector.multi_reduction <maximumf>, %134, %cst_61 [1] : vector<8x8xf32> to vector<8xf32>
    %136 = vector.shape_cast %135 : vector<8xf32> to vector<8x1xf32>
    %137 = vector.broadcast %136 : vector<8x1xf32> to vector<8x8xf32>
    %138 = arith.subf %134, %137 : vector<8x8xf32>
    %139 = math.exp %138 : vector<8x8xf32>
    %cst_62 = arith.constant dense<0.000000e+00> : vector<8xf32>
    %140 = vector.multi_reduction <add>, %139, %cst_62 [1] : vector<8x8xf32> to vector<8xf32>
    %141 = vector.shape_cast %140 : vector<8xf32> to vector<8x1xf32>
    %142 = vector.broadcast %141 : vector<8x1xf32> to vector<8x8xf32>
    %143 = arith.divf %139, %142 : vector<8x8xf32>
    "tpu.trace_start"() <{level = 10 : i32, message = "qk,kd->qd"}> : () -> ()
    %cst_63 = arith.constant dense<0.000000e+00> : vector<8x8xf32>
    %144 = tpu.matmul %143, %127, %cst_63 {dimension_numbers = #tpu.dot_dimension_numbers<[1], [0], [0], [1], [0, 0, 1, 1], [], []>} : vector<8x8xf32>, vector<8x8xf32>, vector<8x8xf32> -> vector<8x8xf32>
    "tpu.trace_stop"() : () -> ()
    %145 = vector.extract_strided_slice %71 {offsets = [8, 0], sizes = [8, 32], strides = [1, 1]} : vector<32x32xf32> to vector<8x32xf32>
    %cst_64 = arith.constant dense<0.000000e+00> : vector<8x32xf32>
    %146 = tpu.matmul %144, %145, %cst_64 {dimension_numbers = #tpu.dot_dimension_numbers<[1], [0], [0], [1], [0, 0, 1, 1], [], []>} : vector<8x8xf32>, vector<8x32xf32>, vector<8x32xf32> -> vector<8x32xf32>
    %147 = arith.addf %124, %146 : vector<8x32xf32>
    %148 = vector.extract_strided_slice %100 {offsets = [0, 16], sizes = [8, 8], strides = [1, 1]} : vector<8x96xf32> to vector<8x8xf32>
    %149 = vector.extract_strided_slice %100 {offsets = [0, 48], sizes = [8, 8], strides = [1, 1]} : vector<8x96xf32> to vector<8x8xf32>
    %150 = vector.extract_strided_slice %100 {offsets = [0, 80], sizes = [8, 8], strides = [1, 1]} : vector<8x96xf32> to vector<8x8xf32>
    "tpu.trace_start"() <{level = 10 : i32, message = "qd,kd->qk"}> : () -> ()
    %cst_65 = arith.constant dense<0.000000e+00> : vector<8x8xf32>
    %151 = tpu.matmul %148, %149, %cst_65 {dimension_numbers = #tpu.dot_dimension_numbers<[1], [1], [0], [0], [0, 0, 1, 0], [], []>} : vector<8x8xf32>, vector<8x8xf32>, vector<8x8xf32> -> vector<8x8xf32>
    "tpu.trace_stop"() : () -> ()
    %cst_66 = arith.constant 0.353553385 : f32
    %152 = vector.broadcast %cst_66 : f32 to vector<8x8xf32>
    %153 = arith.mulf %151, %152 : vector<8x8xf32>
    %cst_67 = arith.constant -1.000000e+09 : f32
    %154 = vector.shape_cast %26 : vector<8x1xi1> to vector<8x1xi1>
    %155 = vector.broadcast %154 : vector<8x1xi1> to vector<8x8xi1>
    %156 = vector.broadcast %cst_67 : f32 to vector<8x8xf32>
    %157 = arith.select %155, %156, %153 : vector<8x8xi1>, vector<8x8xf32>
    %cst_68 = arith.constant dense<0xFF800000> : vector<8xf32>
    %158 = vector.multi_reduction <maximumf>, %157, %cst_68 [1] : vector<8x8xf32> to vector<8xf32>
    %159 = vector.shape_cast %158 : vector<8xf32> to vector<8x1xf32>
    %160 = vector.broadcast %159 : vector<8x1xf32> to vector<8x8xf32>
    %161 = arith.subf %157, %160 : vector<8x8xf32>
    %162 = math.exp %161 : vector<8x8xf32>
    %cst_69 = arith.constant dense<0.000000e+00> : vector<8xf32>
    %163 = vector.multi_reduction <add>, %162, %cst_69 [1] : vector<8x8xf32> to vector<8xf32>
    %164 = vector.shape_cast %163 : vector<8xf32> to vector<8x1xf32>
    %165 = vector.broadcast %164 : vector<8x1xf32> to vector<8x8xf32>
    %166 = arith.divf %162, %165 : vector<8x8xf32>
    "tpu.trace_start"() <{level = 10 : i32, message = "qk,kd->qd"}> : () -> ()
    %cst_70 = arith.constant dense<0.000000e+00> : vector<8x8xf32>
    %167 = tpu.matmul %166, %150, %cst_70 {dimension_numbers = #tpu.dot_dimension_numbers<[1], [0], [0], [1], [0, 0, 1, 1], [], []>} : vector<8x8xf32>, vector<8x8xf32>, vector<8x8xf32> -> vector<8x8xf32>
    "tpu.trace_stop"() : () -> ()
    %168 = vector.extract_strided_slice %71 {offsets = [16, 0], sizes = [8, 32], strides = [1, 1]} : vector<32x32xf32> to vector<8x32xf32>
    %cst_71 = arith.constant dense<0.000000e+00> : vector<8x32xf32>
    %169 = tpu.matmul %167, %168, %cst_71 {dimension_numbers = #tpu.dot_dimension_numbers<[1], [0], [0], [1], [0, 0, 1, 1], [], []>} : vector<8x8xf32>, vector<8x32xf32>, vector<8x32xf32> -> vector<8x32xf32>
    %170 = arith.addf %147, %169 : vector<8x32xf32>
    %171 = vector.extract_strided_slice %100 {offsets = [0, 24], sizes = [8, 8], strides = [1, 1]} : vector<8x96xf32> to vector<8x8xf32>
    %172 = vector.extract_strided_slice %100 {offsets = [0, 56], sizes = [8, 8], strides = [1, 1]} : vector<8x96xf32> to vector<8x8xf32>
    %173 = vector.extract_strided_slice %100 {offsets = [0, 88], sizes = [8, 8], strides = [1, 1]} : vector<8x96xf32> to vector<8x8xf32>
    "tpu.trace_start"() <{level = 10 : i32, message = "qd,kd->qk"}> : () -> ()
    %cst_72 = arith.constant dense<0.000000e+00> : vector<8x8xf32>
    %174 = tpu.matmul %171, %172, %cst_72 {dimension_numbers = #tpu.dot_dimension_numbers<[1], [1], [0], [0], [0, 0, 1, 0], [], []>} : vector<8x8xf32>, vector<8x8xf32>, vector<8x8xf32> -> vector<8x8xf32>
    "tpu.trace_stop"() : () -> ()
    %cst_73 = arith.constant 0.353553385 : f32
    %175 = vector.broadcast %cst_73 : f32 to vector<8x8xf32>
    %176 = arith.mulf %174, %175 : vector<8x8xf32>
    %cst_74 = arith.constant -1.000000e+09 : f32
    %177 = vector.shape_cast %26 : vector<8x1xi1> to vector<8x1xi1>
    %178 = vector.broadcast %177 : vector<8x1xi1> to vector<8x8xi1>
    %179 = vector.broadcast %cst_74 : f32 to vector<8x8xf32>
    %180 = arith.select %178, %179, %176 : vector<8x8xi1>, vector<8x8xf32>
    %cst_75 = arith.constant dense<0xFF800000> : vector<8xf32>
    %181 = vector.multi_reduction <maximumf>, %180, %cst_75 [1] : vector<8x8xf32> to vector<8xf32>
    %182 = vector.shape_cast %181 : vector<8xf32> to vector<8x1xf32>
    %183 = vector.broadcast %182 : vector<8x1xf32> to vector<8x8xf32>
    %184 = arith.subf %180, %183 : vector<8x8xf32>
    %185 = math.exp %184 : vector<8x8xf32>
    %cst_76 = arith.constant dense<0.000000e+00> : vector<8xf32>
    %186 = vector.multi_reduction <add>, %185, %cst_76 [1] : vector<8x8xf32> to vector<8xf32>
    %187 = vector.shape_cast %186 : vector<8xf32> to vector<8x1xf32>
    %188 = vector.broadcast %187 : vector<8x1xf32> to vector<8x8xf32>
    %189 = arith.divf %185, %188 : vector<8x8xf32>
    "tpu.trace_start"() <{level = 10 : i32, message = "qk,kd->qd"}> : () -> ()
    %cst_77 = arith.constant dense<0.000000e+00> : vector<8x8xf32>
    %190 = tpu.matmul %189, %173, %cst_77 {dimension_numbers = #tpu.dot_dimension_numbers<[1], [0], [0], [1], [0, 0, 1, 1], [], []>} : vector<8x8xf32>, vector<8x8xf32>, vector<8x8xf32> -> vector<8x8xf32>
    "tpu.trace_stop"() : () -> ()
    %191 = vector.extract_strided_slice %71 {offsets = [24, 0], sizes = [8, 32], strides = [1, 1]} : vector<32x32xf32> to vector<8x32xf32>
    %cst_78 = arith.constant dense<0.000000e+00> : vector<8x32xf32>
    %192 = tpu.matmul %190, %191, %cst_78 {dimension_numbers = #tpu.dot_dimension_numbers<[1], [0], [0], [1], [0, 0, 1, 1], [], []>} : vector<8x8xf32>, vector<8x32xf32>, vector<8x32xf32> -> vector<8x32xf32>
    %193 = arith.addf %170, %192 : vector<8x32xf32>
    %194 = arith.addf %67, %193 : vector<8x32xf32>
    %195 = vector.extract_strided_slice %69 {offsets = [2, 0], sizes = [1, 32], strides = [1, 1]} : vector<8x32xf32> to vector<1x32xf32>
    %196 = vector.broadcast %195 : vector<1x32xf32> to vector<8x32xf32>
    %197 = arith.addf %194, %196 : vector<8x32xf32>
    %198 = vector.extract_strided_slice %69 {offsets = [3, 0], sizes = [1, 32], strides = [1, 1]} : vector<8x32xf32> to vector<1x32xf32>
    %199 = vector.extract_strided_slice %69 {offsets = [4, 0], sizes = [1, 32], strides = [1, 1]} : vector<8x32xf32> to vector<1x32xf32>
    %cst_79 = arith.constant dense<0.000000e+00> : vector<8xf32>
    %200 = vector.multi_reduction <add>, %197, %cst_79 [1] : vector<8x32xf32> to vector<8xf32>
    %201 = vector.shape_cast %200 : vector<8xf32> to vector<8x1xf32>
    %cst_80 = arith.constant 3.200000e+01 : f32
    %202 = vector.broadcast %cst_80 : f32 to vector<8x1xf32>
    %203 = arith.divf %201, %202 : vector<8x1xf32>
    %204 = vector.broadcast %203 : vector<8x1xf32> to vector<8x32xf32>
    %205 = arith.subf %197, %204 : vector<8x32xf32>
    %206 = arith.mulf %205, %205 : vector<8x32xf32>
    %cst_81 = arith.constant dense<0.000000e+00> : vector<8xf32>
    %207 = vector.multi_reduction <add>, %206, %cst_81 [1] : vector<8x32xf32> to vector<8xf32>
    %208 = vector.shape_cast %207 : vector<8xf32> to vector<8x1xf32>
    %cst_82 = arith.constant 3.200000e+01 : f32
    %209 = vector.broadcast %cst_82 : f32 to vector<8x1xf32>
    %210 = arith.divf %208, %209 : vector<8x1xf32>
    %cst_83 = arith.constant 9.99999996E-13 : f32
    %211 = vector.broadcast %cst_83 : f32 to vector<8x1xf32>
    %212 = arith.addf %210, %211 : vector<8x1xf32>
    %213 = math.rsqrt %212 : vector<8x1xf32>
    %214 = vector.broadcast %213 : vector<8x1xf32> to vector<8x32xf32>
    %215 = arith.mulf %205, %214 : vector<8x32xf32>
    %216 = vector.broadcast %198 : vector<1x32xf32> to vector<8x32xf32>
    %217 = arith.mulf %216, %215 : vector<8x32xf32>
    %218 = vector.broadcast %199 : vector<1x32xf32> to vector<8x32xf32>
    %219 = arith.addf %217, %218 : vector<8x32xf32>
    %c0_84 = arith.constant 0 : index
    %c0_85 = arith.constant 0 : index
    %c0_86 = arith.constant 0 : index
    %220 = vector.load %arg13[%c0_84, %c0_85, %c0_86] : memref<2x32x128xf32, #tpu.memory_space<vmem>>, vector<1x32x128xf32>
    %221 = vector.shape_cast %220 : vector<1x32x128xf32> to vector<32x128xf32>
    %cst_87 = arith.constant dense<0.000000e+00> : vector<8x128xf32>
    %222 = tpu.matmul %219, %221, %cst_87 {dimension_numbers = #tpu.dot_dimension_numbers<[1], [0], [0], [1], [0, 0, 1, 1], [], []>} : vector<8x32xf32>, vector<32x128xf32>, vector<8x128xf32> -> vector<8x128xf32>
    %c0_88 = arith.constant 0 : index
    %c0_89 = arith.constant 0 : index
    %c0_90 = arith.constant 0 : index
    %223 = vector.load %arg14[%c0_88, %c0_89, %c0_90] : memref<2x1x128xf32, #tpu.memory_space<vmem>>, vector<1x1x128xf32>
    %224 = vector.shape_cast %223 : vector<1x1x128xf32> to vector<1x128xf32>
    %225 = vector.broadcast %224 : vector<1x128xf32> to vector<8x128xf32>
    %226 = arith.addf %222, %225 : vector<8x128xf32>
    %cst_91 = arith.constant 5.000000e-01 : f32
    %227 = vector.broadcast %cst_91 : f32 to vector<8x128xf32>
    %228 = arith.mulf %227, %226 : vector<8x128xf32>
    %cst_92 = arith.constant 4.471500e-02 : f32
    %229 = vector.broadcast %cst_92 : f32 to vector<8x128xf32>
    %230 = arith.mulf %229, %226 : vector<8x128xf32>
    %231 = arith.mulf %230, %226 : vector<8x128xf32>
    %232 = arith.mulf %231, %226 : vector<8x128xf32>
    %233 = arith.addf %226, %232 : vector<8x128xf32>
    %cst_93 = arith.constant 0.797884583 : f32
    %234 = vector.broadcast %cst_93 : f32 to vector<8x128xf32>
    %235 = arith.mulf %234, %233 : vector<8x128xf32>
    %236 = math.tanh %235 : vector<8x128xf32>
    %cst_94 = arith.constant 1.000000e+00 : f32
    %237 = vector.broadcast %cst_94 : f32 to vector<8x128xf32>
    %238 = arith.addf %237, %236 : vector<8x128xf32>
    %239 = arith.mulf %228, %238 : vector<8x128xf32>
    %c0_95 = arith.constant 0 : index
    %c0_96 = arith.constant 0 : index
    %c0_97 = arith.constant 0 : index
    %240 = vector.load %arg15[%c0_95, %c0_96, %c0_97] : memref<2x128x32xf32, #tpu.memory_space<vmem>>, vector<1x128x32xf32>
    %241 = vector.shape_cast %240 : vector<1x128x32xf32> to vector<128x32xf32>
    %cst_98 = arith.constant dense<0.000000e+00> : vector<8x32xf32>
    %242 = tpu.matmul %239, %241, %cst_98 {dimension_numbers = #tpu.dot_dimension_numbers<[1], [0], [0], [1], [0, 0, 1, 1], [], []>} : vector<8x128xf32>, vector<128x32xf32>, vector<8x32xf32> -> vector<8x32xf32>
    %243 = vector.extract_strided_slice %69 {offsets = [5, 0], sizes = [1, 32], strides = [1, 1]} : vector<8x32xf32> to vector<1x32xf32>
    %244 = vector.broadcast %243 : vector<1x32xf32> to vector<8x32xf32>
    %245 = arith.addf %242, %244 : vector<8x32xf32>
    %246 = arith.addf %197, %245 : vector<8x32xf32>
    %c1 = arith.constant 1 : index
    %c0_99 = arith.constant 0 : index
    %c0_100 = arith.constant 0 : index
    %247 = vector.load %arg16[%c1, %c0_99, %c0_100] : memref<2x8x32xf32, #tpu.memory_space<vmem>>, vector<1x8x32xf32>
    %248 = vector.shape_cast %247 : vector<1x8x32xf32> to vector<8x32xf32>
    %c1_101 = arith.constant 1 : index
    %c0_102 = arith.constant 0 : index
    %c0_103 = arith.constant 0 : index
    %249 = vector.load %arg12[%c1_101, %c0_102, %c0_103] : memref<2x32x32xf32, #tpu.memory_space<vmem>>, vector<1x32x32xf32>
    %250 = vector.shape_cast %249 : vector<1x32x32xf32> to vector<32x32xf32>
    %251 = vector.extract_strided_slice %248 {offsets = [0, 0], sizes = [1, 32], strides = [1, 1]} : vector<8x32xf32> to vector<1x32xf32>
    %252 = vector.extract_strided_slice %248 {offsets = [1, 0], sizes = [1, 32], strides = [1, 1]} : vector<8x32xf32> to vector<1x32xf32>
    %cst_104 = arith.constant dense<0.000000e+00> : vector<8xf32>
    %253 = vector.multi_reduction <add>, %246, %cst_104 [1] : vector<8x32xf32> to vector<8xf32>
    %254 = vector.shape_cast %253 : vector<8xf32> to vector<8x1xf32>
    %cst_105 = arith.constant 3.200000e+01 : f32
    %255 = vector.broadcast %cst_105 : f32 to vector<8x1xf32>
    %256 = arith.divf %254, %255 : vector<8x1xf32>
    %257 = vector.broadcast %256 : vector<8x1xf32> to vector<8x32xf32>
    %258 = arith.subf %246, %257 : vector<8x32xf32>
    %259 = arith.mulf %258, %258 : vector<8x32xf32>
    %cst_106 = arith.constant dense<0.000000e+00> : vector<8xf32>
    %260 = vector.multi_reduction <add>, %259, %cst_106 [1] : vector<8x32xf32> to vector<8xf32>
    %261 = vector.shape_cast %260 : vector<8xf32> to vector<8x1xf32>
    %cst_107 = arith.constant 3.200000e+01 : f32
    %262 = vector.broadcast %cst_107 : f32 to vector<8x1xf32>
    %263 = arith.divf %261, %262 : vector<8x1xf32>
    %cst_108 = arith.constant 9.99999996E-13 : f32
    %264 = vector.broadcast %cst_108 : f32 to vector<8x1xf32>
    %265 = arith.addf %263, %264 : vector<8x1xf32>
    %266 = math.rsqrt %265 : vector<8x1xf32>
    %267 = vector.broadcast %266 : vector<8x1xf32> to vector<8x32xf32>
    %268 = arith.mulf %258, %267 : vector<8x32xf32>
    %269 = vector.broadcast %251 : vector<1x32xf32> to vector<8x32xf32>
    %270 = arith.mulf %269, %268 : vector<8x32xf32>
    %271 = vector.broadcast %252 : vector<1x32xf32> to vector<8x32xf32>
    %272 = arith.addf %270, %271 : vector<8x32xf32>
    %c1_109 = arith.constant 1 : index
    %c0_110 = arith.constant 0 : index
    %c0_111 = arith.constant 0 : index
    %273 = vector.load %arg10[%c1_109, %c0_110, %c0_111] : memref<2x32x96xf32, #tpu.memory_space<vmem>>, vector<1x32x96xf32>
    %274 = vector.shape_cast %273 : vector<1x32x96xf32> to vector<32x96xf32>
    %cst_112 = arith.constant dense<0.000000e+00> : vector<8x96xf32>
    %275 = tpu.matmul %272, %274, %cst_112 {dimension_numbers = #tpu.dot_dimension_numbers<[1], [0], [0], [1], [0, 0, 1, 1], [], []>} : vector<8x32xf32>, vector<32x96xf32>, vector<8x96xf32> -> vector<8x96xf32>
    %c1_113 = arith.constant 1 : index
    %c0_114 = arith.constant 0 : index
    %c0_115 = arith.constant 0 : index
    %276 = vector.load %arg11[%c1_113, %c0_114, %c0_115] : memref<2x1x96xf32, #tpu.memory_space<vmem>>, vector<1x1x96xf32>
    %277 = vector.shape_cast %276 : vector<1x1x96xf32> to vector<1x96xf32>
    %278 = vector.broadcast %277 : vector<1x96xf32> to vector<8x96xf32>
    %279 = arith.addf %275, %278 : vector<8x96xf32>
    %cst_116 = arith.constant 0.000000e+00 : f32
    %280 = vector.broadcast %cst_116 : f32 to vector<8x32xf32>
    %281 = vector.extract_strided_slice %279 {offsets = [0, 0], sizes = [8, 8], strides = [1, 1]} : vector<8x96xf32> to vector<8x8xf32>
    %282 = vector.extract_strided_slice %279 {offsets = [0, 32], sizes = [8, 8], strides = [1, 1]} : vector<8x96xf32> to vector<8x8xf32>
    %283 = vector.extract_strided_slice %279 {offsets = [0, 64], sizes = [8, 8], strides = [1, 1]} : vector<8x96xf32> to vector<8x8xf32>
    "tpu.trace_start"() <{level = 10 : i32, message = "qd,kd->qk"}> : () -> ()
    %cst_117 = arith.constant dense<0.000000e+00> : vector<8x8xf32>
    %284 = tpu.matmul %281, %282, %cst_117 {dimension_numbers = #tpu.dot_dimension_numbers<[1], [1], [0], [0], [0, 0, 1, 0], [], []>} : vector<8x8xf32>, vector<8x8xf32>, vector<8x8xf32> -> vector<8x8xf32>
    "tpu.trace_stop"() : () -> ()
    %cst_118 = arith.constant 0.353553385 : f32
    %285 = vector.broadcast %cst_118 : f32 to vector<8x8xf32>
    %286 = arith.mulf %284, %285 : vector<8x8xf32>
    %cst_119 = arith.constant -1.000000e+09 : f32
    %287 = vector.shape_cast %26 : vector<8x1xi1> to vector<8x1xi1>
    %288 = vector.broadcast %287 : vector<8x1xi1> to vector<8x8xi1>
    %289 = vector.broadcast %cst_119 : f32 to vector<8x8xf32>
    %290 = arith.select %288, %289, %286 : vector<8x8xi1>, vector<8x8xf32>
    %cst_120 = arith.constant dense<0xFF800000> : vector<8xf32>
    %291 = vector.multi_reduction <maximumf>, %290, %cst_120 [1] : vector<8x8xf32> to vector<8xf32>
    %292 = vector.shape_cast %291 : vector<8xf32> to vector<8x1xf32>
    %293 = vector.broadcast %292 : vector<8x1xf32> to vector<8x8xf32>
    %294 = arith.subf %290, %293 : vector<8x8xf32>
    %295 = math.exp %294 : vector<8x8xf32>
    %cst_121 = arith.constant dense<0.000000e+00> : vector<8xf32>
    %296 = vector.multi_reduction <add>, %295, %cst_121 [1] : vector<8x8xf32> to vector<8xf32>
    %297 = vector.shape_cast %296 : vector<8xf32> to vector<8x1xf32>
    %298 = vector.broadcast %297 : vector<8x1xf32> to vector<8x8xf32>
    %299 = arith.divf %295, %298 : vector<8x8xf32>
    "tpu.trace_start"() <{level = 10 : i32, message = "qk,kd->qd"}> : () -> ()
    %cst_122 = arith.constant dense<0.000000e+00> : vector<8x8xf32>
    %300 = tpu.matmul %299, %283, %cst_122 {dimension_numbers = #tpu.dot_dimension_numbers<[1], [0], [0], [1], [0, 0, 1, 1], [], []>} : vector<8x8xf32>, vector<8x8xf32>, vector<8x8xf32> -> vector<8x8xf32>
    "tpu.trace_stop"() : () -> ()
    %301 = vector.extract_strided_slice %250 {offsets = [0, 0], sizes = [8, 32], strides = [1, 1]} : vector<32x32xf32> to vector<8x32xf32>
    %cst_123 = arith.constant dense<0.000000e+00> : vector<8x32xf32>
    %302 = tpu.matmul %300, %301, %cst_123 {dimension_numbers = #tpu.dot_dimension_numbers<[1], [0], [0], [1], [0, 0, 1, 1], [], []>} : vector<8x8xf32>, vector<8x32xf32>, vector<8x32xf32> -> vector<8x32xf32>
    %303 = arith.addf %280, %302 : vector<8x32xf32>
    %304 = vector.extract_strided_slice %279 {offsets = [0, 8], sizes = [8, 8], strides = [1, 1]} : vector<8x96xf32> to vector<8x8xf32>
    %305 = vector.extract_strided_slice %279 {offsets = [0, 40], sizes = [8, 8], strides = [1, 1]} : vector<8x96xf32> to vector<8x8xf32>
    %306 = vector.extract_strided_slice %279 {offsets = [0, 72], sizes = [8, 8], strides = [1, 1]} : vector<8x96xf32> to vector<8x8xf32>
    "tpu.trace_start"() <{level = 10 : i32, message = "qd,kd->qk"}> : () -> ()
    %cst_124 = arith.constant dense<0.000000e+00> : vector<8x8xf32>
    %307 = tpu.matmul %304, %305, %cst_124 {dimension_numbers = #tpu.dot_dimension_numbers<[1], [1], [0], [0], [0, 0, 1, 0], [], []>} : vector<8x8xf32>, vector<8x8xf32>, vector<8x8xf32> -> vector<8x8xf32>
    "tpu.trace_stop"() : () -> ()
    %cst_125 = arith.constant 0.353553385 : f32
    %308 = vector.broadcast %cst_125 : f32 to vector<8x8xf32>
    %309 = arith.mulf %307, %308 : vector<8x8xf32>
    %cst_126 = arith.constant -1.000000e+09 : f32
    %310 = vector.shape_cast %26 : vector<8x1xi1> to vector<8x1xi1>
    %311 = vector.broadcast %310 : vector<8x1xi1> to vector<8x8xi1>
    %312 = vector.broadcast %cst_126 : f32 to vector<8x8xf32>
    %313 = arith.select %311, %312, %309 : vector<8x8xi1>, vector<8x8xf32>
    %cst_127 = arith.constant dense<0xFF800000> : vector<8xf32>
    %314 = vector.multi_reduction <maximumf>, %313, %cst_127 [1] : vector<8x8xf32> to vector<8xf32>
    %315 = vector.shape_cast %314 : vector<8xf32> to vector<8x1xf32>
    %316 = vector.broadcast %315 : vector<8x1xf32> to vector<8x8xf32>
    %317 = arith.subf %313, %316 : vector<8x8xf32>
    %318 = math.exp %317 : vector<8x8xf32>
    %cst_128 = arith.constant dense<0.000000e+00> : vector<8xf32>
    %319 = vector.multi_reduction <add>, %318, %cst_128 [1] : vector<8x8xf32> to vector<8xf32>
    %320 = vector.shape_cast %319 : vector<8xf32> to vector<8x1xf32>
    %321 = vector.broadcast %320 : vector<8x1xf32> to vector<8x8xf32>
    %322 = arith.divf %318, %321 : vector<8x8xf32>
    "tpu.trace_start"() <{level = 10 : i32, message = "qk,kd->qd"}> : () -> ()
    %cst_129 = arith.constant dense<0.000000e+00> : vector<8x8xf32>
    %323 = tpu.matmul %322, %306, %cst_129 {dimension_numbers = #tpu.dot_dimension_numbers<[1], [0], [0], [1], [0, 0, 1, 1], [], []>} : vector<8x8xf32>, vector<8x8xf32>, vector<8x8xf32> -> vector<8x8xf32>
    "tpu.trace_stop"() : () -> ()
    %324 = vector.extract_strided_slice %250 {offsets = [8, 0], sizes = [8, 32], strides = [1, 1]} : vector<32x32xf32> to vector<8x32xf32>
    %cst_130 = arith.constant dense<0.000000e+00> : vector<8x32xf32>
    %325 = tpu.matmul %323, %324, %cst_130 {dimension_numbers = #tpu.dot_dimension_numbers<[1], [0], [0], [1], [0, 0, 1, 1], [], []>} : vector<8x8xf32>, vector<8x32xf32>, vector<8x32xf32> -> vector<8x32xf32>
    %326 = arith.addf %303, %325 : vector<8x32xf32>
    %327 = vector.extract_strided_slice %279 {offsets = [0, 16], sizes = [8, 8], strides = [1, 1]} : vector<8x96xf32> to vector<8x8xf32>
    %328 = vector.extract_strided_slice %279 {offsets = [0, 48], sizes = [8, 8], strides = [1, 1]} : vector<8x96xf32> to vector<8x8xf32>
    %329 = vector.extract_strided_slice %279 {offsets = [0, 80], sizes = [8, 8], strides = [1, 1]} : vector<8x96xf32> to vector<8x8xf32>
    "tpu.trace_start"() <{level = 10 : i32, message = "qd,kd->qk"}> : () -> ()
    %cst_131 = arith.constant dense<0.000000e+00> : vector<8x8xf32>
    %330 = tpu.matmul %327, %328, %cst_131 {dimension_numbers = #tpu.dot_dimension_numbers<[1], [1], [0], [0], [0, 0, 1, 0], [], []>} : vector<8x8xf32>, vector<8x8xf32>, vector<8x8xf32> -> vector<8x8xf32>
    "tpu.trace_stop"() : () -> ()
    %cst_132 = arith.constant 0.353553385 : f32
    %331 = vector.broadcast %cst_132 : f32 to vector<8x8xf32>
    %332 = arith.mulf %330, %331 : vector<8x8xf32>
    %cst_133 = arith.constant -1.000000e+09 : f32
    %333 = vector.shape_cast %26 : vector<8x1xi1> to vector<8x1xi1>
    %334 = vector.broadcast %333 : vector<8x1xi1> to vector<8x8xi1>
    %335 = vector.broadcast %cst_133 : f32 to vector<8x8xf32>
    %336 = arith.select %334, %335, %332 : vector<8x8xi1>, vector<8x8xf32>
    %cst_134 = arith.constant dense<0xFF800000> : vector<8xf32>
    %337 = vector.multi_reduction <maximumf>, %336, %cst_134 [1] : vector<8x8xf32> to vector<8xf32>
    %338 = vector.shape_cast %337 : vector<8xf32> to vector<8x1xf32>
    %339 = vector.broadcast %338 : vector<8x1xf32> to vector<8x8xf32>
    %340 = arith.subf %336, %339 : vector<8x8xf32>
    %341 = math.exp %340 : vector<8x8xf32>
    %cst_135 = arith.constant dense<0.000000e+00> : vector<8xf32>
    %342 = vector.multi_reduction <add>, %341, %cst_135 [1] : vector<8x8xf32> to vector<8xf32>
    %343 = vector.shape_cast %342 : vector<8xf32> to vector<8x1xf32>
    %344 = vector.broadcast %343 : vector<8x1xf32> to vector<8x8xf32>
    %345 = arith.divf %341, %344 : vector<8x8xf32>
    "tpu.trace_start"() <{level = 10 : i32, message = "qk,kd->qd"}> : () -> ()
    %cst_136 = arith.constant dense<0.000000e+00> : vector<8x8xf32>
    %346 = tpu.matmul %345, %329, %cst_136 {dimension_numbers = #tpu.dot_dimension_numbers<[1], [0], [0], [1], [0, 0, 1, 1], [], []>} : vector<8x8xf32>, vector<8x8xf32>, vector<8x8xf32> -> vector<8x8xf32>
    "tpu.trace_stop"() : () -> ()
    %347 = vector.extract_strided_slice %250 {offsets = [16, 0], sizes = [8, 32], strides = [1, 1]} : vector<32x32xf32> to vector<8x32xf32>
    %cst_137 = arith.constant dense<0.000000e+00> : vector<8x32xf32>
    %348 = tpu.matmul %346, %347, %cst_137 {dimension_numbers = #tpu.dot_dimension_numbers<[1], [0], [0], [1], [0, 0, 1, 1], [], []>} : vector<8x8xf32>, vector<8x32xf32>, vector<8x32xf32> -> vector<8x32xf32>
    %349 = arith.addf %326, %348 : vector<8x32xf32>
    %350 = vector.extract_strided_slice %279 {offsets = [0, 24], sizes = [8, 8], strides = [1, 1]} : vector<8x96xf32> to vector<8x8xf32>
    %351 = vector.extract_strided_slice %279 {offsets = [0, 56], sizes = [8, 8], strides = [1, 1]} : vector<8x96xf32> to vector<8x8xf32>
    %352 = vector.extract_strided_slice %279 {offsets = [0, 88], sizes = [8, 8], strides = [1, 1]} : vector<8x96xf32> to vector<8x8xf32>
    "tpu.trace_start"() <{level = 10 : i32, message = "qd,kd->qk"}> : () -> ()
    %cst_138 = arith.constant dense<0.000000e+00> : vector<8x8xf32>
    %353 = tpu.matmul %350, %351, %cst_138 {dimension_numbers = #tpu.dot_dimension_numbers<[1], [1], [0], [0], [0, 0, 1, 0], [], []>} : vector<8x8xf32>, vector<8x8xf32>, vector<8x8xf32> -> vector<8x8xf32>
    "tpu.trace_stop"() : () -> ()
    %cst_139 = arith.constant 0.353553385 : f32
    %354 = vector.broadcast %cst_139 : f32 to vector<8x8xf32>
    %355 = arith.mulf %353, %354 : vector<8x8xf32>
    %cst_140 = arith.constant -1.000000e+09 : f32
    %356 = vector.shape_cast %26 : vector<8x1xi1> to vector<8x1xi1>
    %357 = vector.broadcast %356 : vector<8x1xi1> to vector<8x8xi1>
    %358 = vector.broadcast %cst_140 : f32 to vector<8x8xf32>
    %359 = arith.select %357, %358, %355 : vector<8x8xi1>, vector<8x8xf32>
    %cst_141 = arith.constant dense<0xFF800000> : vector<8xf32>
    %360 = vector.multi_reduction <maximumf>, %359, %cst_141 [1] : vector<8x8xf32> to vector<8xf32>
    %361 = vector.shape_cast %360 : vector<8xf32> to vector<8x1xf32>
    %362 = vector.broadcast %361 : vector<8x1xf32> to vector<8x8xf32>
    %363 = arith.subf %359, %362 : vector<8x8xf32>
    %364 = math.exp %363 : vector<8x8xf32>
    %cst_142 = arith.constant dense<0.000000e+00> : vector<8xf32>
    %365 = vector.multi_reduction <add>, %364, %cst_142 [1] : vector<8x8xf32> to vector<8xf32>
    %366 = vector.shape_cast %365 : vector<8xf32> to vector<8x1xf32>
    %367 = vector.broadcast %366 : vector<8x1xf32> to vector<8x8xf32>
    %368 = arith.divf %364, %367 : vector<8x8xf32>
    "tpu.trace_start"() <{level = 10 : i32, message = "qk,kd->qd"}> : () -> ()
    %cst_143 = arith.constant dense<0.000000e+00> : vector<8x8xf32>
    %369 = tpu.matmul %368, %352, %cst_143 {dimension_numbers = #tpu.dot_dimension_numbers<[1], [0], [0], [1], [0, 0, 1, 1], [], []>} : vector<8x8xf32>, vector<8x8xf32>, vector<8x8xf32> -> vector<8x8xf32>
    "tpu.trace_stop"() : () -> ()
    %370 = vector.extract_strided_slice %250 {offsets = [24, 0], sizes = [8, 32], strides = [1, 1]} : vector<32x32xf32> to vector<8x32xf32>
    %cst_144 = arith.constant dense<0.000000e+00> : vector<8x32xf32>
    %371 = tpu.matmul %369, %370, %cst_144 {dimension_numbers = #tpu.dot_dimension_numbers<[1], [0], [0], [1], [0, 0, 1, 1], [], []>} : vector<8x8xf32>, vector<8x32xf32>, vector<8x32xf32> -> vector<8x32xf32>
    %372 = arith.addf %349, %371 : vector<8x32xf32>
    %373 = arith.addf %246, %372 : vector<8x32xf32>
    %374 = vector.extract_strided_slice %248 {offsets = [2, 0], sizes = [1, 32], strides = [1, 1]} : vector<8x32xf32> to vector<1x32xf32>
    %375 = vector.broadcast %374 : vector<1x32xf32> to vector<8x32xf32>
    %376 = arith.addf %373, %375 : vector<8x32xf32>
    %377 = vector.extract_strided_slice %248 {offsets = [3, 0], sizes = [1, 32], strides = [1, 1]} : vector<8x32xf32> to vector<1x32xf32>
    %378 = vector.extract_strided_slice %248 {offsets = [4, 0], sizes = [1, 32], strides = [1, 1]} : vector<8x32xf32> to vector<1x32xf32>
    %cst_145 = arith.constant dense<0.000000e+00> : vector<8xf32>
    %379 = vector.multi_reduction <add>, %376, %cst_145 [1] : vector<8x32xf32> to vector<8xf32>
    %380 = vector.shape_cast %379 : vector<8xf32> to vector<8x1xf32>
    %cst_146 = arith.constant 3.200000e+01 : f32
    %381 = vector.broadcast %cst_146 : f32 to vector<8x1xf32>
    %382 = arith.divf %380, %381 : vector<8x1xf32>
    %383 = vector.broadcast %382 : vector<8x1xf32> to vector<8x32xf32>
    %384 = arith.subf %376, %383 : vector<8x32xf32>
    %385 = arith.mulf %384, %384 : vector<8x32xf32>
    %cst_147 = arith.constant dense<0.000000e+00> : vector<8xf32>
    %386 = vector.multi_reduction <add>, %385, %cst_147 [1] : vector<8x32xf32> to vector<8xf32>
    %387 = vector.shape_cast %386 : vector<8xf32> to vector<8x1xf32>
    %cst_148 = arith.constant 3.200000e+01 : f32
    %388 = vector.broadcast %cst_148 : f32 to vector<8x1xf32>
    %389 = arith.divf %387, %388 : vector<8x1xf32>
    %cst_149 = arith.constant 9.99999996E-13 : f32
    %390 = vector.broadcast %cst_149 : f32 to vector<8x1xf32>
    %391 = arith.addf %389, %390 : vector<8x1xf32>
    %392 = math.rsqrt %391 : vector<8x1xf32>
    %393 = vector.broadcast %392 : vector<8x1xf32> to vector<8x32xf32>
    %394 = arith.mulf %384, %393 : vector<8x32xf32>
    %395 = vector.broadcast %377 : vector<1x32xf32> to vector<8x32xf32>
    %396 = arith.mulf %395, %394 : vector<8x32xf32>
    %397 = vector.broadcast %378 : vector<1x32xf32> to vector<8x32xf32>
    %398 = arith.addf %396, %397 : vector<8x32xf32>
    %c1_150 = arith.constant 1 : index
    %c0_151 = arith.constant 0 : index
    %c0_152 = arith.constant 0 : index
    %399 = vector.load %arg13[%c1_150, %c0_151, %c0_152] : memref<2x32x128xf32, #tpu.memory_space<vmem>>, vector<1x32x128xf32>
    %400 = vector.shape_cast %399 : vector<1x32x128xf32> to vector<32x128xf32>
    %cst_153 = arith.constant dense<0.000000e+00> : vector<8x128xf32>
    %401 = tpu.matmul %398, %400, %cst_153 {dimension_numbers = #tpu.dot_dimension_numbers<[1], [0], [0], [1], [0, 0, 1, 1], [], []>} : vector<8x32xf32>, vector<32x128xf32>, vector<8x128xf32> -> vector<8x128xf32>
    %c1_154 = arith.constant 1 : index
    %c0_155 = arith.constant 0 : index
    %c0_156 = arith.constant 0 : index
    %402 = vector.load %arg14[%c1_154, %c0_155, %c0_156] : memref<2x1x128xf32, #tpu.memory_space<vmem>>, vector<1x1x128xf32>
    %403 = vector.shape_cast %402 : vector<1x1x128xf32> to vector<1x128xf32>
    %404 = vector.broadcast %403 : vector<1x128xf32> to vector<8x128xf32>
    %405 = arith.addf %401, %404 : vector<8x128xf32>
    %cst_157 = arith.constant 5.000000e-01 : f32
    %406 = vector.broadcast %cst_157 : f32 to vector<8x128xf32>
    %407 = arith.mulf %406, %405 : vector<8x128xf32>
    %cst_158 = arith.constant 4.471500e-02 : f32
    %408 = vector.broadcast %cst_158 : f32 to vector<8x128xf32>
    %409 = arith.mulf %408, %405 : vector<8x128xf32>
    %410 = arith.mulf %409, %405 : vector<8x128xf32>
    %411 = arith.mulf %410, %405 : vector<8x128xf32>
    %412 = arith.addf %405, %411 : vector<8x128xf32>
    %cst_159 = arith.constant 0.797884583 : f32
    %413 = vector.broadcast %cst_159 : f32 to vector<8x128xf32>
    %414 = arith.mulf %413, %412 : vector<8x128xf32>
    %415 = math.tanh %414 : vector<8x128xf32>
    %cst_160 = arith.constant 1.000000e+00 : f32
    %416 = vector.broadcast %cst_160 : f32 to vector<8x128xf32>
    %417 = arith.addf %416, %415 : vector<8x128xf32>
    %418 = arith.mulf %407, %417 : vector<8x128xf32>
    %c1_161 = arith.constant 1 : index
    %c0_162 = arith.constant 0 : index
    %c0_163 = arith.constant 0 : index
    %419 = vector.load %arg15[%c1_161, %c0_162, %c0_163] : memref<2x128x32xf32, #tpu.memory_space<vmem>>, vector<1x128x32xf32>
    %420 = vector.shape_cast %419 : vector<1x128x32xf32> to vector<128x32xf32>
    %cst_164 = arith.constant dense<0.000000e+00> : vector<8x32xf32>
    %421 = tpu.matmul %418, %420, %cst_164 {dimension_numbers = #tpu.dot_dimension_numbers<[1], [0], [0], [1], [0, 0, 1, 1], [], []>} : vector<8x128xf32>, vector<128x32xf32>, vector<8x32xf32> -> vector<8x32xf32>
    %422 = vector.extract_strided_slice %248 {offsets = [5, 0], sizes = [1, 32], strides = [1, 1]} : vector<8x32xf32> to vector<1x32xf32>
    %423 = vector.broadcast %422 : vector<1x32xf32> to vector<8x32xf32>
    %424 = arith.addf %421, %423 : vector<8x32xf32>
    %425 = arith.addf %376, %424 : vector<8x32xf32>
    %426 = vector.extract_strided_slice %0 {offsets = [5, 0], sizes = [1, 32], strides = [1, 1]} : vector<8x32xf32> to vector<1x32xf32>
    %427 = vector.extract_strided_slice %0 {offsets = [6, 0], sizes = [1, 32], strides = [1, 1]} : vector<8x32xf32> to vector<1x32xf32>
    %cst_165 = arith.constant dense<0.000000e+00> : vector<8xf32>
    %428 = vector.multi_reduction <add>, %425, %cst_165 [1] : vector<8x32xf32> to vector<8xf32>
    %429 = vector.shape_cast %428 : vector<8xf32> to vector<8x1xf32>
    %cst_166 = arith.constant 3.200000e+01 : f32
    %430 = vector.broadcast %cst_166 : f32 to vector<8x1xf32>
    %431 = arith.divf %429, %430 : vector<8x1xf32>
    %432 = vector.broadcast %431 : vector<8x1xf32> to vector<8x32xf32>
    %433 = arith.subf %425, %432 : vector<8x32xf32>
    %434 = arith.mulf %433, %433 : vector<8x32xf32>
    %cst_167 = arith.constant dense<0.000000e+00> : vector<8xf32>
    %435 = vector.multi_reduction <add>, %434, %cst_167 [1] : vector<8x32xf32> to vector<8xf32>
    %436 = vector.shape_cast %435 : vector<8xf32> to vector<8x1xf32>
    %cst_168 = arith.constant 3.200000e+01 : f32
    %437 = vector.broadcast %cst_168 : f32 to vector<8x1xf32>
    %438 = arith.divf %436, %437 : vector<8x1xf32>
    %cst_169 = arith.constant 9.99999996E-13 : f32
    %439 = vector.broadcast %cst_169 : f32 to vector<8x1xf32>
    %440 = arith.addf %438, %439 : vector<8x1xf32>
    %441 = math.rsqrt %440 : vector<8x1xf32>
    %442 = vector.broadcast %441 : vector<8x1xf32> to vector<8x32xf32>
    %443 = arith.mulf %433, %442 : vector<8x32xf32>
    %444 = vector.broadcast %426 : vector<1x32xf32> to vector<8x32xf32>
    %445 = arith.mulf %444, %443 : vector<8x32xf32>
    %446 = vector.broadcast %427 : vector<1x32xf32> to vector<8x32xf32>
    %447 = arith.addf %445, %446 : vector<8x32xf32>
    %c0_170 = arith.constant 0 : index
    %c0_171 = arith.constant 0 : index
    %c0_172 = arith.constant 0 : index
    %448 = vector.load %arg17[%c0_170, %c0_171, %c0_172] : memref<1x8x32xf32, #tpu.memory_space<vmem>>, vector<1x8x32xf32>
    %449 = vector.shape_cast %448 : vector<1x8x32xf32> to vector<8x32xf32>
    %450 = vector.shape_cast %447 : vector<8x32xf32> to vector<1x8x32xf32>
    tpu.vector_store %arg17[%c0_170, %c0_171, %c0_172], %450 {strides = array<i32>} : memref<1x8x32xf32, #tpu.memory_space<vmem>>, vector<1x8x32xf32>,
    return
  }
  func.func @transform_0(%arg0: i32) -> (i32, i32, i32) {
    %c0_i32 = arith.constant 0 : i32
    %c0_i32_0 = arith.constant 0 : i32
    %c0_i32_1 = arith.constant 0 : i32
    return %arg0, %c0_i32, %c0_i32_0 : i32, i32, i32
  }
  func.func @transform_1(%arg0: i32) -> (i32, i32, i32) {
    %c0_i32 = arith.constant 0 : i32
    %c0_i32_0 = arith.constant 0 : i32
    %c0_i32_1 = arith.constant 0 : i32
    return %arg0, %c0_i32, %c0_i32_0 : i32, i32, i32
  }
  func.func @transform_2(%arg0: i32) -> (i32, i32, i32) {
    %c0_i32 = arith.constant 0 : i32
    %c0_i32_0 = arith.constant 0 : i32
    %c0_i32_1 = arith.constant 0 : i32
    return %arg0, %c0_i32, %c0_i32_0 : i32, i32, i32
  }
  func.func @transform_3(%arg0: i32) -> (i32, i32, i32) {
    %c0_i32 = arith.constant 0 : i32
    %c0_i32_0 = arith.constant 0 : i32
    %c0_i32_1 = arith.constant 0 : i32
    return %arg0, %c0_i32, %c0_i32_0 : i32, i32, i32
  }
  func.func @transform_4(%arg0: i32) -> (i32, i32, i32) {
    %c0_i32 = arith.constant 0 : i32
    %c0_i32_0 = arith.constant 0 : i32
    %c0_i32_1 = arith.constant 0 : i32
    return %arg0, %c0_i32, %c0_i32_0 : i32, i32, i32
  }
  func.func @transform_5(%arg0: i32) -> (i32, i32) {
    %c0_i32 = arith.constant 0 : i32
    %c0_i32_0 = arith.constant 0 : i32
    %c0_i32_1 = arith.constant 0 : i32
    return %c0_i32, %c0_i32_0 : i32, i32
  }
  func.func @transform_6(%arg0: i32) -> (i32, i32) {
    %c0_i32 = arith.constant 0 : i32
    %c0_i32_0 = arith.constant 0 : i32
    %c0_i32_1 = arith.constant 0 : i32
    return %c0_i32, %c0_i32_0 : i32, i32
  }
  func.func @transform_7(%arg0: i32) -> (i32, i32) {
    %c0_i32 = arith.constant 0 : i32
    %c0_i32_0 = arith.constant 0 : i32
    %c0_i32_1 = arith.constant 0 : i32
    return %c0_i32, %c0_i32_0 : i32, i32
  }
  func.func @transform_8(%arg0: i32) -> (i32, i32) {
    %c0_i32 = arith.constant 0 : i32
    %c0_i32_0 = arith.constant 0 : i32
    %c0_i32_1 = arith.constant 0 : i32
    return %c0_i32, %c0_i32_0 : i32, i32
  }
  func.func @transform_9(%arg0: i32) -> (i32, i32, i32) {
    %c0_i32 = arith.constant 0 : i32
    %c0_i32_0 = arith.constant 0 : i32
    %c0_i32_1 = arith.constant 0 : i32
    %c0_i32_2 = arith.constant 0 : i32
    return %c0_i32, %c0_i32_0, %c0_i32_1 : i32, i32, i32
  }
  func.func @transform_10(%arg0: i32) -> (i32, i32, i32) {
    %c0_i32 = arith.constant 0 : i32
    %c0_i32_0 = arith.constant 0 : i32
    %c0_i32_1 = arith.constant 0 : i32
    %c0_i32_2 = arith.constant 0 : i32
    return %c0_i32, %c0_i32_0, %c0_i32_1 : i32, i32, i32
  }
  func.func @transform_11(%arg0: i32) -> (i32, i32, i32) {
    %c0_i32 = arith.constant 0 : i32
    %c0_i32_0 = arith.constant 0 : i32
    %c0_i32_1 = arith.constant 0 : i32
    %c0_i32_2 = arith.constant 0 : i32
    return %c0_i32, %c0_i32_0, %c0_i32_1 : i32, i32, i32
  }
  func.func @transform_12(%arg0: i32) -> (i32, i32, i32) {
    %c0_i32 = arith.constant 0 : i32
    %c0_i32_0 = arith.constant 0 : i32
    %c0_i32_1 = arith.constant 0 : i32
    %c0_i32_2 = arith.constant 0 : i32
    return %c0_i32, %c0_i32_0, %c0_i32_1 : i32, i32, i32
  }
  func.func @transform_13(%arg0: i32) -> (i32, i32, i32) {
    %c0_i32 = arith.constant 0 : i32
    %c0_i32_0 = arith.constant 0 : i32
    %c0_i32_1 = arith.constant 0 : i32
    %c0_i32_2 = arith.constant 0 : i32
    return %c0_i32, %c0_i32_0, %c0_i32_1 : i32, i32, i32
  }
  func.func @transform_14(%arg0: i32) -> (i32, i32, i32) {
    %c0_i32 = arith.constant 0 : i32
    %c0_i32_0 = arith.constant 0 : i32
    %c0_i32_1 = arith.constant 0 : i32
    %c0_i32_2 = arith.constant 0 : i32
    return %c0_i32, %c0_i32_0, %c0_i32_1 : i32, i32, i32
  }
  func.func @transform_15(%arg0: i32) -> (i32, i32, i32) {
    %c0_i32 = arith.constant 0 : i32
    %c0_i32_0 = arith.constant 0 : i32
    %c0_i32_1 = arith.constant 0 : i32
    %c0_i32_2 = arith.constant 0 : i32
    return %c0_i32, %c0_i32_0, %c0_i32_1 : i32, i32, i32
  }
  func.func @transform_16(%arg0: i32) -> (i32, i32, i32) {
    %c0_i32 = arith.constant 0 : i32
    %c0_i32_0 = arith.constant 0 : i32
    %c0_i32_1 = arith.constant 0 : i32
    return %arg0, %c0_i32, %c0_i32_0 : i32, i32, i32
  }
  func.func @transform_17(%arg0: i32) -> (i32, i32, i32) {
    %c0_i32 = arith.constant 0 : i32
    %c0_i32_0 = arith.constant 0 : i32
    %c0_i32_1 = arith.constant 0 : i32
    return %arg0, %c0_i32, %c0_i32_0 : i32, i32, i32
  }
}

</mosaic_0001>

<llo_original>
// kernel: diffu_xstart_forward.1
$region0: #{diffu_xstart_forward.1}
  #allocation0 [shape = 'u32[]', space=smem, size = 0x4, offset = 0x4, fixed_abs, tag = 'smem constant byte address 0x4 - core index']
  #allocation1 [shape = 'u32[144,128]{1,0:T(1,128)}', space=vmem, size = 0x12000, scoped, tag = 'internal scratch']
  %s0 = inlined_call_operand.vmem [shape: f32[2,8,32], index: 0, kind: input, shape index: {}]
  %s1 = inlined_call_operand.vmem [shape: f32[2,1,32], index: 1, kind: input, shape index: {}]
  %s2 = inlined_call_operand.vmem [shape: f32[2,1,32], index: 2, kind: input, shape index: {}]
  %s3 = inlined_call_operand.vmem [shape: f32[2,8,32], index: 3, kind: input, shape index: {}]
  %s4 = inlined_call_operand.vmem [shape: f32[2,8,8], index: 4, kind: input, shape index: {}]
  %s5 = inlined_call_operand.vmem [shape: f32[32,128], index: 5, kind: input, shape index: {}]
  %s6 = inlined_call_operand.vmem [shape: f32[1,128], index: 6, kind: input, shape index: {}]
  %s7 = inlined_call_operand.vmem [shape: f32[128,32], index: 7, kind: input, shape index: {}]
  %s8 = inlined_call_operand.vmem [shape: f32[8,32], index: 8, kind: input, shape index: {}]
  %s9 = inlined_call_operand.vmem [shape: f32[2,32,96], index: 9, kind: input, shape index: {}]
  %s10 = inlined_call_operand.vmem [shape: f32[2,1,96], index: 10, kind: input, shape index: {}]
  %s11 = inlined_call_operand.vmem [shape: f32[2,32,32], index: 11, kind: input, shape index: {}]
  %s12 = inlined_call_operand.vmem [shape: f32[2,32,128], index: 12, kind: input, shape index: {}]
  %s13 = inlined_call_operand.vmem [shape: f32[2,1,128], index: 13, kind: input, shape index: {}]
  %s14 = inlined_call_operand.vmem [shape: f32[2,128,32], index: 14, kind: input, shape index: {}]
  %s15 = inlined_call_operand.vmem [shape: f32[2,8,32], index: 15, kind: input, shape index: {}]
  %s16 = inlined_call_operand.vmem [shape: f32[2,8,32], index: 16, kind: output, shape index: {0}]
  %s17 = inlined_call_operand.vmem [shape: f32[2,8,32], index: 17, kind: output, shape index: {1}]
  %18 = xla_tuple %s16, %s17
  %s19 = sld [smem:[#allocation0]]
  $region105: #{diffu_xstart_forward.1} parent=0
    _
  %s21 = ssub.s32 1, %s19
  %s22 = scalar_select 0, %s21, %s19
  loop: start=0, step=1, limit=4
  $region2: #{diffu_xstart_forward.1} parent=0 // loop_pre_header
    _
  $region3: #{diffu_xstart_forward.1} parent=0 // loop_header
    %s24 = sphi 0, %s28
    %p25 = scmp.ge.s32.totalorder %s24, 4
    %s34 = sphi 0, %s36
    %s37 = sphi 0, %s34
    %s38 = sphi 0, %s37
    %s54 = sphi 0, %s38
    %s60 = sphi 0, %s62
    %s63 = sphi 0, %s60
    %s64 = sphi 0, %s63
    %s80 = sphi 0, %s64
    %s86 = sphi 0, %s88
    %s89 = sphi 0, %s86
    %s90 = sphi 0, %s89
    %s106 = sphi 0, %s90
    %s112 = sphi 0, %s114
    %s115 = sphi 0, %s112
    %s116 = sphi 0, %s115
    %s132 = sphi 0, %s116
    %s138 = sphi 0, %s140
    %s141 = sphi 0, %s138
    %s142 = sphi 0, %s141
    %s158 = sphi 0, %s142
    %s162 = sphi 0, %s162
    %s164 = sphi 0, %s162
    %s165 = sphi 0, %s164
    %s179 = sphi 0, %s165
    %s183 = sphi 0, %s183
    %s185 = sphi 0, %s183
    %s186 = sphi 0, %s185
    %s200 = sphi 0, %s186
    %s204 = sphi 0, %s204
    %s206 = sphi 0, %s204
    %s207 = sphi 0, %s206
    %s221 = sphi 0, %s207
    %s225 = sphi 0, %s225
    %s227 = sphi 0, %s225
    %s228 = sphi 0, %s227
    %s242 = sphi 0, %s228
    %s246 = sphi 0, %s246
    %s248 = sphi 0, %s246
    %s249 = sphi 0, %s248
    %s263 = sphi 0, %s249
    %s267 = sphi 0, %s267
    %s269 = sphi 0, %s267
    %s270 = sphi 0, %s269
    %s284 = sphi 0, %s270
    %s288 = sphi 0, %s288
    %s290 = sphi 0, %s288
    %s291 = sphi 0, %s290
    %s305 = sphi 0, %s291
    %s309 = sphi 0, %s309
    %s311 = sphi 0, %s309
    %s312 = sphi 0, %s311
    %s326 = sphi 0, %s312
    %s330 = sphi 0, %s330
    %s332 = sphi 0, %s330
    %s333 = sphi 0, %s332
    %s347 = sphi 0, %s333
    %s351 = sphi 0, %s351
    %s353 = sphi 0, %s351
    %s354 = sphi 0, %s353
    %s368 = sphi 0, %s354
    %s372 = sphi 0, %s372
    %s374 = sphi 0, %s372
    %s375 = sphi 0, %s374
    %s389 = sphi 0, %s375
    %s395 = sphi 0, %s397
    %s398 = sphi 0, %s395
    %s399 = sphi 0, %s398
    %s415 = sphi 0, %s399
    %s421 = sphi 0, %s423
    %s424 = sphi 0, %s421
    %s425 = sphi 0, %s424
    %s441 = sphi 0, %s425
  $region4: #{diffu_xstart_forward.1} parent=0 // loop_header_branch
    %27 = sbr.rel (%p25) target = $region8
  $region5: #{diffu_xstart_forward.1} parent=0 // loop_body
    %s29 = ssub.s32 %s24, 1
    %s30 = ssub.s32 %s24, 2
    %s31 = sadd.s32 %s24, 1
    %s32 = ssub.s32 %s24, %s31
    %p33 = scmp.eq.s32.totalorder %s32, 0
    %s35 = sadd.s32 %s34, 1
    %s36 = scalar_select %p33, %s34, %s35
    %p39 = pneg %p33
    %p40 = scmp.eq.s32.totalorder %s24, 1
    %p41 = por %p39, %p40
    %p42 = scmp.ne.s32.totalorder %s34, %s37
    %p43 = scmp.eq.s32.totalorder %s24, 0
    %p44 = por %p42, %p43
    %p45 = scmp.ne.s32.totalorder %s34, %s37
    %p46 = scmp.eq.s32.totalorder %s29, 1
    %p47 = por %p45, %p46
    %p48 = scmp.ne.s32.totalorder %s37, %s38
    %p49 = scmp.eq.s32.totalorder %s29, 0
    %p50 = por %p48, %p49
    %p51 = scmp.ne.s32.totalorder %s37, %s38
    %p52 = scmp.eq.s32.totalorder %s30, 1
    %p53 = por %p51, %p52
    %p55 = scmp.ne.s32.totalorder %s38, %s54
    %p56 = scmp.eq.s32.totalorder %s30, 0
    %p57 = por %p55, %p56
    %s58 = ssub.s32 %s24, %s31
    %p59 = scmp.eq.s32.totalorder %s58, 0
    %s61 = sadd.s32 %s60, 1
    %s62 = scalar_select %p59, %s60, %s61
    %p65 = pneg %p59
    %p66 = scmp.eq.s32.totalorder %s24, 1
    %p67 = por %p65, %p66
    %p68 = scmp.ne.s32.totalorder %s60, %s63
    %p69 = scmp.eq.s32.totalorder %s24, 0
    %p70 = por %p68, %p69
    %p71 = scmp.ne.s32.totalorder %s60, %s63
    %p72 = scmp.eq.s32.totalorder %s29, 1
    %p73 = por %p71, %p72
    %p74 = scmp.ne.s32.totalorder %s63, %s64
    %p75 = scmp.eq.s32.totalorder %s29, 0
    %p76 = por %p74, %p75
    %p77 = scmp.ne.s32.totalorder %s63, %s64
    %p78 = scmp.eq.s32.totalorder %s30, 1
    %p79 = por %p77, %p78
    %p81 = scmp.ne.s32.totalorder %s64, %s80
    %p82 = scmp.eq.s32.totalorder %s30, 0
    %p83 = por %p81, %p82
    %s84 = ssub.s32 %s24, %s31
    %p85 = scmp.eq.s32.totalorder %s84, 0
    %s87 = sadd.s32 %s86, 1
    %s88 = scalar_select %p85, %s86, %s87
    %p91 = pneg %p85
    %p92 = scmp.eq.s32.totalorder %s24, 1
    %p93 = por %p91, %p92
    %p94 = scmp.ne.s32.totalorder %s86, %s89
    %p95 = scmp.eq.s32.totalorder %s24, 0
    %p96 = por %p94, %p95
    %p97 = scmp.ne.s32.totalorder %s86, %s89
    %p98 = scmp.eq.s32.totalorder %s29, 1
    %p99 = por %p97, %p98
    %p100 = scmp.ne.s32.totalorder %s89, %s90
    %p101 = scmp.eq.s32.totalorder %s29, 0
    %p102 = por %p100, %p101
    %p103 = scmp.ne.s32.totalorder %s89, %s90
    %p104 = scmp.eq.s32.totalorder %s30, 1
    %p105 = por %p103, %p104
    %p107 = scmp.ne.s32.totalorder %s90, %s106
    %p108 = scmp.eq.s32.totalorder %s30, 0
    %p109 = por %p107, %p108
    %s110 = ssub.s32 %s24, %s31
    %p111 = scmp.eq.s32.totalorder %s110, 0
    %s113 = sadd.s32 %s112, 1
    %s114 = scalar_select %p111, %s112, %s113
    %p117 = pneg %p111
    %p118 = scmp.eq.s32.totalorder %s24, 1
    %p119 = por %p117, %p118
    %p120 = scmp.ne.s32.totalorder %s112, %s115
    %p121 = scmp.eq.s32.totalorder %s24, 0
    %p122 = por %p120, %p121
    %p123 = scmp.ne.s32.totalorder %s112, %s115
    %p124 = scmp.eq.s32.totalorder %s29, 1
    %p125 = por %p123, %p124
    %p126 = scmp.ne.s32.totalorder %s115, %s116
    %p127 = scmp.eq.s32.totalorder %s29, 0
    %p128 = por %p126, %p127
    %p129 = scmp.ne.s32.totalorder %s115, %s116
    %p130 = scmp.eq.s32.totalorder %s30, 1
    %p131 = por %p129, %p130
    %p133 = scmp.ne.s32.totalorder %s116, %s132
    %p134 = scmp.eq.s32.totalorder %s30, 0
    %p135 = por %p133, %p134
    %s136 = ssub.s32 %s24, %s31
    %p137 = scmp.eq.s32.totalorder %s136, 0
    %s139 = sadd.s32 %s138, 1
    %s140 = scalar_select %p137, %s138, %s139
    %p143 = pneg %p137
    %p144 = scmp.eq.s32.totalorder %s24, 1
    %p145 = por %p143, %p144
    %p146 = scmp.ne.s32.totalorder %s138, %s141
    %p147 = scmp.eq.s32.totalorder %s24, 0
    %p148 = por %p146, %p147
    %p149 = scmp.ne.s32.totalorder %s138, %s141
    %p150 = scmp.eq.s32.totalorder %s29, 1
    %p151 = por %p149, %p150
    %p152 = scmp.ne.s32.totalorder %s141, %s142
    %p153 = scmp.eq.s32.totalorder %s29, 0
    %p154 = por %p152, %p153
    %p155 = scmp.ne.s32.totalorder %s141, %s142
    %p156 = scmp.eq.s32.totalorder %s30, 1
    %p157 = por %p155, %p156
    %p159 = scmp.ne.s32.totalorder %s142, %s158
    %p160 = scmp.eq.s32.totalorder %s30, 0
    %p161 = por %p159, %p160
    %s163 = sadd.s32 %s162, 1
    %p166 = scmp.eq.s32.totalorder %s24, 1
    %p167 = scmp.ne.s32.totalorder %s162, %s164
    %p168 = scmp.eq.s32.totalorder %s24, 0
    %p169 = por %p167, %p168
    %p170 = scmp.ne.s32.totalorder %s162, %s164
    %p171 = scmp.eq.s32.totalorder %s29, 1
    %p172 = por %p170, %p171
    %p173 = scmp.ne.s32.totalorder %s164, %s165
    %p174 = scmp.eq.s32.totalorder %s29, 0
    %p175 = por %p173, %p174
    %p176 = scmp.ne.s32.totalorder %s164, %s165
    %p177 = scmp.eq.s32.totalorder %s30, 1
    %p178 = por %p176, %p177
    %p180 = scmp.ne.s32.totalorder %s165, %s179
    %p181 = scmp.eq.s32.totalorder %s30, 0
    %p182 = por %p180, %p181
    %s184 = sadd.s32 %s183, 1
    %p187 = scmp.eq.s32.totalorder %s24, 1
    %p188 = scmp.ne.s32.totalorder %s183, %s185
    %p189 = scmp.eq.s32.totalorder %s24, 0
    %p190 = por %p188, %p189
    %p191 = scmp.ne.s32.totalorder %s183, %s185
    %p192 = scmp.eq.s32.totalorder %s29, 1
    %p193 = por %p191, %p192
    %p194 = scmp.ne.s32.totalorder %s185, %s186
    %p195 = scmp.eq.s32.totalorder %s29, 0
    %p196 = por %p194, %p195
    %p197 = scmp.ne.s32.totalorder %s185, %s186
    %p198 = scmp.eq.s32.totalorder %s30, 1
    %p199 = por %p197, %p198
    %p201 = scmp.ne.s32.totalorder %s186, %s200
    %p202 = scmp.eq.s32.totalorder %s30, 0
    %p203 = por %p201, %p202
    %s205 = sadd.s32 %s204, 1
    %p208 = scmp.eq.s32.totalorder %s24, 1
    %p209 = scmp.ne.s32.totalorder %s204, %s206
    %p210 = scmp.eq.s32.totalorder %s24, 0
    %p211 = por %p209, %p210
    %p212 = scmp.ne.s32.totalorder %s204, %s206
    %p213 = scmp.eq.s32.totalorder %s29, 1
    %p214 = por %p212, %p213
    %p215 = scmp.ne.s32.totalorder %s206, %s207
    %p216 = scmp.eq.s32.totalorder %s29, 0
    %p217 = por %p215, %p216
    %p218 = scmp.ne.s32.totalorder %s206, %s207
    %p219 = scmp.eq.s32.totalorder %s30, 1
    %p220 = por %p218, %p219
    %p222 = scmp.ne.s32.totalorder %s207, %s221
    %p223 = scmp.eq.s32.totalorder %s30, 0
    %p224 = por %p222, %p223
    %s226 = sadd.s32 %s225, 1
    %p229 = scmp.eq.s32.totalorder %s24, 1
    %p230 = scmp.ne.s32.totalorder %s225, %s227
    %p231 = scmp.eq.s32.totalorder %s24, 0
    %p232 = por %p230, %p231
    %p233 = scmp.ne.s32.totalorder %s225, %s227
    %p234 = scmp.eq.s32.totalorder %s29, 1
    %p235 = por %p233, %p234
    %p236 = scmp.ne.s32.totalorder %s227, %s228
    %p237 = scmp.eq.s32.totalorder %s29, 0
    %p238 = por %p236, %p237
    %p239 = scmp.ne.s32.totalorder %s227, %s228
    %p240 = scmp.eq.s32.totalorder %s30, 1
    %p241 = por %p239, %p240
    %p243 = scmp.ne.s32.totalorder %s228, %s242
    %p244 = scmp.eq.s32.totalorder %s30, 0
    %p245 = por %p243, %p244
    %s247 = sadd.s32 %s246, 1
    %p250 = scmp.eq.s32.totalorder %s24, 1
    %p251 = scmp.ne.s32.totalorder %s246, %s248
    %p252 = scmp.eq.s32.totalorder %s24, 0
    %p253 = por %p251, %p252
    %p254 = scmp.ne.s32.totalorder %s246, %s248
    %p255 = scmp.eq.s32.totalorder %s29, 1
    %p256 = por %p254, %p255
    %p257 = scmp.ne.s32.totalorder %s248, %s249
    %p258 = scmp.eq.s32.totalorder %s29, 0
    %p259 = por %p257, %p258
    %p260 = scmp.ne.s32.totalorder %s248, %s249
    %p261 = scmp.eq.s32.totalorder %s30, 1
    %p262 = por %p260, %p261
    %p264 = scmp.ne.s32.totalorder %s249, %s263
    %p265 = scmp.eq.s32.totalorder %s30, 0
    %p266 = por %p264, %p265
    %s268 = sadd.s32 %s267, 1
    %p271 = scmp.eq.s32.totalorder %s24, 1
    %p272 = scmp.ne.s32.totalorder %s267, %s269
    %p273 = scmp.eq.s32.totalorder %s24, 0
    %p274 = por %p272, %p273
    %p275 = scmp.ne.s32.totalorder %s267, %s269
    %p276 = scmp.eq.s32.totalorder %s29, 1
    %p277 = por %p275, %p276
    %p278 = scmp.ne.s32.totalorder %s269, %s270
    %p279 = scmp.eq.s32.totalorder %s29, 0
    %p280 = por %p278, %p279
    %p281 = scmp.ne.s32.totalorder %s269, %s270
    %p282 = scmp.eq.s32.totalorder %s30, 1
    %p283 = por %p281, %p282
    %p285 = scmp.ne.s32.totalorder %s270, %s284
    %p286 = scmp.eq.s32.totalorder %s30, 0
    %p287 = por %p285, %p286
    %s289 = sadd.s32 %s288, 1
    %p292 = scmp.eq.s32.totalorder %s24, 1
    %p293 = scmp.ne.s32.totalorder %s288, %s290
    %p294 = scmp.eq.s32.totalorder %s24, 0
    %p295 = por %p293, %p294
    %p296 = scmp.ne.s32.totalorder %s288, %s290
    %p297 = scmp.eq.s32.totalorder %s29, 1
    %p298 = por %p296, %p297
    %p299 = scmp.ne.s32.totalorder %s290, %s291
    %p300 = scmp.eq.s32.totalorder %s29, 0
    %p301 = por %p299, %p300
    %p302 = scmp.ne.s32.totalorder %s290, %s291
    %p303 = scmp.eq.s32.totalorder %s30, 1
    %p304 = por %p302, %p303
    %p306 = scmp.ne.s32.totalorder %s291, %s305
    %p307 = scmp.eq.s32.totalorder %s30, 0
    %p308 = por %p306, %p307
    %s310 = sadd.s32 %s309, 1
    %p313 = scmp.eq.s32.totalorder %s24, 1
    %p314 = scmp.ne.s32.totalorder %s309, %s311
    %p315 = scmp.eq.s32.totalorder %s24, 0
    %p316 = por %p314, %p315
    %p317 = scmp.ne.s32.totalorder %s309, %s311
    %p318 = scmp.eq.s32.totalorder %s29, 1
    %p319 = por %p317, %p318
    %p320 = scmp.ne.s32.totalorder %s311, %s312
    %p321 = scmp.eq.s32.totalorder %s29, 0
    %p322 = por %p320, %p321
    %p323 = scmp.ne.s32.totalorder %s311, %s312
    %p324 = scmp.eq.s32.totalorder %s30, 1
    %p325 = por %p323, %p324
    %p327 = scmp.ne.s32.totalorder %s312, %s326
    %p328 = scmp.eq.s32.totalorder %s30, 0
    %p329 = por %p327, %p328
    %s331 = sadd.s32 %s330, 1
    %p334 = scmp.eq.s32.totalorder %s24, 1
    %p335 = scmp.ne.s32.totalorder %s330, %s332
    %p336 = scmp.eq.s32.totalorder %s24, 0
    %p337 = por %p335, %p336
    %p338 = scmp.ne.s32.totalorder %s330, %s332
    %p339 = scmp.eq.s32.totalorder %s29, 1
    %p340 = por %p338, %p339
    %p341 = scmp.ne.s32.totalorder %s332, %s333
    %p342 = scmp.eq.s32.totalorder %s29, 0
    %p343 = por %p341, %p342
    %p344 = scmp.ne.s32.totalorder %s332, %s333
    %p345 = scmp.eq.s32.totalorder %s30, 1
    %p346 = por %p344, %p345
    %p348 = scmp.ne.s32.totalorder %s333, %s347
    %p349 = scmp.eq.s32.totalorder %s30, 0
    %p350 = por %p348, %p349
    %s352 = sadd.s32 %s351, 1
    %p355 = scmp.eq.s32.totalorder %s24, 1
    %p356 = scmp.ne.s32.totalorder %s351, %s353
    %p357 = scmp.eq.s32.totalorder %s24, 0
    %p358 = por %p356, %p357
    %p359 = scmp.ne.s32.totalorder %s351, %s353
    %p360 = scmp.eq.s32.totalorder %s29, 1
    %p361 = por %p359, %p360
    %p362 = scmp.ne.s32.totalorder %s353, %s354
    %p363 = scmp.eq.s32.totalorder %s29, 0
    %p364 = por %p362, %p363
    %p365 = scmp.ne.s32.totalorder %s353, %s354
    %p366 = scmp.eq.s32.totalorder %s30, 1
    %p367 = por %p365, %p366
    %p369 = scmp.ne.s32.totalorder %s354, %s368
    %p370 = scmp.eq.s32.totalorder %s30, 0
    %p371 = por %p369, %p370
    %s373 = sadd.s32 %s372, 1
    %p376 = scmp.eq.s32.totalorder %s24, 1
    %p377 = scmp.ne.s32.totalorder %s372, %s374
    %p378 = scmp.eq.s32.totalorder %s24, 0
    %p379 = por %p377, %p378
    %p380 = scmp.ne.s32.totalorder %s372, %s374
    %p381 = scmp.eq.s32.totalorder %s29, 1
    %p382 = por %p380, %p381
    %p383 = scmp.ne.s32.totalorder %s374, %s375
    %p384 = scmp.eq.s32.totalorder %s29, 0
    %p385 = por %p383, %p384
    %p386 = scmp.ne.s32.totalorder %s374, %s375
    %p387 = scmp.eq.s32.totalorder %s30, 1
    %p388 = por %p386, %p387
    %p390 = scmp.ne.s32.totalorder %s375, %s389
    %p391 = scmp.eq.s32.totalorder %s30, 0
    %p392 = por %p390, %p391
    %s393 = ssub.s32 %s24, %s31
    %p394 = scmp.eq.s32.totalorder %s393, 0
    %s396 = sadd.s32 %s395, 1
    %s397 = scalar_select %p394, %s395, %s396
    %p400 = pneg %p394
    %p401 = scmp.eq.s32.totalorder %s24, 1
    %p402 = por %p400, %p401
    %p403 = scmp.ne.s32.totalorder %s395, %s398
    %p404 = scmp.eq.s32.totalorder %s24, 0
    %p405 = por %p403, %p404
    %p406 = scmp.ne.s32.totalorder %s395, %s398
    %p407 = scmp.eq.s32.totalorder %s29, 1
    %p408 = por %p406, %p407
    %p409 = scmp.ne.s32.totalorder %s398, %s399
    %p410 = scmp.eq.s32.totalorder %s29, 0
    %p411 = por %p409, %p410
    %p412 = scmp.ne.s32.totalorder %s398, %s399
    %p413 = scmp.eq.s32.totalorder %s30, 1
    %p414 = por %p412, %p413
    %p416 = scmp.ne.s32.totalorder %s399, %s415
    %p417 = scmp.eq.s32.totalorder %s30, 0
    %p418 = por %p416, %p417
    %s419 = ssub.s32 %s24, %s31
    %p420 = scmp.eq.s32.totalorder %s419, 0
    %s422 = sadd.s32 %s421, 1
    %s423 = scalar_select %p420, %s421, %s422
    %p426 = pneg %p420
    %p427 = scmp.eq.s32.totalorder %s24, 1
    %p428 = por %p426, %p427
    %p429 = scmp.ne.s32.totalorder %s421, %s424
    %p430 = scmp.eq.s32.totalorder %s24, 0
    %p431 = por %p429, %p430
    %p432 = scmp.ne.s32.totalorder %s421, %s424
    %p433 = scmp.eq.s32.totalorder %s29, 1
    %p434 = por %p432, %p433
    %p435 = scmp.ne.s32.totalorder %s424, %s425
    %p436 = scmp.eq.s32.totalorder %s29, 0
    %p437 = por %p435, %p436
    %p438 = scmp.ne.s32.totalorder %s424, %s425
    %p439 = scmp.eq.s32.totalorder %s30, 1
    %p440 = por %p438, %p439
    %p442 = scmp.ne.s32.totalorder %s425, %s441
    %p443 = scmp.eq.s32.totalorder %s30, 0
    %p444 = por %p442, %p443
    %p445 = scmp.le.s32.totalorder 1, %s24
    %p446 = scmp.lt.s32.totalorder %s24, 3
    %p447 = pnand %p445, %p446
    %p448 = pneg %p447
    // Predicated region
    $region9: #{diffu_xstart_forward.1} parent=5 // pred_check
      _
    $region10: #{diffu_xstart_forward.1} parent=5 // pred_check_branch
      %450 = sbr.rel (%p447) target = $region12
    $region11: #{diffu_xstart_forward.1} parent=5 // pred_region
      %s451 = ssub.s32 %s24, 1
      // Predicated region
      $region13: #{diffu_xstart_forward.1} parent=11 // pred_check
        %p452 = pneg %p175
      $region14: #{diffu_xstart_forward.1} parent=11 // pred_check_branch
        %454 = sbr.rel (%p452) target = $region16
      $region15: #{diffu_xstart_forward.1} parent=11 // pred_region
        _
      $region16: #{diffu_xstart_forward.1} parent=11 // pred_fallthru
        _
      // Predicated region
      $region17: #{diffu_xstart_forward.1} parent=11 // pred_check
        %p455 = pneg %p196
      $region18: #{diffu_xstart_forward.1} parent=11 // pred_check_branch
        %457 = sbr.rel (%p455) target = $region20
      $region19: #{diffu_xstart_forward.1} parent=11 // pred_region
        _
      $region20: #{diffu_xstart_forward.1} parent=11 // pred_fallthru
        _
      // Predicated region
      $region21: #{diffu_xstart_forward.1} parent=11 // pred_check
        %p458 = pneg %p217
      $region22: #{diffu_xstart_forward.1} parent=11 // pred_check_branch
        %460 = sbr.rel (%p458) target = $region24
      $region23: #{diffu_xstart_forward.1} parent=11 // pred_region
        _
      $region24: #{diffu_xstart_forward.1} parent=11 // pred_fallthru
        _
      // Predicated region
      $region25: #{diffu_xstart_forward.1} parent=11 // pred_check
        %p461 = pneg %p238
      $region26: #{diffu_xstart_forward.1} parent=11 // pred_check_branch
        %463 = sbr.rel (%p461) target = $region28
      $region27: #{diffu_xstart_forward.1} parent=11 // pred_region
        _
      $region28: #{diffu_xstart_forward.1} parent=11 // pred_fallthru
        _
      // Predicated region
      $region29: #{diffu_xstart_forward.1} parent=11 // pred_check
        %p464 = pneg %p259
      $region30: #{diffu_xstart_forward.1} parent=11 // pred_check_branch
        %466 = sbr.rel (%p464) target = $region32
      $region31: #{diffu_xstart_forward.1} parent=11 // pred_region
        _
      $region32: #{diffu_xstart_forward.1} parent=11 // pred_fallthru
        _
      // Predicated region
      $region33: #{diffu_xstart_forward.1} parent=11 // pred_check
        %p467 = pneg %p280
      $region34: #{diffu_xstart_forward.1} parent=11 // pred_check_branch
        %469 = sbr.rel (%p467) target = $region36
      $region35: #{diffu_xstart_forward.1} parent=11 // pred_region
        _
      $region36: #{diffu_xstart_forward.1} parent=11 // pred_fallthru
        _
      // Predicated region
      $region37: #{diffu_xstart_forward.1} parent=11 // pred_check
        %p470 = pneg %p301
      $region38: #{diffu_xstart_forward.1} parent=11 // pred_check_branch
        %472 = sbr.rel (%p470) target = $region40
      $region39: #{diffu_xstart_forward.1} parent=11 // pred_region
        _
      $region40: #{diffu_xstart_forward.1} parent=11 // pred_fallthru
        _
      // Predicated region
      $region41: #{diffu_xstart_forward.1} parent=11 // pred_check
        %p473 = pneg %p322
      $region42: #{diffu_xstart_forward.1} parent=11 // pred_check_branch
        %475 = sbr.rel (%p473) target = $region44
      $region43: #{diffu_xstart_forward.1} parent=11 // pred_region
        _
      $region44: #{diffu_xstart_forward.1} parent=11 // pred_fallthru
        _
      // Predicated region
      $region45: #{diffu_xstart_forward.1} parent=11 // pred_check
        %p476 = pneg %p343
      $region46: #{diffu_xstart_forward.1} parent=11 // pred_check_branch
        %478 = sbr.rel (%p476) target = $region48
      $region47: #{diffu_xstart_forward.1} parent=11 // pred_region
        _
      $region48: #{diffu_xstart_forward.1} parent=11 // pred_fallthru
        _
      // Predicated region
      $region49: #{diffu_xstart_forward.1} parent=11 // pred_check
        %p479 = pneg %p364
      $region50: #{diffu_xstart_forward.1} parent=11 // pred_check_branch
        %481 = sbr.rel (%p479) target = $region52
      $region51: #{diffu_xstart_forward.1} parent=11 // pred_region
        _
      $region52: #{diffu_xstart_forward.1} parent=11 // pred_fallthru
        _
      // Predicated region
      $region53: #{diffu_xstart_forward.1} parent=11 // pred_check
        %p482 = pneg %p385
      $region54: #{diffu_xstart_forward.1} parent=11 // pred_check_branch
        %484 = sbr.rel (%p482) target = $region56
      $region55: #{diffu_xstart_forward.1} parent=11 // pred_region
        _
      $region56: #{diffu_xstart_forward.1} parent=11 // pred_fallthru
        _
    $region12: #{diffu_xstart_forward.1} parent=5 // pred_fallthru
      _
    %p485 = scmp.lt.s32.totalorder %s24, 2
    // Predicated region
    $region57: #{diffu_xstart_forward.1} parent=5 // pred_check
      %p486 = pneg %p485
    $region58: #{diffu_xstart_forward.1} parent=5 // pred_check_branch
      %488 = sbr.rel (%p486) target = $region60
    $region59: #{diffu_xstart_forward.1} parent=5 // pred_region
      // Predicated region
      $region61: #{diffu_xstart_forward.1} parent=59 // pred_check
        %p489 = pneg %p44
      $region62: #{diffu_xstart_forward.1} parent=59 // pred_check_branch
        %491 = sbr.rel (%p489) target = $region64
      $region63: #{diffu_xstart_forward.1} parent=59 // pred_region
        %p492 = scmp.lt.s32.totalorder %s24, 1
        %s493 = scalar_select %p492, %s24, 1
        %s494 = smul.addr %s493, 8
        %s495 = scalar_lea.vmem %s0, %s494
      $region64: #{diffu_xstart_forward.1} parent=59 // pred_fallthru
        _
      // Predicated region
      $region65: #{diffu_xstart_forward.1} parent=59 // pred_check
        %p496 = pneg %p70
      $region66: #{diffu_xstart_forward.1} parent=59 // pred_check_branch
        %498 = sbr.rel (%p496) target = $region68
      $region67: #{diffu_xstart_forward.1} parent=59 // pred_region
        %p499 = scmp.lt.s32.totalorder %s24, 1
        %s500 = scalar_select %p499, %s24, 1
        %s501 = scalar_lea.vmem %s1, %s500
      $region68: #{diffu_xstart_forward.1} parent=59 // pred_fallthru
        _
      // Predicated region
      $region69: #{diffu_xstart_forward.1} parent=59 // pred_check
        %p502 = pneg %p96
      $region70: #{diffu_xstart_forward.1} parent=59 // pred_check_branch
        %504 = sbr.rel (%p502) target = $region72
      $region71: #{diffu_xstart_forward.1} parent=59 // pred_region
        %p505 = scmp.lt.s32.totalorder %s24, 1
        %s506 = scalar_select %p505, %s24, 1
        %s507 = scalar_lea.vmem %s2, %s506
      $region72: #{diffu_xstart_forward.1} parent=59 // pred_fallthru
        _
      // Predicated region
      $region73: #{diffu_xstart_forward.1} parent=59 // pred_check
        %p508 = pneg %p122
      $region74: #{diffu_xstart_forward.1} parent=59 // pred_check_branch
        %510 = sbr.rel (%p508) target = $region76
      $region75: #{diffu_xstart_forward.1} parent=59 // pred_region
        %p511 = scmp.lt.s32.totalorder %s24, 1
        %s512 = scalar_select %p511, %s24, 1
        %s513 = smul.addr %s512, 8
        %s514 = scalar_lea.vmem %s3, %s513
      $region76: #{diffu_xstart_forward.1} parent=59 // pred_fallthru
        _
      // Predicated region
      $region77: #{diffu_xstart_forward.1} parent=59 // pred_check
        %p515 = pneg %p148
      $region78: #{diffu_xstart_forward.1} parent=59 // pred_check_branch
        %517 = sbr.rel (%p515) target = $region80
      $region79: #{diffu_xstart_forward.1} parent=59 // pred_region
        %p518 = scmp.lt.s32.totalorder %s24, 1
        %s519 = scalar_select %p518, %s24, 1
        %s520 = smul.addr %s519, 8
        %s521 = scalar_lea.vmem %s4, %s520
      $region80: #{diffu_xstart_forward.1} parent=59 // pred_fallthru
        _
    $region60: #{diffu_xstart_forward.1} parent=5 // pred_fallthru
      _
    %p522 = scmp.le.s32.totalorder 1, %s24
    %p523 = scmp.lt.s32.totalorder %s24, 3
    %p524 = pnand %p522, %p523
    %p525 = pneg %p524
    // Predicated region
    $region81: #{diffu_xstart_forward.1} parent=5 // pred_check
      _
    $region82: #{diffu_xstart_forward.1} parent=5 // pred_check_branch
      %527 = sbr.rel (%p524) target = $region84
    $region83: #{diffu_xstart_forward.1} parent=5 // pred_region
      %s528 = ssub.s32 %s24, 1
      %p529 = scmp.lt.s32.totalorder %s29, 1
      %s530 = scalar_select %p529, %s29, 1
      %s531 = smul.addr %s530, 8
      %s532 = scalar_lea.vmem %s0, %s531
      %p533 = pneg %p50
      %p534 = pneg %p47
      %p535 = scmp.lt.s32.totalorder %s29, 1
      %s536 = scalar_select %p535, %s29, 1
      %s537 = scalar_lea.vmem %s1, %s536
      %p538 = pneg %p76
      %p539 = pneg %p73
      %p540 = scmp.lt.s32.totalorder %s29, 1
      %s541 = scalar_select %p540, %s29, 1
      %s542 = scalar_lea.vmem %s2, %s541
      %p543 = pneg %p102
      %p544 = pneg %p99
      %p545 = scmp.lt.s32.totalorder %s29, 1
      %s546 = scalar_select %p545, %s29, 1
      %s547 = smul.addr %s546, 8
      %s548 = scalar_lea.vmem %s3, %s547
      %p549 = pneg %p128
      %p550 = pneg %p125
      %p551 = scmp.lt.s32.totalorder %s29, 1
      %s552 = scalar_select %p551, %s29, 1
      %s553 = smul.addr %s552, 8
      %s554 = scalar_lea.vmem %s4, %s553
      %p555 = pneg %p154
      %p556 = pneg %p151
      %p557 = pneg %p175
      %p558 = pneg %p172
      %p559 = pneg %p196
      %p560 = pneg %p193
      %p561 = pneg %p217
      %p562 = pneg %p214
      %p563 = pneg %p238
      %p564 = pneg %p235
      %p565 = pneg %p259
      %p566 = pneg %p256
      %p567 = pneg %p280
      %p568 = pneg %p277
      %p569 = pneg %p301
      %p570 = pneg %p298
      %p571 = pneg %p322
      %p572 = pneg %p319
      %p573 = pneg %p343
      %p574 = pneg %p340
      %p575 = pneg %p364
      %p576 = pneg %p361
      %p577 = pneg %p385
      %p578 = pneg %p382
      %p579 = pneg %p411
      %p580 = pneg %p408
      %p581 = scmp.lt.s32.totalorder %s29, 1
      %s582 = scalar_select %p581, %s29, 1
      %s583 = smul.addr %s582, 8
      %s584 = scalar_lea.vmem %s16, %s583
      %p585 = pneg %p437
      %p586 = pneg %p434
      %p587 = scmp.lt.s32.totalorder %s29, 1
      %s588 = scalar_select %p587, %s29, 1
      %s589 = smul.addr %s588, 8
      %s590 = scalar_lea.vmem %s17, %s589
      %p591 = scmp.lt.s32.totalorder %s29, 1
      %s592 = scalar_select %p591, %s29, 1
      %s593 = smul.addr %s592, 8
      %s594 = scalar_lea.vmem %s0, %s593
      %p595 = scmp.lt.s32.totalorder %s29, 1
      %s596 = scalar_select %p595, %s29, 1
      %s597 = scalar_lea.vmem %s1, %s596
      %p598 = scmp.lt.s32.totalorder %s29, 1
      %s599 = scalar_select %p598, %s29, 1
      %s600 = scalar_lea.vmem %s2, %s599
      %p601 = scmp.lt.s32.totalorder %s29, 1
      %s602 = scalar_select %p601, %s29, 1
      %s603 = smul.addr %s602, 8
      %s604 = scalar_lea.vmem %s3, %s603
      %p605 = scmp.lt.s32.totalorder %s29, 1
      %s606 = scalar_select %p605, %s29, 1
      %s607 = smul.addr %s606, 8
      %s608 = scalar_lea.vmem %s4, %s607
      %p609 = scmp.lt.s32.totalorder %s29, 1
      %s610 = scalar_select %p609, %s29, 1
      %s611 = smul.addr %s610, 8
      %s612 = scalar_lea.vmem %s16, %s611
      %p613 = scmp.lt.s32.totalorder %s29, 1
      %s614 = scalar_select %p613, %s29, 1
      %s615 = smul.addr %s614, 8
      %s616 = scalar_lea.vmem %s17, %s615
      %v617 = vld [vmem:[%s8] sm:$0xff]
      %v618 = vld [vmem:[%s600] sm:$0x1]
      %v619 = vld [vmem:[%s5] sm:$0xff]
      %v620 = vld [vmem:[%s5 + $0x8] sm:$0xff]
      %v621 = vld [vmem:[%s5 + $0x10] sm:$0xff]
      %v622 = vld [vmem:[%s5 + $0x18] sm:$0xff]
      %v623 = vld [vmem:[%s6] sm:$0x1]
      %vm624 = vcmask 261120
      %v626 = vsel %vm624, %v618, 0
      %628 = vmatprep.subr.mxu0 0.0
      %629 = vmatpush1.msra.mxu0 %v619
      %630 = vmatprep.subr.mxu0 0.0
      %631 = vmatpush1.msra.mxu0 %v620
      %632 = vmatprep.subr.mxu0 0.0
      %633 = vmatpush1.msra.mxu0 %v621
      %634 = vmatprep.subr.mxu0 0.0
      %635 = vmatpush1.msra.mxu0 %v622
      %636 = vmatprep.subr.mxu0 0.0
      %637 = vmatpush1.msra.mxu0 0.0
      %638 = vmatprep.subr.mxu0 0.0
      %639 = vmatpush1.msra.mxu0 0.0
      %640 = vmatprep.subr.mxu0 0.0
      %641 = vmatpush1.msra.mxu0 0.0
      %642 = vmatprep.subr.mxu0 0.0
      %643 = vmatpush1.msra.mxu0 0.0
      %644 = vmatprep.subr.mxu0 0.0
      %645 = vmatpush1.msra.mxu0 0.0
      %646 = vmatprep.subr.mxu0 0.0
      %647 = vmatpush1.msra.mxu0 0.0
      %648 = vmatprep.subr.mxu0 0.0
      %649 = vmatpush1.msra.mxu0 0.0
      %650 = vmatprep.subr.mxu0 0.0
      %651 = vmatpush1.msra.mxu0 0.0
      %652 = vmatprep.subr.mxu0 0.0
      %653 = vmatpush1.msra.mxu0 0.0
      %654 = vmatprep.subr.mxu0 0.0
      %655 = vmatpush1.msra.mxu0 0.0
      %656 = vmatprep.subr.mxu0 0.0
      %657 = vmatpush1.msra.mxu0 0.0
      %658 = vmatprep.subr.mxu0 0.0
      %659 = vmatpush1.msra.mxu0 0.0
      %660 = vmatprep.subr.mxu0 0.0
      %661 = vmatpush1.msra.mxu0 0.0
      %662 = vmatprep.subr.mxu0 0.0
      %663 = vmatpush1.msra.mxu0 0.0
      %664 = vmatprep.subr.mxu0 0.0
      %665 = vmatpush1.msra.mxu0 0.0
      %666 = vmatprep.subr.mxu0 0.0
      %667 = vmatpush1.msra.mxu0 0.0
      %668 = vmatprep.subr.mxu0 0.0
      %669 = vmatpush1.msra.mxu0 0.0
      %670 = vmatprep.subr.mxu0 0.0
      %671 = vmatpush1.msra.mxu0 0.0
      %672 = vmatprep.subr.mxu0 0.0
      %673 = vmatpush1.msra.mxu0 0.0
      %674 = vmatprep.subr.mxu0 0.0
      %675 = vmatpush1.msra.mxu0 0.0
      %676 = vmatprep.subr.mxu0 0.0
      %677 = vmatpush1.msra.mxu0 0.0
      %678 = vmatprep.subr.mxu0 0.0
      %679 = vmatpush1.msra.mxu0 0.0
      %680 = vmatprep.subr.mxu0 0.0
      %681 = vmatpush1.msra.mxu0 0.0
      %682 = vmatprep.subr.mxu0 0.0
      %683 = vmatpush1.msra.mxu0 0.0
      %684 = vmatprep.subr.mxu0 0.0
      %685 = vmatpush1.msra.mxu0 0.0
      %686 = vmatprep.subr.mxu0 0.0
      %687 = vmatpush1.msra.mxu0 0.0
      %688 = vmatprep.subr.mxu0 0.0
      %689 = vmatpush1.msra.mxu0 0.0
      %690 = vmatprep.subr.mxu0 0.0
      %691 = vmatpush1.msra.mxu0 0.0
      %692 = vmatprep.mubr.f32.mxu0 0.0
      %693 = vmatmul.mubr.f32.gmra.mrb[0].mxu0 %v626
      %v694 = vpop.f32.mrb[0].mxu0
      %v695 = vadd.f32 %v623, %v694
      %v696 = vpop.f32.mrb[0].mxu0
      %697 = vdwg.mxu0
      %v698 = vxor.u32 %v695, 2147483648
      %v699 = vmul.f32 %v698, 1.442695
      %v700 = vpow.pop %v699
      %v701 = vadd.f32 %v700, 1.0
      %v702 = vrcp.pop %v701
      %v703 = vmul.f32 1.0, %v702
      %v704 = vmul.f32 %v695, %v703
      %v705 = vld [vmem:[%s7] sm:$0xff]
      %v706 = vld [vmem:[%s7 + $0x8] sm:$0xff]
      %v707 = vld [vmem:[%s7 + $0x10] sm:$0xff]
      %v708 = vld [vmem:[%s7 + $0x18] sm:$0xff]
      %v709 = vld [vmem:[%s7 + $0x20] sm:$0xff]
      %v710 = vld [vmem:[%s7 + $0x28] sm:$0xff]
      %v711 = vld [vmem:[%s7 + $0x30] sm:$0xff]
      %v712 = vld [vmem:[%s7 + $0x38] sm:$0xff]
      %v713 = vld [vmem:[%s7 + $0x40] sm:$0xff]
      %v714 = vld [vmem:[%s7 + $0x48] sm:$0xff]
      %v715 = vld [vmem:[%s7 + $0x50] sm:$0xff]
      %v716 = vld [vmem:[%s7 + $0x58] sm:$0xff]
      %v717 = vld [vmem:[%s7 + $0x60] sm:$0xff]
      %v718 = vld [vmem:[%s7 + $0x68] sm:$0xff]
      %v719 = vld [vmem:[%s7 + $0x70] sm:$0xff]
      %v720 = vld [vmem:[%s7 + $0x78] sm:$0xff]
      %v722 = vrot.slane %v617, 4
      %724 = vmatprep.subr.mxu0 0.0
      %725 = vmatpush1.msra.mxu0 %v705
      %726 = vmatprep.subr.mxu0 0.0
      %727 = vmatpush1.msra.mxu0 %v706
      %728 = vmatprep.subr.mxu0 0.0
      %729 = vmatpush1.msra.mxu0 %v707
      %730 = vmatprep.subr.mxu0 0.0
      %731 = vmatpush1.msra.mxu0 %v708
      %732 = vmatprep.subr.mxu0 0.0
      %733 = vmatpush1.msra.mxu0 %v709
      %734 = vmatprep.subr.mxu0 0.0
      %735 = vmatpush1.msra.mxu0 %v710
      %736 = vmatprep.subr.mxu0 0.0
      %737 = vmatpush1.msra.mxu0 %v711
      %738 = vmatprep.subr.mxu0 0.0
      %739 = vmatpush1.msra.mxu0 %v712
      %740 = vmatprep.subr.mxu0 0.0
      %741 = vmatpush1.msra.mxu0 %v713
      %742 = vmatprep.subr.mxu0 0.0
      %743 = vmatpush1.msra.mxu0 %v714
      %744 = vmatprep.subr.mxu0 0.0
      %745 = vmatpush1.msra.mxu0 %v715
      %746 = vmatprep.subr.mxu0 0.0
      %747 = vmatpush1.msra.mxu0 %v716
      %748 = vmatprep.subr.mxu0 0.0
      %749 = vmatpush1.msra.mxu0 %v717
      %750 = vmatprep.subr.mxu0 0.0
      %751 = vmatpush1.msra.mxu0 %v718
      %752 = vmatprep.subr.mxu0 0.0
      %753 = vmatpush1.msra.mxu0 %v719
      %754 = vmatprep.subr.mxu0 0.0
      %755 = vmatpush1.msra.mxu0 %v720
      %756 = vmatprep.subr.mxu0 0.0
      %757 = vmatpush1.msra.mxu0 0.0
      %758 = vmatprep.subr.mxu0 0.0
      %759 = vmatpush1.msra.mxu0 0.0
      %760 = vmatprep.subr.mxu0 0.0
      %761 = vmatpush1.msra.mxu0 0.0
      %762 = vmatprep.subr.mxu0 0.0
      %763 = vmatpush1.msra.mxu0 0.0
      %764 = vmatprep.subr.mxu0 0.0
      %765 = vmatpush1.msra.mxu0 0.0
      %766 = vmatprep.subr.mxu0 0.0
      %767 = vmatpush1.msra.mxu0 0.0
      %768 = vmatprep.subr.mxu0 0.0
      %769 = vmatpush1.msra.mxu0 0.0
      %770 = vmatprep.subr.mxu0 0.0
      %771 = vmatpush1.msra.mxu0 0.0
      %772 = vmatprep.subr.mxu0 0.0
      %773 = vmatpush1.msra.mxu0 0.0
      %774 = vmatprep.subr.mxu0 0.0
      %775 = vmatpush1.msra.mxu0 0.0
      %776 = vmatprep.subr.mxu0 0.0
      %777 = vmatpush1.msra.mxu0 0.0
      %778 = vmatprep.subr.mxu0 0.0
      %779 = vmatpush1.msra.mxu0 0.0
      %780 = vmatprep.subr.mxu0 0.0
      %781 = vmatpush1.msra.mxu0 0.0
      %782 = vmatprep.subr.mxu0 0.0
      %783 = vmatpush1.msra.mxu0 0.0
      %784 = vmatprep.subr.mxu0 0.0
      %785 = vmatpush1.msra.mxu0 0.0
      %786 = vmatprep.subr.mxu0 0.0
      %787 = vmatpush1.msra.mxu0 0.0
      %788 = vmatprep.mubr.f32.mxu0 0.0
      %789 = vmatmul.mubr.f32.gmra.mrb[0].mxu0 %v704
      %v790 = vpop.f32.mrb[0].mxu0
      %v791 = vadd.f32 %v722, %v790
      %v792 = vpop.f32.mrb[0].mxu0
      %793 = vdwg.mxu0
      %v794 = vld [vmem:[%s597] sm:$0x1]
      %v795 = vadd.f32 %v794, %v791
      %v796 = vld [vmem:[%s608] sm:$0xff]
      %vm797 = vcmp.eq.f32.partialorder %v796, 0.0
      %799 = vset.pattern.permute.xlu0 0
      %800 = vperm.xlu0 %799, %v796
      %v801 = vpop.permute.xlu0 %800
      %v803 = vlaneseq
      %v804 = vshrl.u32 %v803, 7
      %v805 = vsub.s32 0, %v804
      %v806 = vrot.slane %v617, %v805
      %v807 = vmul.f32 %v801, %v806
      %v808 = vlaneseq
      %v809 = vshrl.u32 %v808, 7
      %v810 = vsub.s32 1, %v809
      %v811 = vrot.slane %v617, %v810
      %v812 = vadd.f32 %v807, %v811
      %813 = vset.pattern.permute.xlu0 1
      %814 = vperm.xlu0 %813, %v796
      %v815 = vpop.permute.xlu0 %814
      %v817 = vlaneseq
      %v818 = vshrl.u32 %v817, 7
      %v819 = vsub.s32 2, %v818
      %v820 = vrot.slane %v617, %v819
      %v821 = vmul.f32 %v815, %v820
      %v822 = vlaneseq
      %v823 = vshrl.u32 %v822, 7
      %v824 = vsub.s32 3, %v823
      %v825 = vrot.slane %v617, %v824
      %v826 = vadd.f32 %v821, %v825
      %v827 = vlaneseq
      %v828 = vand.u32 %v827, 127
      %vm829 = vcmp.eq.s32.totalorder %v828, 31
      %v830 = vmul.f32 %v812, 0.7
      %v831 = vmul.f32 %v826, 0.3
      %v832 = vadd.f32 %v830, %v831
      %v833 = vand.u32 2147483647, %v812
      %vm834 = vcmp.le.f32.partialorder %v833, 0.7853982
      %vm835 = vcmp.lt.s32.totalorder %v812, 0
      %v836 = vand.u32 %v812, 2139095040
      %v837 = vshrl.u32 %v836, 23
      %v838 = vsub.s32 %v837, 127
      %v839 = vand.u32 2147483647, %v812
      %v840 = vand.u32 %v839, 8388607
      %v841 = vor.u32 %v840, 8388608
      %v842 = vsub.s32 0, %v841
      %v843 = vadd.s32 %v838, 1
      %vm844 = vcmp.gt.s32.totalorder %v843, 0
      %v845 = vsel %vm844, %v843, 0
      %v846 = vshrl.u32 %v845, 5
      %v847 = vand.u32 %v845, 31
      %v848 = vsub.s32 32, %v847
      %v849 = vshrl.u32 683565275, %v848
      %v850 = vshll.u32 683565275, %v847
      %v851 = vshrl.u32 2475754826, %v848
      %v852 = vor.u32 %v850, %v851
      %v853 = vshll.u32 2475754826, %v847
      %v854 = vshrl.u32 2131351028, %v848
      %v855 = vor.u32 %v853, %v854
      %v856 = vshll.u32 2131351028, %v847
      %v857 = vshrl.u32 2102212464, %v848
      %v858 = vor.u32 %v856, %v857
      %v859 = vshll.u32 2102212464, %v847
      %v860 = vshrl.u32 920167782, %v848
      %v861 = vor.u32 %v859, %v860
      %v862 = vshll.u32 920167782, %v847
      %v863 = vshrl.u32 1326507024, %v848
      %v864 = vor.u32 %v862, %v863
      %vm865 = vcmp.lt.s32.totalorder %v846, 1
      %vm866 = vcmp.lt.s32.totalorder %v846, 2
      %vm867 = vcmp.lt.s32.totalorder %v846, 3
      %vm868 = vcmp.lt.s32.totalorder %v846, 4
      %v869 = vsel %vm865, %v849, %v852
      %v870 = vsel %vm868, %v858, 2102212464
      %v871 = vsel %vm867, %v855, %v870
      %v872 = vsel %vm866, %v869, %v871
      %v873 = vsel %vm865, %v852, %v855
      %v874 = vsel %vm868, %v861, 920167782
      %v875 = vsel %vm867, %v858, %v874
      %v876 = vsel %vm866, %v873, %v875
      %v877 = vsel %vm865, %v855, %v858
      %v878 = vsel %vm868, %v864, 1326507024
      %v879 = vsel %vm867, %v861, %v878
      %v880 = vsel %vm866, %v877, %v879
      %v881 = vshll.u32 %v841, 8
      %v882 = vmul.u32.u64.compose %v881, %v880
      %v883 = vextract.low.u32 %v882
      %v884 = vextract.high.u32 %v882
      %v885 = vmul.u32.u64.compose %v881, %v876
      %v886 = vextract.low.u32 %v885
      %v887 = vextract.high.u32 %v885
      %v888 = vmul.u32 %v881, %v872
      %v889 = vadd.s32 %v884, %v886
      %vm890 = vc.u32 %v884, %v886
      %v891 = vadd.s32 %v887, 1
      %v892 = vsel %vm890, %v891, %v887
      %v893 = vadd.s32 %v888, %v892
      %v894 = vadd.s32 %v893, 536870912
      %v895 = vshrl.u32 %v894, 30
      %v896 = vshll.u32 %v895, 30
      %v897 = vsub.s32 %v893, %v896
      %vm898 = vcmp.lt.s32.totalorder %v897, 0
      %v899 = vsub.s32 0, %v897
      %v900 = vsel %vm898, %v899, %v897
      %v901 = vclz %v900
      %v902 = vsub.s32 %v901, 2
      %vm903 = vcmp.gt.s32.totalorder 0, %v902
      %v904 = vsel %vm903, 0, %v902
      %v905 = vsub.s32 32, %v904
      %v906 = vshll.u32 %v897, %v904
      %v907 = vshrl.u32 %v889, %v905
      %v908 = vor.u32 %v906, %v907
      %v909 = vsub.s32 4294967266, %v904
      %v910 = vadd.s32 %v909, 127
      %v911 = vshll.u32 %v910, 23
      %v912 = vor.u32 4788187, %v911
      %v913 = vand.u32 2147483647, %v912
      %v915 = vcvt.s32.f32 %v908
      %v916 = vmul.f32 %v915, %v913
      %v917 = vxor.u32 %v916, 2147483648
      %v918 = vsel %vm835, %v917, %v916
      %v919 = vsub.s32 4, %v895
      %v920 = vsel %vm835, %v919, %v895
      %v921 = vsel %vm834, %v812, %v918
      %v922 = vsel %vm834, 0, %v920
      %v923 = vcosq.f32.pop %v921
      %v924 = vsinq.f32.pop %v921
      %vm925 = vweird.f32 %v812
      %v926 = vadd.s32 %v922, 3
      %v927 = vand.u32 %v926, 3
      %vm928 = vcmp.lt.s32.totalorder %v927, 2
      %vm929 = vcmp.eq.s32.totalorder %v927, 0
      %v930 = vxor.u32 %v924, 2147483648
      %v931 = vsel %vm929, %v923, %v930
      %vm932 = vcmp.eq.s32.totalorder %v927, 2
      %v933 = vxor.u32 %v923, 2147483648
      %v934 = vsel %vm932, %v933, %v924
      %v935 = vsel %vm928, %v931, %v934
      %v936 = vsel %vm925, nan, %v935
      %v937 = vmul.f32 %v936, 0.7
      %v938 = vand.u32 2147483647, %v826
      %vm939 = vcmp.le.f32.partialorder %v938, 0.7853982
      %vm940 = vcmp.lt.s32.totalorder %v826, 0
      %v941 = vand.u32 %v826, 2139095040
      %v942 = vshrl.u32 %v941, 23
      %v943 = vsub.s32 %v942, 127
      %v944 = vand.u32 2147483647, %v826
      %v945 = vand.u32 %v944, 8388607
      %v946 = vor.u32 %v945, 8388608
      %v947 = vsub.s32 0, %v946
      %v948 = vadd.s32 %v943, 1
      %vm949 = vcmp.gt.s32.totalorder %v948, 0
      %v950 = vsel %vm949, %v948, 0
      %v951 = vshrl.u32 %v950, 5
      %v952 = vand.u32 %v950, 31
      %v953 = vsub.s32 32, %v952
      %v954 = vshrl.u32 683565275, %v953
      %v955 = vshll.u32 683565275, %v952
      %v956 = vshrl.u32 2475754826, %v953
      %v957 = vor.u32 %v955, %v956
      %v958 = vshll.u32 2475754826, %v952
      %v959 = vshrl.u32 2131351028, %v953
      %v960 = vor.u32 %v958, %v959
      %v961 = vshll.u32 2131351028, %v952
      %v962 = vshrl.u32 2102212464, %v953
      %v963 = vor.u32 %v961, %v962
      %v964 = vshll.u32 2102212464, %v952
      %v965 = vshrl.u32 920167782, %v953
      %v966 = vor.u32 %v964, %v965
      %v967 = vshll.u32 920167782, %v952
      %v968 = vshrl.u32 1326507024, %v953
      %v969 = vor.u32 %v967, %v968
      %vm970 = vcmp.lt.s32.totalorder %v951, 1
      %vm971 = vcmp.lt.s32.totalorder %v951, 2
      %vm972 = vcmp.lt.s32.totalorder %v951, 3
      %vm973 = vcmp.lt.s32.totalorder %v951, 4
      %v974 = vsel %vm970, %v954, %v957
      %v975 = vsel %vm973, %v963, 2102212464
      %v976 = vsel %vm972, %v960, %v975
      %v977 = vsel %vm971, %v974, %v976
      %v978 = vsel %vm970, %v957, %v960
      %v979 = vsel %vm973, %v966, 920167782
      %v980 = vsel %vm972, %v963, %v979
      %v981 = vsel %vm971, %v978, %v980
      %v982 = vsel %vm970, %v960, %v963
      %v983 = vsel %vm973, %v969, 1326507024
      %v984 = vsel %vm972, %v966, %v983
      %v985 = vsel %vm971, %v982, %v984
      %v986 = vshll.u32 %v946, 8
      %v987 = vmul.u32.u64.compose %v986, %v985
      %v988 = vextract.low.u32 %v987
      %v989 = vextract.high.u32 %v987
      %v990 = vmul.u32.u64.compose %v986, %v981
      %v991 = vextract.low.u32 %v990
      %v992 = vextract.high.u32 %v990
      %v993 = vmul.u32 %v986, %v977
      %v994 = vadd.s32 %v989, %v991
      %vm995 = vc.u32 %v989, %v991
      %v996 = vadd.s32 %v992, 1
      %v997 = vsel %vm995, %v996, %v992
      %v998 = vadd.s32 %v993, %v997
      %v999 = vadd.s32 %v998, 536870912
      %v1000 = vshrl.u32 %v999, 30
      %v1001 = vshll.u32 %v1000, 30
      %v1002 = vsub.s32 %v998, %v1001
      %vm1003 = vcmp.lt.s32.totalorder %v1002, 0
      %v1004 = vsub.s32 0, %v1002
      %v1005 = vsel %vm1003, %v1004, %v1002
      %v1006 = vclz %v1005
      %v1007 = vsub.s32 %v1006, 2
      %vm1008 = vcmp.gt.s32.totalorder 0, %v1007
      %v1009 = vsel %vm1008, 0, %v1007
      %v1010 = vsub.s32 32, %v1009
      %v1011 = vshll.u32 %v1002, %v1009
      %v1012 = vshrl.u32 %v994, %v1010
      %v1013 = vor.u32 %v1011, %v1012
      %v1014 = vsub.s32 4294967266, %v1009
      %v1015 = vadd.s32 %v1014, 127
      %v1016 = vshll.u32 %v1015, 23
      %v1017 = vor.u32 4788187, %v1016
      %v1018 = vand.u32 2147483647, %v1017
      %v1020 = vcvt.s32.f32 %v1013
      %v1021 = vmul.f32 %v1020, %v1018
      %v1022 = vxor.u32 %v1021, 2147483648
      %v1023 = vsel %vm940, %v1022, %v1021
      %v1024 = vsub.s32 4, %v1000
      %v1025 = vsel %vm940, %v1024, %v1000
      %v1026 = vsel %vm939, %v826, %v1023
      %v1027 = vsel %vm939, 0, %v1025
      %v1028 = vcosq.f32.pop %v1026
      %v1029 = vsinq.f32.pop %v1026
      %vm1030 = vweird.f32 %v826
      %v1031 = vadd.s32 %v1027, 3
      %v1032 = vand.u32 %v1031, 3
      %vm1033 = vcmp.lt.s32.totalorder %v1032, 2
      %vm1034 = vcmp.eq.s32.totalorder %v1032, 0
      %v1035 = vxor.u32 %v1029, 2147483648
      %v1036 = vsel %vm1034, %v1028, %v1035
      %vm1037 = vcmp.eq.s32.totalorder %v1032, 2
      %v1038 = vxor.u32 %v1028, 2147483648
      %v1039 = vsel %vm1037, %v1038, %v1029
      %v1040 = vsel %vm1033, %v1036, %v1039
      %v1041 = vsel %vm1030, nan, %v1040
      %v1042 = vmul.f32 %v1041, 0.3
      %v1043 = vadd.f32 %v937, %v1042
      %v1044 = vsel %vm829, %v832, %v1043
      %1045 = vst.msk [vmem:[%s616] sm:$0xff] %vm624, %v1044
      %v1046 = vld [vmem:[%s594] sm:$0xff]
      %v1047 = vld [vmem:[%s604] sm:$0xff]
      %v1049 = vlaneseq
      %v1050 = vshrl.u32 %v1049, 7
      %v1051 = vsub.s32 0, %v1050
      %v1052 = vrot.slane %v795, %v1051
      %v1054 = vmul.f32 %v1047, %v1052
      %v1055 = vadd.f32 %v1046, %v1054
      %v1056 = vadd.f32 %v1055, %v1044
      %v1057 = vld [vmem:[%s15] sm:$0xff]
      %v1058 = vld [vmem:[%s11] sm:$0xff]
      %v1059 = vld [vmem:[%s11 + $0x8] sm:$0xff]
      %v1060 = vld [vmem:[%s11 + $0x10] sm:$0xff]
      %v1061 = vld [vmem:[%s11 + $0x18] sm:$0xff]
      %v1062 = vsel %vm624, %v1056, 0.0
      %1063 = vadd.xlane.f32.xlu0 %v1062
      %v1064 = vpop.xlane.xlu0 %1063
      %v1065 = vrcp.pop 32.0
      %v1066 = vmul.f32 %v1064, %v1065
      %v1067 = vsub.f32 %v1056, %v1066
      %v1068 = vmul.f32 %v1067, %v1067
      %v1069 = vsel %vm624, %v1068, 0.0
      %1070 = vadd.xlane.f32.xlu0 %v1069
      %v1071 = vpop.xlane.xlu0 %1070
      %v1072 = vmul.f32 %v1071, %v1065
      %v1073 = vadd.f32 %v1072, 1e-12
      %v1074 = vrsqrt.pop %v1073
      %v1075 = vmul.f32 %v1067, %v1074
      %v1076 = vlaneseq
      %v1077 = vshrl.u32 %v1076, 7
      %v1078 = vsub.s32 0, %v1077
      %v1079 = vrot.slane %v1057, %v1078
      %v1080 = vmul.f32 %v1079, %v1075
      %v1081 = vlaneseq
      %v1082 = vshrl.u32 %v1081, 7
      %v1083 = vsub.s32 1, %v1082
      %v1084 = vrot.slane %v1057, %v1083
      %v1085 = vadd.f32 %v1080, %v1084
      %v1086 = vld [vmem:[%s9] sm:$0xff]
      %v1087 = vld [vmem:[%s9 + $0x8] sm:$0xff]
      %v1088 = vld [vmem:[%s9 + $0x10] sm:$0xff]
      %v1089 = vld [vmem:[%s9 + $0x18] sm:$0xff]
      %v1090 = vld [vmem:[%s10] sm:$0x1]
      %v1092 = vlaneseq
      %v1093 = vshrl.u32 %v1092, 7
      %v1094 = vsub.s32 0, %v1093
      %v1095 = vrot.slane %v1090, %v1094
      %v1098 = vsel %vm624, %v1085, 0
      %1100 = vmatprep.subr.mxu0 0.0
      %1101 = vmatpush1.msra.mxu0 %v1086
      %1102 = vmatprep.subr.mxu0 0.0
      %1103 = vmatpush1.msra.mxu0 %v1087
      %1104 = vmatprep.subr.mxu0 0.0
      %1105 = vmatpush1.msra.mxu0 %v1088
      %1106 = vmatprep.subr.mxu0 0.0
      %1107 = vmatpush1.msra.mxu0 %v1089
      %1108 = vmatprep.subr.mxu0 0.0
      %1109 = vmatpush1.msra.mxu0 0.0
      %1110 = vmatprep.subr.mxu0 0.0
      %1111 = vmatpush1.msra.mxu0 0.0
      %1112 = vmatprep.subr.mxu0 0.0
      %1113 = vmatpush1.msra.mxu0 0.0
      %1114 = vmatprep.subr.mxu0 0.0
      %1115 = vmatpush1.msra.mxu0 0.0
      %1116 = vmatprep.subr.mxu0 0.0
      %1117 = vmatpush1.msra.mxu0 0.0
      %1118 = vmatprep.subr.mxu0 0.0
      %1119 = vmatpush1.msra.mxu0 0.0
      %1120 = vmatprep.subr.mxu0 0.0
      %1121 = vmatpush1.msra.mxu0 0.0
      %1122 = vmatprep.subr.mxu0 0.0
      %1123 = vmatpush1.msra.mxu0 0.0
      %1124 = vmatprep.subr.mxu0 0.0
      %1125 = vmatpush1.msra.mxu0 0.0
      %1126 = vmatprep.subr.mxu0 0.0
      %1127 = vmatpush1.msra.mxu0 0.0
      %1128 = vmatprep.subr.mxu0 0.0
      %1129 = vmatpush1.msra.mxu0 0.0
      %1130 = vmatprep.subr.mxu0 0.0
      %1131 = vmatpush1.msra.mxu0 0.0
      %1132 = vmatprep.subr.mxu0 0.0
      %1133 = vmatpush1.msra.mxu0 0.0
      %1134 = vmatprep.subr.mxu0 0.0
      %1135 = vmatpush1.msra.mxu0 0.0
      %1136 = vmatprep.subr.mxu0 0.0
      %1137 = vmatpush1.msra.mxu0 0.0
      %1138 = vmatprep.subr.mxu0 0.0
      %1139 = vmatpush1.msra.mxu0 0.0
      %1140 = vmatprep.subr.mxu0 0.0
      %1141 = vmatpush1.msra.mxu0 0.0
      %1142 = vmatprep.subr.mxu0 0.0
      %1143 = vmatpush1.msra.mxu0 0.0
      %1144 = vmatprep.subr.mxu0 0.0
      %1145 = vmatpush1.msra.mxu0 0.0
      %1146 = vmatprep.subr.mxu0 0.0
      %1147 = vmatpush1.msra.mxu0 0.0
      %1148 = vmatprep.subr.mxu0 0.0
      %1149 = vmatpush1.msra.mxu0 0.0
      %1150 = vmatprep.subr.mxu0 0.0
      %1151 = vmatpush1.msra.mxu0 0.0
      %1152 = vmatprep.subr.mxu0 0.0
      %1153 = vmatpush1.msra.mxu0 0.0
      %1154 = vmatprep.subr.mxu0 0.0
      %1155 = vmatpush1.msra.mxu0 0.0
      %1156 = vmatprep.subr.mxu0 0.0
      %1157 = vmatpush1.msra.mxu0 0.0
      %1158 = vmatprep.subr.mxu0 0.0
      %1159 = vmatpush1.msra.mxu0 0.0
      %1160 = vmatprep.subr.mxu0 0.0
      %1161 = vmatpush1.msra.mxu0 0.0
      %1162 = vmatprep.subr.mxu0 0.0
      %1163 = vmatpush1.msra.mxu0 0.0
      %1164 = vmatprep.mubr.f32.mxu0 0.0
      %1165 = vmatmul.mubr.f32.gmra.mrb[0].mxu0 %v1098
      %v1166 = vpop.f32.mrb[0].mxu0
      %v1167 = vadd.f32 %v1095, %v1166
      %v1168 = vpop.f32.mrb[0].mxu0
      %1169 = vdwg.mxu0
      %1171 = vrot.lane.b32.xlu0 %v1167, 96
      %v1172 = vpop.permute.xlu0 %1171
      %vm1173 = vcmask 64512
      %v1174 = vsel %vm1173, %v1167, 0
      %v1176 = vsel %vm1173, %v1172, 0
      %1178 = vmatprep.subr.mxu0 0.0
      %1179 = vmatpush1.xpose.msra.mxu0 %v1176
      %1180 = vmatprep.subr.mxu0 0.0
      %1181 = vmatpush1.xpose.msra.mxu0 0.0
      %1182 = vmatprep.subr.mxu0 0.0
      %1183 = vmatpush1.xpose.msra.mxu0 0.0
      %1184 = vmatprep.subr.mxu0 0.0
      %1185 = vmatpush1.xpose.msra.mxu0 0.0
      %1186 = vmatprep.subr.mxu0 0.0
      %1187 = vmatpush1.xpose.msra.mxu0 0.0
      %1188 = vmatprep.subr.mxu0 0.0
      %1189 = vmatpush1.xpose.msra.mxu0 0.0
      %1190 = vmatprep.subr.mxu0 0.0
      %1191 = vmatpush1.xpose.msra.mxu0 0.0
      %1192 = vmatprep.subr.mxu0 0.0
      %1193 = vmatpush1.xpose.msra.mxu0 0.0
      %1194 = vmatprep.subr.mxu0 0.0
      %1195 = vmatpush1.xpose.msra.mxu0 0.0
      %1196 = vmatprep.subr.mxu0 0.0
      %1197 = vmatpush1.xpose.msra.mxu0 0.0
      %1198 = vmatprep.subr.mxu0 0.0
      %1199 = vmatpush1.xpose.msra.mxu0 0.0
      %1200 = vmatprep.subr.mxu0 0.0
      %1201 = vmatpush1.xpose.msra.mxu0 0.0
      %1202 = vmatprep.subr.mxu0 0.0
      %1203 = vmatpush1.xpose.msra.mxu0 0.0
      %1204 = vmatprep.subr.mxu0 0.0
      %1205 = vmatpush1.xpose.msra.mxu0 0.0
      %1206 = vmatprep.subr.mxu0 0.0
      %1207 = vmatpush1.xpose.msra.mxu0 0.0
      %1208 = vmatprep.subr.mxu0 0.0
      %1209 = vmatpush1.xpose.msra.mxu0 0.0
      %1210 = vmatprep.subr.mxu0 0.0
      %1211 = vmatpush1.xpose.msra.mxu0 0.0
      %1212 = vmatprep.subr.mxu0 0.0
      %1213 = vmatpush1.xpose.msra.mxu0 0.0
      %1214 = vmatprep.subr.mxu0 0.0
      %1215 = vmatpush1.xpose.msra.mxu0 0.0
      %1216 = vmatprep.subr.mxu0 0.0
      %1217 = vmatpush1.xpose.msra.mxu0 0.0
      %1218 = vmatprep.subr.mxu0 0.0
      %1219 = vmatpush1.xpose.msra.mxu0 0.0
      %1220 = vmatprep.subr.mxu0 0.0
      %1221 = vmatpush1.xpose.msra.mxu0 0.0
      %1222 = vmatprep.subr.mxu0 0.0
      %1223 = vmatpush1.xpose.msra.mxu0 0.0
      %1224 = vmatprep.subr.mxu0 0.0
      %1225 = vmatpush1.xpose.msra.mxu0 0.0
      %1226 = vmatprep.subr.mxu0 0.0
      %1227 = vmatpush1.xpose.msra.mxu0 0.0
      %1228 = vmatprep.subr.mxu0 0.0
      %1229 = vmatpush1.xpose.msra.mxu0 0.0
      %1230 = vmatprep.subr.mxu0 0.0
      %1231 = vmatpush1.xpose.msra.mxu0 0.0
      %1232 = vmatprep.subr.mxu0 0.0
      %1233 = vmatpush1.xpose.msra.mxu0 0.0
      %1234 = vmatprep.subr.mxu0 0.0
      %1235 = vmatpush1.xpose.msra.mxu0 0.0
      %1236 = vmatprep.subr.mxu0 0.0
      %1237 = vmatpush1.xpose.msra.mxu0 0.0
      %1238 = vmatprep.subr.mxu0 0.0
      %1239 = vmatpush1.xpose.msra.mxu0 0.0
      %1240 = vmatprep.subr.mxu0 0.0
      %1241 = vmatpush1.xpose.msra.mxu0 0.0
      %1242 = vmatprep.mubr.f32.mxu0 0.0
      %1243 = vmatmul.mubr.f32.gmra.mrb[0].mxu0 %v1174
      %v1244 = vpop.f32.mrb[0].mxu0
      %v1245 = vadd.f32 0.0, %v1244
      %v1246 = vpop.f32.mrb[0].mxu0
      %1247 = vdwg.mxu0
      %v1248 = vmul.f32 %v1245, 0.35355338
      %v1249 = vsel %vm797, 1, 0
      %1250 = vset.pattern.permute.xlu0 2
      %1251 = vperm.xlu0 %1250, %v1249
      %v1252 = vpop.permute.xlu0 %1251
      %vm1253 = vcmp.eq.s32.totalorder %v1252, 1
      %v1254 = vsel %vm1253, -1e+09, %v1248
      %v1255 = vsel %vm1173, %v1254, -inf
      %1256 = vmax.xlane.f32.xlu0 %v1255
      %v1257 = vpop.xlane.xlu0 %1256
      %v1258 = vsub.f32 %v1254, %v1257
      %v1259 = vmul.f32 %v1258, 1.442695
      %v1260 = vpow.pop %v1259
      %v1261 = vsel %vm1173, %v1260, 0.0
      %1262 = vadd.xlane.f32.xlu0 %v1261
      %v1263 = vpop.xlane.xlu0 %1262
      %v1264 = vrcp.pop %v1263
      %v1265 = vmul.f32 %v1260, %v1264
      %1266 = vrot.lane.b32.xlu0 %v1167, 64
      %v1267 = vpop.permute.xlu0 %1266
      %v1270 = vsel %vm1173, %v1265, 0
      %1272 = vmatprep.subr.mxu0 0.0
      %1273 = vmatpush1.msra.mxu0 %v1267
      %1274 = vmatprep.subr.mxu0 0.0
      %1275 = vmatpush1.msra.mxu0 0.0
      %1276 = vmatprep.subr.mxu0 0.0
      %1277 = vmatpush1.msra.mxu0 0.0
      %1278 = vmatprep.subr.mxu0 0.0
      %1279 = vmatpush1.msra.mxu0 0.0
      %1280 = vmatprep.subr.mxu0 0.0
      %1281 = vmatpush1.msra.mxu0 0.0
      %1282 = vmatprep.subr.mxu0 0.0
      %1283 = vmatpush1.msra.mxu0 0.0
      %1284 = vmatprep.subr.mxu0 0.0
      %1285 = vmatpush1.msra.mxu0 0.0
      %1286 = vmatprep.subr.mxu0 0.0
      %1287 = vmatpush1.msra.mxu0 0.0
      %1288 = vmatprep.subr.mxu0 0.0
      %1289 = vmatpush1.msra.mxu0 0.0
      %1290 = vmatprep.subr.mxu0 0.0
      %1291 = vmatpush1.msra.mxu0 0.0
      %1292 = vmatprep.subr.mxu0 0.0
      %1293 = vmatpush1.msra.mxu0 0.0
      %1294 = vmatprep.subr.mxu0 0.0
      %1295 = vmatpush1.msra.mxu0 0.0
      %1296 = vmatprep.subr.mxu0 0.0
      %1297 = vmatpush1.msra.mxu0 0.0
      %1298 = vmatprep.subr.mxu0 0.0
      %1299 = vmatpush1.msra.mxu0 0.0
      %1300 = vmatprep.subr.mxu0 0.0
      %1301 = vmatpush1.msra.mxu0 0.0
      %1302 = vmatprep.subr.mxu0 0.0
      %1303 = vmatpush1.msra.mxu0 0.0
      %1304 = vmatprep.subr.mxu0 0.0
      %1305 = vmatpush1.msra.mxu0 0.0
      %1306 = vmatprep.subr.mxu0 0.0
      %1307 = vmatpush1.msra.mxu0 0.0
      %1308 = vmatprep.subr.mxu0 0.0
      %1309 = vmatpush1.msra.mxu0 0.0
      %1310 = vmatprep.subr.mxu0 0.0
      %1311 = vmatpush1.msra.mxu0 0.0
      %1312 = vmatprep.subr.mxu0 0.0
      %1313 = vmatpush1.msra.mxu0 0.0
      %1314 = vmatprep.subr.mxu0 0.0
      %1315 = vmatpush1.msra.mxu0 0.0
      %1316 = vmatprep.subr.mxu0 0.0
      %1317 = vmatpush1.msra.mxu0 0.0
      %1318 = vmatprep.subr.mxu0 0.0
      %1319 = vmatpush1.msra.mxu0 0.0
      %1320 = vmatprep.subr.mxu0 0.0
      %1321 = vmatpush1.msra.mxu0 0.0
      %1322 = vmatprep.subr.mxu0 0.0
      %1323 = vmatpush1.msra.mxu0 0.0
      %1324 = vmatprep.subr.mxu0 0.0
      %1325 = vmatpush1.msra.mxu0 0.0
      %1326 = vmatprep.subr.mxu0 0.0
      %1327 = vmatpush1.msra.mxu0 0.0
      %1328 = vmatprep.subr.mxu0 0.0
      %1329 = vmatpush1.msra.mxu0 0.0
      %1330 = vmatprep.subr.mxu0 0.0
      %1331 = vmatpush1.msra.mxu0 0.0
      %1332 = vmatprep.subr.mxu0 0.0
      %1333 = vmatpush1.msra.mxu0 0.0
      %1334 = vmatprep.subr.mxu0 0.0
      %1335 = vmatpush1.msra.mxu0 0.0
      %1336 = vmatprep.mubr.f32.mxu0 0.0
      %1337 = vmatmul.mubr.f32.gmra.mrb[0].mxu0 %v1270
      %v1338 = vpop.f32.mrb[0].mxu0
      %v1339 = vadd.f32 0.0, %v1338
      %v1340 = vpop.f32.mrb[0].mxu0
      %1341 = vdwg.mxu0
      %1342 = vrot.lane.b32.xlu0 %v1167, 120
      %v1343 = vpop.permute.xlu0 %1342
      %1344 = vrot.lane.b32.xlu0 %v1167, 88
      %v1345 = vpop.permute.xlu0 %1344
      %v1346 = vsel %vm1173, %v1343, 0
      %v1348 = vsel %vm1173, %v1345, 0
      %1350 = vmatprep.subr.mxu0 0.0
      %1351 = vmatpush1.xpose.msra.mxu0 %v1348
      %1352 = vmatprep.subr.mxu0 0.0
      %1353 = vmatpush1.xpose.msra.mxu0 0.0
      %1354 = vmatprep.subr.mxu0 0.0
      %1355 = vmatpush1.xpose.msra.mxu0 0.0
      %1356 = vmatprep.subr.mxu0 0.0
      %1357 = vmatpush1.xpose.msra.mxu0 0.0
      %1358 = vmatprep.subr.mxu0 0.0
      %1359 = vmatpush1.xpose.msra.mxu0 0.0
      %1360 = vmatprep.subr.mxu0 0.0
      %1361 = vmatpush1.xpose.msra.mxu0 0.0
      %1362 = vmatprep.subr.mxu0 0.0
      %1363 = vmatpush1.xpose.msra.mxu0 0.0
      %1364 = vmatprep.subr.mxu0 0.0
      %1365 = vmatpush1.xpose.msra.mxu0 0.0
      %1366 = vmatprep.subr.mxu0 0.0
      %1367 = vmatpush1.xpose.msra.mxu0 0.0
      %1368 = vmatprep.subr.mxu0 0.0
      %1369 = vmatpush1.xpose.msra.mxu0 0.0
      %1370 = vmatprep.subr.mxu0 0.0
      %1371 = vmatpush1.xpose.msra.mxu0 0.0
      %1372 = vmatprep.subr.mxu0 0.0
      %1373 = vmatpush1.xpose.msra.mxu0 0.0
      %1374 = vmatprep.subr.mxu0 0.0
      %1375 = vmatpush1.xpose.msra.mxu0 0.0
      %1376 = vmatprep.subr.mxu0 0.0
      %1377 = vmatpush1.xpose.msra.mxu0 0.0
      %1378 = vmatprep.subr.mxu0 0.0
      %1379 = vmatpush1.xpose.msra.mxu0 0.0
      %1380 = vmatprep.subr.mxu0 0.0
      %1381 = vmatpush1.xpose.msra.mxu0 0.0
      %1382 = vmatprep.subr.mxu0 0.0
      %1383 = vmatpush1.xpose.msra.mxu0 0.0
      %1384 = vmatprep.subr.mxu0 0.0
      %1385 = vmatpush1.xpose.msra.mxu0 0.0
      %1386 = vmatprep.subr.mxu0 0.0
      %1387 = vmatpush1.xpose.msra.mxu0 0.0
      %1388 = vmatprep.subr.mxu0 0.0
      %1389 = vmatpush1.xpose.msra.mxu0 0.0
      %1390 = vmatprep.subr.mxu0 0.0
      %1391 = vmatpush1.xpose.msra.mxu0 0.0
      %1392 = vmatprep.subr.mxu0 0.0
      %1393 = vmatpush1.xpose.msra.mxu0 0.0
      %1394 = vmatprep.subr.mxu0 0.0
      %1395 = vmatpush1.xpose.msra.mxu0 0.0
      %1396 = vmatprep.subr.mxu0 0.0
      %1397 = vmatpush1.xpose.msra.mxu0 0.0
      %1398 = vmatprep.subr.mxu0 0.0
      %1399 = vmatpush1.xpose.msra.mxu0 0.0
      %1400 = vmatprep.subr.mxu0 0.0
      %1401 = vmatpush1.xpose.msra.mxu0 0.0
      %1402 = vmatprep.subr.mxu0 0.0
      %1403 = vmatpush1.xpose.msra.mxu0 0.0
      %1404 = vmatprep.subr.mxu0 0.0
      %1405 = vmatpush1.xpose.msra.mxu0 0.0
      %1406 = vmatprep.subr.mxu0 0.0
      %1407 = vmatpush1.xpose.msra.mxu0 0.0
      %1408 = vmatprep.subr.mxu0 0.0
      %1409 = vmatpush1.xpose.msra.mxu0 0.0
      %1410 = vmatprep.subr.mxu0 0.0
      %1411 = vmatpush1.xpose.msra.mxu0 0.0
      %1412 = vmatprep.subr.mxu0 0.0
      %1413 = vmatpush1.xpose.msra.mxu0 0.0
      %1414 = vmatprep.mubr.f32.mxu0 0.0
      %1415 = vmatmul.mubr.f32.gmra.mrb[0].mxu0 %v1346
      %v1416 = vpop.f32.mrb[0].mxu0
      %v1417 = vadd.f32 0.0, %v1416
      %v1418 = vpop.f32.mrb[0].mxu0
      %1419 = vdwg.mxu0
      %v1420 = vmul.f32 %v1417, 0.35355338
      %v1421 = vsel %vm1253, -1e+09, %v1420
      %v1422 = vsel %vm1173, %v1421, -inf
      %1423 = vmax.xlane.f32.xlu0 %v1422
      %v1424 = vpop.xlane.xlu0 %1423
      %v1425 = vsub.f32 %v1421, %v1424
      %v1426 = vmul.f32 %v1425, 1.442695
      %v1427 = vpow.pop %v1426
      %v1428 = vsel %vm1173, %v1427, 0.0
      %1429 = vadd.xlane.f32.xlu0 %v1428
      %v1430 = vpop.xlane.xlu0 %1429
      %v1431 = vrcp.pop %v1430
      %v1432 = vmul.f32 %v1427, %v1431
      %1433 = vrot.lane.b32.xlu0 %v1167, 56
      %v1434 = vpop.permute.xlu0 %1433
      %v1437 = vsel %vm1173, %v1432, 0
      %1439 = vmatprep.subr.mxu0 0.0
      %1440 = vmatpush1.msra.mxu0 %v1434
      %1441 = vmatprep.subr.mxu0 0.0
      %1442 = vmatpush1.msra.mxu0 0.0
      %1443 = vmatprep.subr.mxu0 0.0
      %1444 = vmatpush1.msra.mxu0 0.0
      %1445 = vmatprep.subr.mxu0 0.0
      %1446 = vmatpush1.msra.mxu0 0.0
      %1447 = vmatprep.subr.mxu0 0.0
      %1448 = vmatpush1.msra.mxu0 0.0
      %1449 = vmatprep.subr.mxu0 0.0
      %1450 = vmatpush1.msra.mxu0 0.0
      %1451 = vmatprep.subr.mxu0 0.0
      %1452 = vmatpush1.msra.mxu0 0.0
      %1453 = vmatprep.subr.mxu0 0.0
      %1454 = vmatpush1.msra.mxu0 0.0
      %1455 = vmatprep.subr.mxu0 0.0
      %1456 = vmatpush1.msra.mxu0 0.0
      %1457 = vmatprep.subr.mxu0 0.0
      %1458 = vmatpush1.msra.mxu0 0.0
      %1459 = vmatprep.subr.mxu0 0.0
      %1460 = vmatpush1.msra.mxu0 0.0
      %1461 = vmatprep.subr.mxu0 0.0
      %1462 = vmatpush1.msra.mxu0 0.0
      %1463 = vmatprep.subr.mxu0 0.0
      %1464 = vmatpush1.msra.mxu0 0.0
      %1465 = vmatprep.subr.mxu0 0.0
      %1466 = vmatpush1.msra.mxu0 0.0
      %1467 = vmatprep.subr.mxu0 0.0
      %1468 = vmatpush1.msra.mxu0 0.0
      %1469 = vmatprep.subr.mxu0 0.0
      %1470 = vmatpush1.msra.mxu0 0.0
      %1471 = vmatprep.subr.mxu0 0.0
      %1472 = vmatpush1.msra.mxu0 0.0
      %1473 = vmatprep.subr.mxu0 0.0
      %1474 = vmatpush1.msra.mxu0 0.0
      %1475 = vmatprep.subr.mxu0 0.0
      %1476 = vmatpush1.msra.mxu0 0.0
      %1477 = vmatprep.subr.mxu0 0.0
      %1478 = vmatpush1.msra.mxu0 0.0
      %1479 = vmatprep.subr.mxu0 0.0
      %1480 = vmatpush1.msra.mxu0 0.0
      %1481 = vmatprep.subr.mxu0 0.0
      %1482 = vmatpush1.msra.mxu0 0.0
      %1483 = vmatprep.subr.mxu0 0.0
      %1484 = vmatpush1.msra.mxu0 0.0
      %1485 = vmatprep.subr.mxu0 0.0
      %1486 = vmatpush1.msra.mxu0 0.0
      %1487 = vmatprep.subr.mxu0 0.0
      %1488 = vmatpush1.msra.mxu0 0.0
      %1489 = vmatprep.subr.mxu0 0.0
      %1490 = vmatpush1.msra.mxu0 0.0
      %1491 = vmatprep.subr.mxu0 0.0
      %1492 = vmatpush1.msra.mxu0 0.0
      %1493 = vmatprep.subr.mxu0 0.0
      %1494 = vmatpush1.msra.mxu0 0.0
      %1495 = vmatprep.subr.mxu0 0.0
      %1496 = vmatpush1.msra.mxu0 0.0
      %1497 = vmatprep.subr.mxu0 0.0
      %1498 = vmatpush1.msra.mxu0 0.0
      %1499 = vmatprep.subr.mxu0 0.0
      %1500 = vmatpush1.msra.mxu0 0.0
      %1501 = vmatprep.subr.mxu0 0.0
      %1502 = vmatpush1.msra.mxu0 0.0
      %1503 = vmatprep.mubr.f32.mxu0 0.0
      %1504 = vmatmul.mubr.f32.gmra.mrb[0].mxu0 %v1437
      %v1505 = vpop.f32.mrb[0].mxu0
      %v1506 = vadd.f32 0.0, %v1505
      %v1507 = vpop.f32.mrb[0].mxu0
      %1508 = vdwg.mxu0
      %v1510 = vsel %vm1173, %v1506, 0
      %1512 = vmatprep.subr.mxu0 0.0
      %1513 = vmatpush1.msra.mxu0 %v1059
      %1514 = vmatprep.subr.mxu0 0.0
      %1515 = vmatpush1.msra.mxu0 0.0
      %1516 = vmatprep.subr.mxu0 0.0
      %1517 = vmatpush1.msra.mxu0 0.0
      %1518 = vmatprep.subr.mxu0 0.0
      %1519 = vmatpush1.msra.mxu0 0.0
      %1520 = vmatprep.subr.mxu0 0.0
      %1521 = vmatpush1.msra.mxu0 0.0
      %1522 = vmatprep.subr.mxu0 0.0
      %1523 = vmatpush1.msra.mxu0 0.0
      %1524 = vmatprep.subr.mxu0 0.0
      %1525 = vmatpush1.msra.mxu0 0.0
      %1526 = vmatprep.subr.mxu0 0.0
      %1527 = vmatpush1.msra.mxu0 0.0
      %1528 = vmatprep.subr.mxu0 0.0
      %1529 = vmatpush1.msra.mxu0 0.0
      %1530 = vmatprep.subr.mxu0 0.0
      %1531 = vmatpush1.msra.mxu0 0.0
      %1532 = vmatprep.subr.mxu0 0.0
      %1533 = vmatpush1.msra.mxu0 0.0
      %1534 = vmatprep.subr.mxu0 0.0
      %1535 = vmatpush1.msra.mxu0 0.0
      %1536 = vmatprep.subr.mxu0 0.0
      %1537 = vmatpush1.msra.mxu0 0.0
      %1538 = vmatprep.subr.mxu0 0.0
      %1539 = vmatpush1.msra.mxu0 0.0
      %1540 = vmatprep.subr.mxu0 0.0
      %1541 = vmatpush1.msra.mxu0 0.0
      %1542 = vmatprep.subr.mxu0 0.0
      %1543 = vmatpush1.msra.mxu0 0.0
      %1544 = vmatprep.subr.mxu0 0.0
      %1545 = vmatpush1.msra.mxu0 0.0
      %1546 = vmatprep.subr.mxu0 0.0
      %1547 = vmatpush1.msra.mxu0 0.0
      %1548 = vmatprep.subr.mxu0 0.0
      %1549 = vmatpush1.msra.mxu0 0.0
      %1550 = vmatprep.subr.mxu0 0.0
      %1551 = vmatpush1.msra.mxu0 0.0
      %1552 = vmatprep.subr.mxu0 0.0
      %1553 = vmatpush1.msra.mxu0 0.0
      %1554 = vmatprep.subr.mxu0 0.0
      %1555 = vmatpush1.msra.mxu0 0.0
      %1556 = vmatprep.subr.mxu0 0.0
      %1557 = vmatpush1.msra.mxu0 0.0
      %1558 = vmatprep.subr.mxu0 0.0
      %1559 = vmatpush1.msra.mxu0 0.0
      %1560 = vmatprep.subr.mxu0 0.0
      %1561 = vmatpush1.msra.mxu0 0.0
      %1562 = vmatprep.subr.mxu0 0.0
      %1563 = vmatpush1.msra.mxu0 0.0
      %1564 = vmatprep.subr.mxu0 0.0
      %1565 = vmatpush1.msra.mxu0 0.0
      %1566 = vmatprep.subr.mxu0 0.0
      %1567 = vmatpush1.msra.mxu0 0.0
      %1568 = vmatprep.subr.mxu0 0.0
      %1569 = vmatpush1.msra.mxu0 0.0
      %1570 = vmatprep.subr.mxu0 0.0
      %1571 = vmatpush1.msra.mxu0 0.0
      %1572 = vmatprep.subr.mxu0 0.0
      %1573 = vmatpush1.msra.mxu0 0.0
      %1574 = vmatprep.subr.mxu0 0.0
      %1575 = vmatpush1.msra.mxu0 0.0
      %1576 = vmatprep.mubr.f32.mxu0 0.0
      %1577 = vmatmul.mubr.f32.gmra.mrb[0].mxu0 %v1510
      %v1578 = vpop.f32.mrb[0].mxu0
      %v1579 = vadd.f32 0.0, %v1578
      %v1580 = vpop.f32.mrb[0].mxu0
      %1581 = vdwg.mxu0
      %v1583 = vsel %vm1173, %v1339, 0
      %1585 = vmatprep.subr.mxu0 0.0
      %1586 = vmatpush1.msra.mxu0 %v1058
      %1587 = vmatprep.subr.mxu0 0.0
      %1588 = vmatpush1.msra.mxu0 0.0
      %1589 = vmatprep.subr.mxu0 0.0
      %1590 = vmatpush1.msra.mxu0 0.0
      %1591 = vmatprep.subr.mxu0 0.0
      %1592 = vmatpush1.msra.mxu0 0.0
      %1593 = vmatprep.subr.mxu0 0.0
      %1594 = vmatpush1.msra.mxu0 0.0
      %1595 = vmatprep.subr.mxu0 0.0
      %1596 = vmatpush1.msra.mxu0 0.0
      %1597 = vmatprep.subr.mxu0 0.0
      %1598 = vmatpush1.msra.mxu0 0.0
      %1599 = vmatprep.subr.mxu0 0.0
      %1600 = vmatpush1.msra.mxu0 0.0
      %1601 = vmatprep.subr.mxu0 0.0
      %1602 = vmatpush1.msra.mxu0 0.0
      %1603 = vmatprep.subr.mxu0 0.0
      %1604 = vmatpush1.msra.mxu0 0.0
      %1605 = vmatprep.subr.mxu0 0.0
      %1606 = vmatpush1.msra.mxu0 0.0
      %1607 = vmatprep.subr.mxu0 0.0
      %1608 = vmatpush1.msra.mxu0 0.0
      %1609 = vmatprep.subr.mxu0 0.0
      %1610 = vmatpush1.msra.mxu0 0.0
      %1611 = vmatprep.subr.mxu0 0.0
      %1612 = vmatpush1.msra.mxu0 0.0
      %1613 = vmatprep.subr.mxu0 0.0
      %1614 = vmatpush1.msra.mxu0 0.0
      %1615 = vmatprep.subr.mxu0 0.0
      %1616 = vmatpush1.msra.mxu0 0.0
      %1617 = vmatprep.subr.mxu0 0.0
      %1618 = vmatpush1.msra.mxu0 0.0
      %1619 = vmatprep.subr.mxu0 0.0
      %1620 = vmatpush1.msra.mxu0 0.0
      %1621 = vmatprep.subr.mxu0 0.0
      %1622 = vmatpush1.msra.mxu0 0.0
      %1623 = vmatprep.subr.mxu0 0.0
      %1624 = vmatpush1.msra.mxu0 0.0
      %1625 = vmatprep.subr.mxu0 0.0
      %1626 = vmatpush1.msra.mxu0 0.0
      %1627 = vmatprep.subr.mxu0 0.0
      %1628 = vmatpush1.msra.mxu0 0.0
      %1629 = vmatprep.subr.mxu0 0.0
      %1630 = vmatpush1.msra.mxu0 0.0
      %1631 = vmatprep.subr.mxu0 0.0
      %1632 = vmatpush1.msra.mxu0 0.0
      %1633 = vmatprep.subr.mxu0 0.0
      %1634 = vmatpush1.msra.mxu0 0.0
      %1635 = vmatprep.subr.mxu0 0.0
      %1636 = vmatpush1.msra.mxu0 0.0
      %1637 = vmatprep.subr.mxu0 0.0
      %1638 = vmatpush1.msra.mxu0 0.0
      %1639 = vmatprep.subr.mxu0 0.0
      %1640 = vmatpush1.msra.mxu0 0.0
      %1641 = vmatprep.subr.mxu0 0.0
      %1642 = vmatpush1.msra.mxu0 0.0
      %1643 = vmatprep.subr.mxu0 0.0
      %1644 = vmatpush1.msra.mxu0 0.0
      %1645 = vmatprep.subr.mxu0 0.0
      %1646 = vmatpush1.msra.mxu0 0.0
      %1647 = vmatprep.subr.mxu0 0.0
      %1648 = vmatpush1.msra.mxu0 0.0
      %1649 = vmatprep.mubr.f32.mxu0 0.0
      %1650 = vmatmul.mubr.f32.gmra.mrb[0].mxu0 %v1583
      %v1651 = vpop.f32.mrb[0].mxu0
      %v1652 = vadd.f32 %v1579, %v1651
      %v1653 = vpop.f32.mrb[0].mxu0
      %1654 = vdwg.mxu0
      %1655 = vrot.lane.b32.xlu0 %v1167, 112
      %v1656 = vpop.permute.xlu0 %1655
      %1657 = vrot.lane.b32.xlu0 %v1167, 80
      %v1658 = vpop.permute.xlu0 %1657
      %v1659 = vsel %vm1173, %v1656, 0
      %v1661 = vsel %vm1173, %v1658, 0
      %1663 = vmatprep.subr.mxu0 0.0
      %1664 = vmatpush1.xpose.msra.mxu0 %v1661
      %1665 = vmatprep.subr.mxu0 0.0
      %1666 = vmatpush1.xpose.msra.mxu0 0.0
      %1667 = vmatprep.subr.mxu0 0.0
      %1668 = vmatpush1.xpose.msra.mxu0 0.0
      %1669 = vmatprep.subr.mxu0 0.0
      %1670 = vmatpush1.xpose.msra.mxu0 0.0
      %1671 = vmatprep.subr.mxu0 0.0
      %1672 = vmatpush1.xpose.msra.mxu0 0.0
      %1673 = vmatprep.subr.mxu0 0.0
      %1674 = vmatpush1.xpose.msra.mxu0 0.0
      %1675 = vmatprep.subr.mxu0 0.0
      %1676 = vmatpush1.xpose.msra.mxu0 0.0
      %1677 = vmatprep.subr.mxu0 0.0
      %1678 = vmatpush1.xpose.msra.mxu0 0.0
      %1679 = vmatprep.subr.mxu0 0.0
      %1680 = vmatpush1.xpose.msra.mxu0 0.0
      %1681 = vmatprep.subr.mxu0 0.0
      %1682 = vmatpush1.xpose.msra.mxu0 0.0
      %1683 = vmatprep.subr.mxu0 0.0
      %1684 = vmatpush1.xpose.msra.mxu0 0.0
      %1685 = vmatprep.subr.mxu0 0.0
      %1686 = vmatpush1.xpose.msra.mxu0 0.0
      %1687 = vmatprep.subr.mxu0 0.0
      %1688 = vmatpush1.xpose.msra.mxu0 0.0
      %1689 = vmatprep.subr.mxu0 0.0
      %1690 = vmatpush1.xpose.msra.mxu0 0.0
      %1691 = vmatprep.subr.mxu0 0.0
      %1692 = vmatpush1.xpose.msra.mxu0 0.0
      %1693 = vmatprep.subr.mxu0 0.0
      %1694 = vmatpush1.xpose.msra.mxu0 0.0
      %1695 = vmatprep.subr.mxu0 0.0
      %1696 = vmatpush1.xpose.msra.mxu0 0.0
      %1697 = vmatprep.subr.mxu0 0.0
      %1698 = vmatpush1.xpose.msra.mxu0 0.0
      %1699 = vmatprep.subr.mxu0 0.0
      %1700 = vmatpush1.xpose.msra.mxu0 0.0
      %1701 = vmatprep.subr.mxu0 0.0
      %1702 = vmatpush1.xpose.msra.mxu0 0.0
      %1703 = vmatprep.subr.mxu0 0.0
      %1704 = vmatpush1.xpose.msra.mxu0 0.0
      %1705 = vmatprep.subr.mxu0 0.0
      %1706 = vmatpush1.xpose.msra.mxu0 0.0
      %1707 = vmatprep.subr.mxu0 0.0
      %1708 = vmatpush1.xpose.msra.mxu0 0.0
      %1709 = vmatprep.subr.mxu0 0.0
      %1710 = vmatpush1.xpose.msra.mxu0 0.0
      %1711 = vmatprep.subr.mxu0 0.0
      %1712 = vmatpush1.xpose.msra.mxu0 0.0
      %1713 = vmatprep.subr.mxu0 0.0
      %1714 = vmatpush1.xpose.msra.mxu0 0.0
      %1715 = vmatprep.subr.mxu0 0.0
      %1716 = vmatpush1.xpose.msra.mxu0 0.0
      %1717 = vmatprep.subr.mxu0 0.0
      %1718 = vmatpush1.xpose.msra.mxu0 0.0
      %1719 = vmatprep.subr.mxu0 0.0
      %1720 = vmatpush1.xpose.msra.mxu0 0.0
      %1721 = vmatprep.subr.mxu0 0.0
      %1722 = vmatpush1.xpose.msra.mxu0 0.0
      %1723 = vmatprep.subr.mxu0 0.0
      %1724 = vmatpush1.xpose.msra.mxu0 0.0
      %1725 = vmatprep.subr.mxu0 0.0
      %1726 = vmatpush1.xpose.msra.mxu0 0.0
      %1727 = vmatprep.mubr.f32.mxu0 0.0
      %1728 = vmatmul.mubr.f32.gmra.mrb[0].mxu0 %v1659
      %v1729 = vpop.f32.mrb[0].mxu0
      %v1730 = vadd.f32 0.0, %v1729
      %v1731 = vpop.f32.mrb[0].mxu0
      %1732 = vdwg.mxu0
      %v1733 = vmul.f32 %v1730, 0.35355338
      %v1734 = vsel %vm1253, -1e+09, %v1733
      %v1735 = vsel %vm1173, %v1734, -inf
      %1736 = vmax.xlane.f32.xlu0 %v1735
      %v1737 = vpop.xlane.xlu0 %1736
      %v1738 = vsub.f32 %v1734, %v1737
      %v1739 = vmul.f32 %v1738, 1.442695
      %v1740 = vpow.pop %v1739
      %v1741 = vsel %vm1173, %v1740, 0.0
      %1742 = vadd.xlane.f32.xlu0 %v1741
      %v1743 = vpop.xlane.xlu0 %1742
      %v1744 = vrcp.pop %v1743
      %v1745 = vmul.f32 %v1740, %v1744
      %1746 = vrot.lane.b32.xlu0 %v1167, 48
      %v1747 = vpop.permute.xlu0 %1746
      %v1750 = vsel %vm1173, %v1745, 0
      %1752 = vmatprep.subr.mxu0 0.0
      %1753 = vmatpush1.msra.mxu0 %v1747
      %1754 = vmatprep.subr.mxu0 0.0
      %1755 = vmatpush1.msra.mxu0 0.0
      %1756 = vmatprep.subr.mxu0 0.0
      %1757 = vmatpush1.msra.mxu0 0.0
      %1758 = vmatprep.subr.mxu0 0.0
      %1759 = vmatpush1.msra.mxu0 0.0
      %1760 = vmatprep.subr.mxu0 0.0
      %1761 = vmatpush1.msra.mxu0 0.0
      %1762 = vmatprep.subr.mxu0 0.0
      %1763 = vmatpush1.msra.mxu0 0.0
      %1764 = vmatprep.subr.mxu0 0.0
      %1765 = vmatpush1.msra.mxu0 0.0
      %1766 = vmatprep.subr.mxu0 0.0
      %1767 = vmatpush1.msra.mxu0 0.0
      %1768 = vmatprep.subr.mxu0 0.0
      %1769 = vmatpush1.msra.mxu0 0.0
      %1770 = vmatprep.subr.mxu0 0.0
      %1771 = vmatpush1.msra.mxu0 0.0
      %1772 = vmatprep.subr.mxu0 0.0
      %1773 = vmatpush1.msra.mxu0 0.0
      %1774 = vmatprep.subr.mxu0 0.0
      %1775 = vmatpush1.msra.mxu0 0.0
      %1776 = vmatprep.subr.mxu0 0.0
      %1777 = vmatpush1.msra.mxu0 0.0
      %1778 = vmatprep.subr.mxu0 0.0
      %1779 = vmatpush1.msra.mxu0 0.0
      %1780 = vmatprep.subr.mxu0 0.0
      %1781 = vmatpush1.msra.mxu0 0.0
      %1782 = vmatprep.subr.mxu0 0.0
      %1783 = vmatpush1.msra.mxu0 0.0
      %1784 = vmatprep.subr.mxu0 0.0
      %1785 = vmatpush1.msra.mxu0 0.0
      %1786 = vmatprep.subr.mxu0 0.0
      %1787 = vmatpush1.msra.mxu0 0.0
      %1788 = vmatprep.subr.mxu0 0.0
      %1789 = vmatpush1.msra.mxu0 0.0
      %1790 = vmatprep.subr.mxu0 0.0
      %1791 = vmatpush1.msra.mxu0 0.0
      %1792 = vmatprep.subr.mxu0 0.0
      %1793 = vmatpush1.msra.mxu0 0.0
      %1794 = vmatprep.subr.mxu0 0.0
      %1795 = vmatpush1.msra.mxu0 0.0
      %1796 = vmatprep.subr.mxu0 0.0
      %1797 = vmatpush1.msra.mxu0 0.0
      %1798 = vmatprep.subr.mxu0 0.0
      %1799 = vmatpush1.msra.mxu0 0.0
      %1800 = vmatprep.subr.mxu0 0.0
      %1801 = vmatpush1.msra.mxu0 0.0
      %1802 = vmatprep.subr.mxu0 0.0
      %1803 = vmatpush1.msra.mxu0 0.0
      %1804 = vmatprep.subr.mxu0 0.0
      %1805 = vmatpush1.msra.mxu0 0.0
      %1806 = vmatprep.subr.mxu0 0.0
      %1807 = vmatpush1.msra.mxu0 0.0
      %1808 = vmatprep.subr.mxu0 0.0
      %1809 = vmatpush1.msra.mxu0 0.0
      %1810 = vmatprep.subr.mxu0 0.0
      %1811 = vmatpush1.msra.mxu0 0.0
      %1812 = vmatprep.subr.mxu0 0.0
      %1813 = vmatpush1.msra.mxu0 0.0
      %1814 = vmatprep.subr.mxu0 0.0
      %1815 = vmatpush1.msra.mxu0 0.0
      %1816 = vmatprep.mubr.f32.mxu0 0.0
      %1817 = vmatmul.mubr.f32.gmra.mrb[0].mxu0 %v1750
      %v1818 = vpop.f32.mrb[0].mxu0
      %v1819 = vadd.f32 0.0, %v1818
      %v1820 = vpop.f32.mrb[0].mxu0
      %1821 = vdwg.mxu0
      %v1823 = vsel %vm1173, %v1819, 0
      %1825 = vmatprep.subr.mxu0 0.0
      %1826 = vmatpush1.msra.mxu0 %v1060
      %1827 = vmatprep.subr.mxu0 0.0
      %1828 = vmatpush1.msra.mxu0 0.0
      %1829 = vmatprep.subr.mxu0 0.0
      %1830 = vmatpush1.msra.mxu0 0.0
      %1831 = vmatprep.subr.mxu0 0.0
      %1832 = vmatpush1.msra.mxu0 0.0
      %1833 = vmatprep.subr.mxu0 0.0
      %1834 = vmatpush1.msra.mxu0 0.0
      %1835 = vmatprep.subr.mxu0 0.0
      %1836 = vmatpush1.msra.mxu0 0.0
      %1837 = vmatprep.subr.mxu0 0.0
      %1838 = vmatpush1.msra.mxu0 0.0
      %1839 = vmatprep.subr.mxu0 0.0
      %1840 = vmatpush1.msra.mxu0 0.0
      %1841 = vmatprep.subr.mxu0 0.0
      %1842 = vmatpush1.msra.mxu0 0.0
      %1843 = vmatprep.subr.mxu0 0.0
      %1844 = vmatpush1.msra.mxu0 0.0
      %1845 = vmatprep.subr.mxu0 0.0
      %1846 = vmatpush1.msra.mxu0 0.0
      %1847 = vmatprep.subr.mxu0 0.0
      %1848 = vmatpush1.msra.mxu0 0.0
      %1849 = vmatprep.subr.mxu0 0.0
      %1850 = vmatpush1.msra.mxu0 0.0
      %1851 = vmatprep.subr.mxu0 0.0
      %1852 = vmatpush1.msra.mxu0 0.0
      %1853 = vmatprep.subr.mxu0 0.0
      %1854 = vmatpush1.msra.mxu0 0.0
      %1855 = vmatprep.subr.mxu0 0.0
      %1856 = vmatpush1.msra.mxu0 0.0
      %1857 = vmatprep.subr.mxu0 0.0
      %1858 = vmatpush1.msra.mxu0 0.0
      %1859 = vmatprep.subr.mxu0 0.0
      %1860 = vmatpush1.msra.mxu0 0.0
      %1861 = vmatprep.subr.mxu0 0.0
      %1862 = vmatpush1.msra.mxu0 0.0
      %1863 = vmatprep.subr.mxu0 0.0
      %1864 = vmatpush1.msra.mxu0 0.0
      %1865 = vmatprep.subr.mxu0 0.0
      %1866 = vmatpush1.msra.mxu0 0.0
      %1867 = vmatprep.subr.mxu0 0.0
      %1868 = vmatpush1.msra.mxu0 0.0
      %1869 = vmatprep.subr.mxu0 0.0
      %1870 = vmatpush1.msra.mxu0 0.0
      %1871 = vmatprep.subr.mxu0 0.0
      %1872 = vmatpush1.msra.mxu0 0.0
      %1873 = vmatprep.subr.mxu0 0.0
      %1874 = vmatpush1.msra.mxu0 0.0
      %1875 = vmatprep.subr.mxu0 0.0
      %1876 = vmatpush1.msra.mxu0 0.0
      %1877 = vmatprep.subr.mxu0 0.0
      %1878 = vmatpush1.msra.mxu0 0.0
      %1879 = vmatprep.subr.mxu0 0.0
      %1880 = vmatpush1.msra.mxu0 0.0
      %1881 = vmatprep.subr.mxu0 0.0
      %1882 = vmatpush1.msra.mxu0 0.0
      %1883 = vmatprep.subr.mxu0 0.0
      %1884 = vmatpush1.msra.mxu0 0.0
      %1885 = vmatprep.subr.mxu0 0.0
      %1886 = vmatpush1.msra.mxu0 0.0
      %1887 = vmatprep.subr.mxu0 0.0
      %1888 = vmatpush1.msra.mxu0 0.0
      %1889 = vmatprep.mubr.f32.mxu0 0.0
      %1890 = vmatmul.mubr.f32.gmra.mrb[0].mxu0 %v1823
      %v1891 = vpop.f32.mrb[0].mxu0
      %v1892 = vadd.f32 0.0, %v1891
      %v1893 = vpop.f32.mrb[0].mxu0
      %1894 = vdwg.mxu0
      %v1895 = vadd.f32 %v1652, %v1892
      %1896 = vrot.lane.b32.xlu0 %v1167, 104
      %v1897 = vpop.permute.xlu0 %1896
      %1898 = vrot.lane.b32.xlu0 %v1167, 72
      %v1899 = vpop.permute.xlu0 %1898
      %v1900 = vsel %vm1173, %v1897, 0
      %v1902 = vsel %vm1173, %v1899, 0
      %1904 = vmatprep.subr.mxu0 0.0
      %1905 = vmatpush1.xpose.msra.mxu0 %v1902
      %1906 = vmatprep.subr.mxu0 0.0
      %1907 = vmatpush1.xpose.msra.mxu0 0.0
      %1908 = vmatprep.subr.mxu0 0.0
      %1909 = vmatpush1.xpose.msra.mxu0 0.0
      %1910 = vmatprep.subr.mxu0 0.0
      %1911 = vmatpush1.xpose.msra.mxu0 0.0
      %1912 = vmatprep.subr.mxu0 0.0
      %1913 = vmatpush1.xpose.msra.mxu0 0.0
      %1914 = vmatprep.subr.mxu0 0.0
      %1915 = vmatpush1.xpose.msra.mxu0 0.0
      %1916 = vmatprep.subr.mxu0 0.0
      %1917 = vmatpush1.xpose.msra.mxu0 0.0
      %1918 = vmatprep.subr.mxu0 0.0
      %1919 = vmatpush1.xpose.msra.mxu0 0.0
      %1920 = vmatprep.subr.mxu0 0.0
      %1921 = vmatpush1.xpose.msra.mxu0 0.0
      %1922 = vmatprep.subr.mxu0 0.0
      %1923 = vmatpush1.xpose.msra.mxu0 0.0
      %1924 = vmatprep.subr.mxu0 0.0
      %1925 = vmatpush1.xpose.msra.mxu0 0.0
      %1926 = vmatprep.subr.mxu0 0.0
      %1927 = vmatpush1.xpose.msra.mxu0 0.0
      %1928 = vmatprep.subr.mxu0 0.0
      %1929 = vmatpush1.xpose.msra.mxu0 0.0
      %1930 = vmatprep.subr.mxu0 0.0
      %1931 = vmatpush1.xpose.msra.mxu0 0.0
      %1932 = vmatprep.subr.mxu0 0.0
      %1933 = vmatpush1.xpose.msra.mxu0 0.0
      %1934 = vmatprep.subr.mxu0 0.0
      %1935 = vmatpush1.xpose.msra.mxu0 0.0
      %1936 = vmatprep.subr.mxu0 0.0
      %1937 = vmatpush1.xpose.msra.mxu0 0.0
      %1938 = vmatprep.subr.mxu0 0.0
      %1939 = vmatpush1.xpose.msra.mxu0 0.0
      %1940 = vmatprep.subr.mxu0 0.0
      %1941 = vmatpush1.xpose.msra.mxu0 0.0
      %1942 = vmatprep.subr.mxu0 0.0
      %1943 = vmatpush1.xpose.msra.mxu0 0.0
      %1944 = vmatprep.subr.mxu0 0.0
      %1945 = vmatpush1.xpose.msra.mxu0 0.0
      %1946 = vmatprep.subr.mxu0 0.0
      %1947 = vmatpush1.xpose.msra.mxu0 0.0
      %1948 = vmatprep.subr.mxu0 0.0
      %1949 = vmatpush1.xpose.msra.mxu0 0.0
      %1950 = vmatprep.subr.mxu0 0.0
      %1951 = vmatpush1.xpose.msra.mxu0 0.0
      %1952 = vmatprep.subr.mxu0 0.0
      %1953 = vmatpush1.xpose.msra.mxu0 0.0
      %1954 = vmatprep.subr.mxu0 0.0
      %1955 = vmatpush1.xpose.msra.mxu0 0.0
      %1956 = vmatprep.subr.mxu0 0.0
      %1957 = vmatpush1.xpose.msra.mxu0 0.0
      %1958 = vmatprep.subr.mxu0 0.0
      %1959 = vmatpush1.xpose.msra.mxu0 0.0
      %1960 = vmatprep.subr.mxu0 0.0
      %1961 = vmatpush1.xpose.msra.mxu0 0.0
      %1962 = vmatprep.subr.mxu0 0.0
      %1963 = vmatpush1.xpose.msra.mxu0 0.0
      %1964 = vmatprep.subr.mxu0 0.0
      %1965 = vmatpush1.xpose.msra.mxu0 0.0
      %1966 = vmatprep.subr.mxu0 0.0
      %1967 = vmatpush1.xpose.msra.mxu0 0.0
      %1968 = vmatprep.mubr.f32.mxu0 0.0
      %1969 = vmatmul.mubr.f32.gmra.mrb[0].mxu0 %v1900
      %v1970 = vpop.f32.mrb[0].mxu0
      %v1971 = vadd.f32 0.0, %v1970
      %v1972 = vpop.f32.mrb[0].mxu0
      %1973 = vdwg.mxu0
      %v1974 = vmul.f32 %v1971, 0.35355338
      %v1975 = vsel %vm1253, -1e+09, %v1974
      %v1976 = vsel %vm1173, %v1975, -inf
      %1977 = vmax.xlane.f32.xlu0 %v1976
      %v1978 = vpop.xlane.xlu0 %1977
      %v1979 = vsub.f32 %v1975, %v1978
      %v1980 = vmul.f32 %v1979, 1.442695
      %v1981 = vpow.pop %v1980
      %v1982 = vsel %vm1173, %v1981, 0.0
      %1983 = vadd.xlane.f32.xlu0 %v1982
      %v1984 = vpop.xlane.xlu0 %1983
      %v1985 = vrcp.pop %v1984
      %v1986 = vmul.f32 %v1981, %v1985
      %1987 = vrot.lane.b32.xlu0 %v1167, 40
      %v1988 = vpop.permute.xlu0 %1987
      %v1991 = vsel %vm1173, %v1986, 0
      %1993 = vmatprep.subr.mxu0 0.0
      %1994 = vmatpush1.msra.mxu0 %v1988
      %1995 = vmatprep.subr.mxu0 0.0
      %1996 = vmatpush1.msra.mxu0 0.0
      %1997 = vmatprep.subr.mxu0 0.0
      %1998 = vmatpush1.msra.mxu0 0.0
      %1999 = vmatprep.subr.mxu0 0.0
      %2000 = vmatpush1.msra.mxu0 0.0
      %2001 = vmatprep.subr.mxu0 0.0
      %2002 = vmatpush1.msra.mxu0 0.0
      %2003 = vmatprep.subr.mxu0 0.0
      %2004 = vmatpush1.msra.mxu0 0.0
      %2005 = vmatprep.subr.mxu0 0.0
      %2006 = vmatpush1.msra.mxu0 0.0
      %2007 = vmatprep.subr.mxu0 0.0
      %2008 = vmatpush1.msra.mxu0 0.0
      %2009 = vmatprep.subr.mxu0 0.0
      %2010 = vmatpush1.msra.mxu0 0.0
      %2011 = vmatprep.subr.mxu0 0.0
      %2012 = vmatpush1.msra.mxu0 0.0
      %2013 = vmatprep.subr.mxu0 0.0
      %2014 = vmatpush1.msra.mxu0 0.0
      %2015 = vmatprep.subr.mxu0 0.0
      %2016 = vmatpush1.msra.mxu0 0.0
      %2017 = vmatprep.subr.mxu0 0.0
      %2018 = vmatpush1.msra.mxu0 0.0
      %2019 = vmatprep.subr.mxu0 0.0
      %2020 = vmatpush1.msra.mxu0 0.0
      %2021 = vmatprep.subr.mxu0 0.0
      %2022 = vmatpush1.msra.mxu0 0.0
      %2023 = vmatprep.subr.mxu0 0.0
      %2024 = vmatpush1.msra.mxu0 0.0
      %2025 = vmatprep.subr.mxu0 0.0
      %2026 = vmatpush1.msra.mxu0 0.0
      %2027 = vmatprep.subr.mxu0 0.0
      %2028 = vmatpush1.msra.mxu0 0.0
      %2029 = vmatprep.subr.mxu0 0.0
      %2030 = vmatpush1.msra.mxu0 0.0
      %2031 = vmatprep.subr.mxu0 0.0
      %2032 = vmatpush1.msra.mxu0 0.0
      %2033 = vmatprep.subr.mxu0 0.0
      %2034 = vmatpush1.msra.mxu0 0.0
      %2035 = vmatprep.subr.mxu0 0.0
      %2036 = vmatpush1.msra.mxu0 0.0
      %2037 = vmatprep.subr.mxu0 0.0
      %2038 = vmatpush1.msra.mxu0 0.0
      %2039 = vmatprep.subr.mxu0 0.0
      %2040 = vmatpush1.msra.mxu0 0.0
      %2041 = vmatprep.subr.mxu0 0.0
      %2042 = vmatpush1.msra.mxu0 0.0
      %2043 = vmatprep.subr.mxu0 0.0
      %2044 = vmatpush1.msra.mxu0 0.0
      %2045 = vmatprep.subr.mxu0 0.0
      %2046 = vmatpush1.msra.mxu0 0.0
      %2047 = vmatprep.subr.mxu0 0.0
      %2048 = vmatpush1.msra.mxu0 0.0
      %2049 = vmatprep.subr.mxu0 0.0
      %2050 = vmatpush1.msra.mxu0 0.0
      %2051 = vmatprep.subr.mxu0 0.0
      %2052 = vmatpush1.msra.mxu0 0.0
      %2053 = vmatprep.subr.mxu0 0.0
      %2054 = vmatpush1.msra.mxu0 0.0
      %2055 = vmatprep.subr.mxu0 0.0
      %2056 = vmatpush1.msra.mxu0 0.0
      %2057 = vmatprep.mubr.f32.mxu0 0.0
      %2058 = vmatmul.mubr.f32.gmra.mrb[0].mxu0 %v1991
      %v2059 = vpop.f32.mrb[0].mxu0
      %v2060 = vadd.f32 0.0, %v2059
      %v2061 = vpop.f32.mrb[0].mxu0
      %2062 = vdwg.mxu0
      %v2064 = vsel %vm1173, %v2060, 0
      %2066 = vmatprep.subr.mxu0 0.0
      %2067 = vmatpush1.msra.mxu0 %v1061
      %2068 = vmatprep.subr.mxu0 0.0
      %2069 = vmatpush1.msra.mxu0 0.0
      %2070 = vmatprep.subr.mxu0 0.0
      %2071 = vmatpush1.msra.mxu0 0.0
      %2072 = vmatprep.subr.mxu0 0.0
      %2073 = vmatpush1.msra.mxu0 0.0
      %2074 = vmatprep.subr.mxu0 0.0
      %2075 = vmatpush1.msra.mxu0 0.0
      %2076 = vmatprep.subr.mxu0 0.0
      %2077 = vmatpush1.msra.mxu0 0.0
      %2078 = vmatprep.subr.mxu0 0.0
      %2079 = vmatpush1.msra.mxu0 0.0
      %2080 = vmatprep.subr.mxu0 0.0
      %2081 = vmatpush1.msra.mxu0 0.0
      %2082 = vmatprep.subr.mxu0 0.0
      %2083 = vmatpush1.msra.mxu0 0.0
      %2084 = vmatprep.subr.mxu0 0.0
      %2085 = vmatpush1.msra.mxu0 0.0
      %2086 = vmatprep.subr.mxu0 0.0
      %2087 = vmatpush1.msra.mxu0 0.0
      %2088 = vmatprep.subr.mxu0 0.0
      %2089 = vmatpush1.msra.mxu0 0.0
      %2090 = vmatprep.subr.mxu0 0.0
      %2091 = vmatpush1.msra.mxu0 0.0
      %2092 = vmatprep.subr.mxu0 0.0
      %2093 = vmatpush1.msra.mxu0 0.0
      %2094 = vmatprep.subr.mxu0 0.0
      %2095 = vmatpush1.msra.mxu0 0.0
      %2096 = vmatprep.subr.mxu0 0.0
      %2097 = vmatpush1.msra.mxu0 0.0
      %2098 = vmatprep.subr.mxu0 0.0
      %2099 = vmatpush1.msra.mxu0 0.0
      %2100 = vmatprep.subr.mxu0 0.0
      %2101 = vmatpush1.msra.mxu0 0.0
      %2102 = vmatprep.subr.mxu0 0.0
      %2103 = vmatpush1.msra.mxu0 0.0
      %2104 = vmatprep.subr.mxu0 0.0
      %2105 = vmatpush1.msra.mxu0 0.0
      %2106 = vmatprep.subr.mxu0 0.0
      %2107 = vmatpush1.msra.mxu0 0.0
      %2108 = vmatprep.subr.mxu0 0.0
      %2109 = vmatpush1.msra.mxu0 0.0
      %2110 = vmatprep.subr.mxu0 0.0
      %2111 = vmatpush1.msra.mxu0 0.0
      %2112 = vmatprep.subr.mxu0 0.0
      %2113 = vmatpush1.msra.mxu0 0.0
      %2114 = vmatprep.subr.mxu0 0.0
      %2115 = vmatpush1.msra.mxu0 0.0
      %2116 = vmatprep.subr.mxu0 0.0
      %2117 = vmatpush1.msra.mxu0 0.0
      %2118 = vmatprep.subr.mxu0 0.0
      %2119 = vmatpush1.msra.mxu0 0.0
      %2120 = vmatprep.subr.mxu0 0.0
      %2121 = vmatpush1.msra.mxu0 0.0
      %2122 = vmatprep.subr.mxu0 0.0
      %2123 = vmatpush1.msra.mxu0 0.0
      %2124 = vmatprep.subr.mxu0 0.0
      %2125 = vmatpush1.msra.mxu0 0.0
      %2126 = vmatprep.subr.mxu0 0.0
      %2127 = vmatpush1.msra.mxu0 0.0
      %2128 = vmatprep.subr.mxu0 0.0
      %2129 = vmatpush1.msra.mxu0 0.0
      %2130 = vmatprep.mubr.f32.mxu0 0.0
      %2131 = vmatmul.mubr.f32.gmra.mrb[0].mxu0 %v2064
      %v2132 = vpop.f32.mrb[0].mxu0
      %v2133 = vadd.f32 0.0, %v2132
      %v2134 = vpop.f32.mrb[0].mxu0
      %2135 = vdwg.mxu0
      %v2136 = vadd.f32 %v1895, %v2133
      %v2137 = vadd.f32 %v1056, %v2136
      %v2138 = vlaneseq
      %v2139 = vshrl.u32 %v2138, 7
      %v2140 = vsub.s32 2, %v2139
      %v2141 = vrot.slane %v1057, %v2140
      %v2142 = vadd.f32 %v2137, %v2141
      %v2143 = vsel %vm624, %v2142, 0.0
      %2144 = vadd.xlane.f32.xlu0 %v2143
      %v2145 = vpop.xlane.xlu0 %2144
      %v2146 = vmul.f32 %v2145, %v1065
      %v2147 = vsub.f32 %v2142, %v2146
      %v2148 = vmul.f32 %v2147, %v2147
      %v2149 = vsel %vm624, %v2148, 0.0
      %2150 = vadd.xlane.f32.xlu0 %v2149
      %v2151 = vpop.xlane.xlu0 %2150
      %v2152 = vmul.f32 %v2151, %v1065
      %v2153 = vadd.f32 %v2152, 1e-12
      %v2154 = vrsqrt.pop %v2153
      %v2155 = vmul.f32 %v2147, %v2154
      %v2156 = vlaneseq
      %v2157 = vshrl.u32 %v2156, 7
      %v2158 = vsub.s32 3, %v2157
      %v2159 = vrot.slane %v1057, %v2158
      %v2160 = vmul.f32 %v2159, %v2155
      %v2161 = vlaneseq
      %v2162 = vshrl.u32 %v2161, 7
      %v2163 = vsub.s32 4, %v2162
      %v2164 = vrot.slane %v1057, %v2163
      %v2165 = vadd.f32 %v2160, %v2164
      %v2166 = vld [vmem:[%s12] sm:$0xff]
      %v2167 = vld [vmem:[%s12 + $0x8] sm:$0xff]
      %v2168 = vld [vmem:[%s12 + $0x10] sm:$0xff]
      %v2169 = vld [vmem:[%s12 + $0x18] sm:$0xff]
      %v2170 = vld [vmem:[%s13] sm:$0x1]
      %v2172 = vlaneseq
      %v2173 = vshrl.u32 %v2172, 7
      %v2174 = vsub.s32 0, %v2173
      %v2175 = vrot.slane %v2170, %v2174
      %v2178 = vsel %vm624, %v2165, 0
      %2180 = vmatprep.subr.mxu0 0.0
      %2181 = vmatpush1.msra.mxu0 %v2166
      %2182 = vmatprep.subr.mxu0 0.0
      %2183 = vmatpush1.msra.mxu0 %v2167
      %2184 = vmatprep.subr.mxu0 0.0
      %2185 = vmatpush1.msra.mxu0 %v2168
      %2186 = vmatprep.subr.mxu0 0.0
      %2187 = vmatpush1.msra.mxu0 %v2169
      %2188 = vmatprep.subr.mxu0 0.0
      %2189 = vmatpush1.msra.mxu0 0.0
      %2190 = vmatprep.subr.mxu0 0.0
      %2191 = vmatpush1.msra.mxu0 0.0
      %2192 = vmatprep.subr.mxu0 0.0
      %2193 = vmatpush1.msra.mxu0 0.0
      %2194 = vmatprep.subr.mxu0 0.0
      %2195 = vmatpush1.msra.mxu0 0.0
      %2196 = vmatprep.subr.mxu0 0.0
      %2197 = vmatpush1.msra.mxu0 0.0
      %2198 = vmatprep.subr.mxu0 0.0
      %2199 = vmatpush1.msra.mxu0 0.0
      %2200 = vmatprep.subr.mxu0 0.0
      %2201 = vmatpush1.msra.mxu0 0.0
      %2202 = vmatprep.subr.mxu0 0.0
      %2203 = vmatpush1.msra.mxu0 0.0
      %2204 = vmatprep.subr.mxu0 0.0
      %2205 = vmatpush1.msra.mxu0 0.0
      %2206 = vmatprep.subr.mxu0 0.0
      %2207 = vmatpush1.msra.mxu0 0.0
      %2208 = vmatprep.subr.mxu0 0.0
      %2209 = vmatpush1.msra.mxu0 0.0
      %2210 = vmatprep.subr.mxu0 0.0
      %2211 = vmatpush1.msra.mxu0 0.0
      %2212 = vmatprep.subr.mxu0 0.0
      %2213 = vmatpush1.msra.mxu0 0.0
      %2214 = vmatprep.subr.mxu0 0.0
      %2215 = vmatpush1.msra.mxu0 0.0
      %2216 = vmatprep.subr.mxu0 0.0
      %2217 = vmatpush1.msra.mxu0 0.0
      %2218 = vmatprep.subr.mxu0 0.0
      %2219 = vmatpush1.msra.mxu0 0.0
      %2220 = vmatprep.subr.mxu0 0.0
      %2221 = vmatpush1.msra.mxu0 0.0
      %2222 = vmatprep.subr.mxu0 0.0
      %2223 = vmatpush1.msra.mxu0 0.0
      %2224 = vmatprep.subr.mxu0 0.0
      %2225 = vmatpush1.msra.mxu0 0.0
      %2226 = vmatprep.subr.mxu0 0.0
      %2227 = vmatpush1.msra.mxu0 0.0
      %2228 = vmatprep.subr.mxu0 0.0
      %2229 = vmatpush1.msra.mxu0 0.0
      %2230 = vmatprep.subr.mxu0 0.0
      %2231 = vmatpush1.msra.mxu0 0.0
      %2232 = vmatprep.subr.mxu0 0.0
      %2233 = vmatpush1.msra.mxu0 0.0
      %2234 = vmatprep.subr.mxu0 0.0
      %2235 = vmatpush1.msra.mxu0 0.0
      %2236 = vmatprep.subr.mxu0 0.0
      %2237 = vmatpush1.msra.mxu0 0.0
      %2238 = vmatprep.subr.mxu0 0.0
      %2239 = vmatpush1.msra.mxu0 0.0
      %2240 = vmatprep.subr.mxu0 0.0
      %2241 = vmatpush1.msra.mxu0 0.0
      %2242 = vmatprep.subr.mxu0 0.0
      %2243 = vmatpush1.msra.mxu0 0.0
      %2244 = vmatprep.mubr.f32.mxu0 0.0
      %2245 = vmatmul.mubr.f32.gmra.mrb[0].mxu0 %v2178
      %v2246 = vpop.f32.mrb[0].mxu0
      %v2247 = vadd.f32 %v2175, %v2246
      %v2248 = vpop.f32.mrb[0].mxu0
      %2249 = vdwg.mxu0
      %v2250 = vmul.f32 %v2247, 0.5
      %v2251 = vmul.f32 %v2247, 0.044715
      %v2252 = vmul.f32 %v2251, %v2247
      %v2253 = vmul.f32 %v2252, %v2247
      %v2254 = vadd.f32 %v2247, %v2253
      %v2255 = vmul.f32 %v2254, 0.7978846
      %v2256 = vtanh.pop %v2255
      %v2257 = vadd.f32 %v2256, 1.0
      %v2258 = vmul.f32 %v2250, %v2257
      %v2259 = vld [vmem:[%s14] sm:$0xff]
      %v2260 = vld [vmem:[%s14 + $0x8] sm:$0xff]
      %v2261 = vld [vmem:[%s14 + $0x10] sm:$0xff]
      %v2262 = vld [vmem:[%s14 + $0x18] sm:$0xff]
      %v2263 = vld [vmem:[%s14 + $0x20] sm:$0xff]
      %v2264 = vld [vmem:[%s14 + $0x28] sm:$0xff]
      %v2265 = vld [vmem:[%s14 + $0x30] sm:$0xff]
      %v2266 = vld [vmem:[%s14 + $0x38] sm:$0xff]
      %v2267 = vld [vmem:[%s14 + $0x40] sm:$0xff]
      %v2268 = vld [vmem:[%s14 + $0x48] sm:$0xff]
      %v2269 = vld [vmem:[%s14 + $0x50] sm:$0xff]
      %v2270 = vld [vmem:[%s14 + $0x58] sm:$0xff]
      %v2271 = vld [vmem:[%s14 + $0x60] sm:$0xff]
      %v2272 = vld [vmem:[%s14 + $0x68] sm:$0xff]
      %v2273 = vld [vmem:[%s14 + $0x70] sm:$0xff]
      %v2274 = vld [vmem:[%s14 + $0x78] sm:$0xff]
      %v2275 = vlaneseq
      %v2276 = vshrl.u32 %v2275, 7
      %v2277 = vsub.s32 5, %v2276
      %v2278 = vrot.slane %v1057, %v2277
      %2279 = vmatprep.subr.mxu0 0.0
      %2280 = vmatpush1.msra.mxu0 %v2259
      %2281 = vmatprep.subr.mxu0 0.0
      %2282 = vmatpush1.msra.mxu0 %v2260
      %2283 = vmatprep.subr.mxu0 0.0
      %2284 = vmatpush1.msra.mxu0 %v2261
      %2285 = vmatprep.subr.mxu0 0.0
      %2286 = vmatpush1.msra.mxu0 %v2262
      %2287 = vmatprep.subr.mxu0 0.0
      %2288 = vmatpush1.msra.mxu0 %v2263
      %2289 = vmatprep.subr.mxu0 0.0
      %2290 = vmatpush1.msra.mxu0 %v2264
      %2291 = vmatprep.subr.mxu0 0.0
      %2292 = vmatpush1.msra.mxu0 %v2265
      %2293 = vmatprep.subr.mxu0 0.0
      %2294 = vmatpush1.msra.mxu0 %v2266
      %2295 = vmatprep.subr.mxu0 0.0
      %2296 = vmatpush1.msra.mxu0 %v2267
      %2297 = vmatprep.subr.mxu0 0.0
      %2298 = vmatpush1.msra.mxu0 %v2268
      %2299 = vmatprep.subr.mxu0 0.0
      %2300 = vmatpush1.msra.mxu0 %v2269
      %2301 = vmatprep.subr.mxu0 0.0
      %2302 = vmatpush1.msra.mxu0 %v2270
      %2303 = vmatprep.subr.mxu0 0.0
      %2304 = vmatpush1.msra.mxu0 %v2271
      %2305 = vmatprep.subr.mxu0 0.0
      %2306 = vmatpush1.msra.mxu0 %v2272
      %2307 = vmatprep.subr.mxu0 0.0
      %2308 = vmatpush1.msra.mxu0 %v2273
      %2309 = vmatprep.subr.mxu0 0.0
      %2310 = vmatpush1.msra.mxu0 %v2274
      %2311 = vmatprep.subr.mxu0 0.0
      %2312 = vmatpush1.msra.mxu0 0.0
      %2313 = vmatprep.subr.mxu0 0.0
      %2314 = vmatpush1.msra.mxu0 0.0
      %2315 = vmatprep.subr.mxu0 0.0
      %2316 = vmatpush1.msra.mxu0 0.0
      %2317 = vmatprep.subr.mxu0 0.0
      %2318 = vmatpush1.msra.mxu0 0.0
      %2319 = vmatprep.subr.mxu0 0.0
      %2320 = vmatpush1.msra.mxu0 0.0
      %2321 = vmatprep.subr.mxu0 0.0
      %2322 = vmatpush1.msra.mxu0 0.0
      %2323 = vmatprep.subr.mxu0 0.0
      %2324 = vmatpush1.msra.mxu0 0.0
      %2325 = vmatprep.subr.mxu0 0.0
      %2326 = vmatpush1.msra.mxu0 0.0
      %2327 = vmatprep.subr.mxu0 0.0
      %2328 = vmatpush1.msra.mxu0 0.0
      %2329 = vmatprep.subr.mxu0 0.0
      %2330 = vmatpush1.msra.mxu0 0.0
      %2331 = vmatprep.subr.mxu0 0.0
      %2332 = vmatpush1.msra.mxu0 0.0
      %2333 = vmatprep.subr.mxu0 0.0
      %2334 = vmatpush1.msra.mxu0 0.0
      %2335 = vmatprep.subr.mxu0 0.0
      %2336 = vmatpush1.msra.mxu0 0.0
      %2337 = vmatprep.subr.mxu0 0.0
      %2338 = vmatpush1.msra.mxu0 0.0
      %2339 = vmatprep.subr.mxu0 0.0
      %2340 = vmatpush1.msra.mxu0 0.0
      %2341 = vmatprep.subr.mxu0 0.0
      %2342 = vmatpush1.msra.mxu0 0.0
      %2343 = vmatprep.mubr.f32.mxu0 0.0
      %2344 = vmatmul.mubr.f32.gmra.mrb[0].mxu0 %v2258
      %v2345 = vpop.f32.mrb[0].mxu0
      %v2346 = vadd.f32 %v2278, %v2345
      %v2347 = vpop.f32.mrb[0].mxu0
      %2348 = vdwg.mxu0
      %v2349 = vadd.f32 %v2142, %v2346
      %s2350 = scalar_lea.vmem %s15, 8
      %v2351 = vld [vmem:[%s2350] sm:$0xff]
      %s2352 = scalar_lea.vmem %s11, 32
      %v2353 = vld [vmem:[%s2352] sm:$0xff]
      %v2354 = vld [vmem:[%s2352 + $0x8] sm:$0xff]
      %v2355 = vld [vmem:[%s2352 + $0x10] sm:$0xff]
      %v2356 = vld [vmem:[%s2352 + $0x18] sm:$0xff]
      %v2357 = vsel %vm624, %v2349, 0.0
      %2358 = vadd.xlane.f32.xlu0 %v2357
      %v2359 = vpop.xlane.xlu0 %2358
      %v2360 = vmul.f32 %v2359, %v1065
      %v2361 = vsub.f32 %v2349, %v2360
      %v2362 = vmul.f32 %v2361, %v2361
      %v2363 = vsel %vm624, %v2362, 0.0
      %2364 = vadd.xlane.f32.xlu0 %v2363
      %v2365 = vpop.xlane.xlu0 %2364
      %v2366 = vmul.f32 %v2365, %v1065
      %v2367 = vadd.f32 %v2366, 1e-12
      %v2368 = vrsqrt.pop %v2367
      %v2369 = vmul.f32 %v2361, %v2368
      %v2370 = vlaneseq
      %v2371 = vshrl.u32 %v2370, 7
      %v2372 = vsub.s32 0, %v2371
      %v2373 = vrot.slane %v2351, %v2372
      %v2374 = vmul.f32 %v2373, %v2369
      %v2375 = vlaneseq
      %v2376 = vshrl.u32 %v2375, 7
      %v2377 = vsub.s32 1, %v2376
      %v2378 = vrot.slane %v2351, %v2377
      %v2379 = vadd.f32 %v2374, %v2378
      %s2380 = scalar_lea.vmem %s9, 32
      %v2381 = vld [vmem:[%s2380] sm:$0xff]
      %v2382 = vld [vmem:[%s2380 + $0x8] sm:$0xff]
      %v2383 = vld [vmem:[%s2380 + $0x10] sm:$0xff]
      %v2384 = vld [vmem:[%s2380 + $0x18] sm:$0xff]
      %s2385 = scalar_lea.vmem %s10, 1
      %v2386 = vld [vmem:[%s2385] sm:$0x1]
      %v2388 = vlaneseq
      %v2389 = vshrl.u32 %v2388, 7
      %v2390 = vsub.s32 0, %v2389
      %v2391 = vrot.slane %v2386, %v2390
      %v2394 = vsel %vm624, %v2379, 0
      %2396 = vmatprep.subr.mxu0 0.0
      %2397 = vmatpush1.msra.mxu0 %v2381
      %2398 = vmatprep.subr.mxu0 0.0
      %2399 = vmatpush1.msra.mxu0 %v2382
      %2400 = vmatprep.subr.mxu0 0.0
      %2401 = vmatpush1.msra.mxu0 %v2383
      %2402 = vmatprep.subr.mxu0 0.0
      %2403 = vmatpush1.msra.mxu0 %v2384
      %2404 = vmatprep.subr.mxu0 0.0
      %2405 = vmatpush1.msra.mxu0 0.0
      %2406 = vmatprep.subr.mxu0 0.0
      %2407 = vmatpush1.msra.mxu0 0.0
      %2408 = vmatprep.subr.mxu0 0.0
      %2409 = vmatpush1.msra.mxu0 0.0
      %2410 = vmatprep.subr.mxu0 0.0
      %2411 = vmatpush1.msra.mxu0 0.0
      %2412 = vmatprep.subr.mxu0 0.0
      %2413 = vmatpush1.msra.mxu0 0.0
      %2414 = vmatprep.subr.mxu0 0.0
      %2415 = vmatpush1.msra.mxu0 0.0
      %2416 = vmatprep.subr.mxu0 0.0
      %2417 = vmatpush1.msra.mxu0 0.0
      %2418 = vmatprep.subr.mxu0 0.0
      %2419 = vmatpush1.msra.mxu0 0.0
      %2420 = vmatprep.subr.mxu0 0.0
      %2421 = vmatpush1.msra.mxu0 0.0
      %2422 = vmatprep.subr.mxu0 0.0
      %2423 = vmatpush1.msra.mxu0 0.0
      %2424 = vmatprep.subr.mxu0 0.0
      %2425 = vmatpush1.msra.mxu0 0.0
      %2426 = vmatprep.subr.mxu0 0.0
      %2427 = vmatpush1.msra.mxu0 0.0
      %2428 = vmatprep.subr.mxu0 0.0
      %2429 = vmatpush1.msra.mxu0 0.0
      %2430 = vmatprep.subr.mxu0 0.0
      %2431 = vmatpush1.msra.mxu0 0.0
      %2432 = vmatprep.subr.mxu0 0.0
      %2433 = vmatpush1.msra.mxu0 0.0
      %2434 = vmatprep.subr.mxu0 0.0
      %2435 = vmatpush1.msra.mxu0 0.0
      %2436 = vmatprep.subr.mxu0 0.0
      %2437 = vmatpush1.msra.mxu0 0.0
      %2438 = vmatprep.subr.mxu0 0.0
      %2439 = vmatpush1.msra.mxu0 0.0
      %2440 = vmatprep.subr.mxu0 0.0
      %2441 = vmatpush1.msra.mxu0 0.0
      %2442 = vmatprep.subr.mxu0 0.0
      %2443 = vmatpush1.msra.mxu0 0.0
      %2444 = vmatprep.subr.mxu0 0.0
      %2445 = vmatpush1.msra.mxu0 0.0
      %2446 = vmatprep.subr.mxu0 0.0
      %2447 = vmatpush1.msra.mxu0 0.0
      %2448 = vmatprep.subr.mxu0 0.0
      %2449 = vmatpush1.msra.mxu0 0.0
      %2450 = vmatprep.subr.mxu0 0.0
      %2451 = vmatpush1.msra.mxu0 0.0
      %2452 = vmatprep.subr.mxu0 0.0
      %2453 = vmatpush1.msra.mxu0 0.0
      %2454 = vmatprep.subr.mxu0 0.0
      %2455 = vmatpush1.msra.mxu0 0.0
      %2456 = vmatprep.subr.mxu0 0.0
      %2457 = vmatpush1.msra.mxu0 0.0
      %2458 = vmatprep.subr.mxu0 0.0
      %2459 = vmatpush1.msra.mxu0 0.0
      %2460 = vmatprep.mubr.f32.mxu0 0.0
      %2461 = vmatmul.mubr.f32.gmra.mrb[0].mxu0 %v2394
      %v2462 = vpop.f32.mrb[0].mxu0
      %v2463 = vadd.f32 %v2391, %v2462
      %v2464 = vpop.f32.mrb[0].mxu0
      %2465 = vdwg.mxu0
      %2467 = vrot.lane.b32.xlu0 %v2463, 96
      %v2468 = vpop.permute.xlu0 %2467
      %v2469 = vsel %vm1173, %v2463, 0
      %v2471 = vsel %vm1173, %v2468, 0
      %2473 = vmatprep.subr.mxu0 0.0
      %2474 = vmatpush1.xpose.msra.mxu0 %v2471
      %2475 = vmatprep.subr.mxu0 0.0
      %2476 = vmatpush1.xpose.msra.mxu0 0.0
      %2477 = vmatprep.subr.mxu0 0.0
      %2478 = vmatpush1.xpose.msra.mxu0 0.0
      %2479 = vmatprep.subr.mxu0 0.0
      %2480 = vmatpush1.xpose.msra.mxu0 0.0
      %2481 = vmatprep.subr.mxu0 0.0
      %2482 = vmatpush1.xpose.msra.mxu0 0.0
      %2483 = vmatprep.subr.mxu0 0.0
      %2484 = vmatpush1.xpose.msra.mxu0 0.0
      %2485 = vmatprep.subr.mxu0 0.0
      %2486 = vmatpush1.xpose.msra.mxu0 0.0
      %2487 = vmatprep.subr.mxu0 0.0
      %2488 = vmatpush1.xpose.msra.mxu0 0.0
      %2489 = vmatprep.subr.mxu0 0.0
      %2490 = vmatpush1.xpose.msra.mxu0 0.0
      %2491 = vmatprep.subr.mxu0 0.0
      %2492 = vmatpush1.xpose.msra.mxu0 0.0
      %2493 = vmatprep.subr.mxu0 0.0
      %2494 = vmatpush1.xpose.msra.mxu0 0.0
      %2495 = vmatprep.subr.mxu0 0.0
      %2496 = vmatpush1.xpose.msra.mxu0 0.0
      %2497 = vmatprep.subr.mxu0 0.0
      %2498 = vmatpush1.xpose.msra.mxu0 0.0
      %2499 = vmatprep.subr.mxu0 0.0
      %2500 = vmatpush1.xpose.msra.mxu0 0.0
      %2501 = vmatprep.subr.mxu0 0.0
      %2502 = vmatpush1.xpose.msra.mxu0 0.0
      %2503 = vmatprep.subr.mxu0 0.0
      %2504 = vmatpush1.xpose.msra.mxu0 0.0
      %2505 = vmatprep.subr.mxu0 0.0
      %2506 = vmatpush1.xpose.msra.mxu0 0.0
      %2507 = vmatprep.subr.mxu0 0.0
      %2508 = vmatpush1.xpose.msra.mxu0 0.0
      %2509 = vmatprep.subr.mxu0 0.0
      %2510 = vmatpush1.xpose.msra.mxu0 0.0
      %2511 = vmatprep.subr.mxu0 0.0
      %2512 = vmatpush1.xpose.msra.mxu0 0.0
      %2513 = vmatprep.subr.mxu0 0.0
      %2514 = vmatpush1.xpose.msra.mxu0 0.0
      %2515 = vmatprep.subr.mxu0 0.0
      %2516 = vmatpush1.xpose.msra.mxu0 0.0
      %2517 = vmatprep.subr.mxu0 0.0
      %2518 = vmatpush1.xpose.msra.mxu0 0.0
      %2519 = vmatprep.subr.mxu0 0.0
      %2520 = vmatpush1.xpose.msra.mxu0 0.0
      %2521 = vmatprep.subr.mxu0 0.0
      %2522 = vmatpush1.xpose.msra.mxu0 0.0
      %2523 = vmatprep.subr.mxu0 0.0
      %2524 = vmatpush1.xpose.msra.mxu0 0.0
      %2525 = vmatprep.subr.mxu0 0.0
      %2526 = vmatpush1.xpose.msra.mxu0 0.0
      %2527 = vmatprep.subr.mxu0 0.0
      %2528 = vmatpush1.xpose.msra.mxu0 0.0
      %2529 = vmatprep.subr.mxu0 0.0
      %2530 = vmatpush1.xpose.msra.mxu0 0.0
      %2531 = vmatprep.subr.mxu0 0.0
      %2532 = vmatpush1.xpose.msra.mxu0 0.0
      %2533 = vmatprep.subr.mxu0 0.0
      %2534 = vmatpush1.xpose.msra.mxu0 0.0
      %2535 = vmatprep.subr.mxu0 0.0
      %2536 = vmatpush1.xpose.msra.mxu0 0.0
      %2537 = vmatprep.mubr.f32.mxu0 0.0
      %2538 = vmatmul.mubr.f32.gmra.mrb[0].mxu0 %v2469
      %v2539 = vpop.f32.mrb[0].mxu0
      %v2540 = vadd.f32 0.0, %v2539
      %v2541 = vpop.f32.mrb[0].mxu0
      %2542 = vdwg.mxu0
      %v2543 = vmul.f32 %v2540, 0.35355338
      %v2544 = vsel %vm1253, -1e+09, %v2543
      %v2545 = vsel %vm1173, %v2544, -inf
      %2546 = vmax.xlane.f32.xlu0 %v2545
      %v2547 = vpop.xlane.xlu0 %2546
      %v2548 = vsub.f32 %v2544, %v2547
      %v2549 = vmul.f32 %v2548, 1.442695
      %v2550 = vpow.pop %v2549
      %v2551 = vsel %vm1173, %v2550, 0.0
      %2552 = vadd.xlane.f32.xlu0 %v2551
      %v2553 = vpop.xlane.xlu0 %2552
      %v2554 = vrcp.pop %v2553
      %v2555 = vmul.f32 %v2550, %v2554
      %2556 = vrot.lane.b32.xlu0 %v2463, 64
      %v2557 = vpop.permute.xlu0 %2556
      %v2560 = vsel %vm1173, %v2555, 0
      %2562 = vmatprep.subr.mxu0 0.0
      %2563 = vmatpush1.msra.mxu0 %v2557
      %2564 = vmatprep.subr.mxu0 0.0
      %2565 = vmatpush1.msra.mxu0 0.0
      %2566 = vmatprep.subr.mxu0 0.0
      %2567 = vmatpush1.msra.mxu0 0.0
      %2568 = vmatprep.subr.mxu0 0.0
      %2569 = vmatpush1.msra.mxu0 0.0
      %2570 = vmatprep.subr.mxu0 0.0
      %2571 = vmatpush1.msra.mxu0 0.0
      %2572 = vmatprep.subr.mxu0 0.0
      %2573 = vmatpush1.msra.mxu0 0.0
      %2574 = vmatprep.subr.mxu0 0.0
      %2575 = vmatpush1.msra.mxu0 0.0
      %2576 = vmatprep.subr.mxu0 0.0
      %2577 = vmatpush1.msra.mxu0 0.0
      %2578 = vmatprep.subr.mxu0 0.0
      %2579 = vmatpush1.msra.mxu0 0.0
      %2580 = vmatprep.subr.mxu0 0.0
      %2581 = vmatpush1.msra.mxu0 0.0
      %2582 = vmatprep.subr.mxu0 0.0
      %2583 = vmatpush1.msra.mxu0 0.0
      %2584 = vmatprep.subr.mxu0 0.0
      %2585 = vmatpush1.msra.mxu0 0.0
      %2586 = vmatprep.subr.mxu0 0.0
      %2587 = vmatpush1.msra.mxu0 0.0
      %2588 = vmatprep.subr.mxu0 0.0
      %2589 = vmatpush1.msra.mxu0 0.0
      %2590 = vmatprep.subr.mxu0 0.0
      %2591 = vmatpush1.msra.mxu0 0.0
      %2592 = vmatprep.subr.mxu0 0.0
      %2593 = vmatpush1.msra.mxu0 0.0
      %2594 = vmatprep.subr.mxu0 0.0
      %2595 = vmatpush1.msra.mxu0 0.0
      %2596 = vmatprep.subr.mxu0 0.0
      %2597 = vmatpush1.msra.mxu0 0.0
      %2598 = vmatprep.subr.mxu0 0.0
      %2599 = vmatpush1.msra.mxu0 0.0
      %2600 = vmatprep.subr.mxu0 0.0
      %2601 = vmatpush1.msra.mxu0 0.0
      %2602 = vmatprep.subr.mxu0 0.0
      %2603 = vmatpush1.msra.mxu0 0.0
      %2604 = vmatprep.subr.mxu0 0.0
      %2605 = vmatpush1.msra.mxu0 0.0
      %2606 = vmatprep.subr.mxu0 0.0
      %2607 = vmatpush1.msra.mxu0 0.0
      %2608 = vmatprep.subr.mxu0 0.0
      %2609 = vmatpush1.msra.mxu0 0.0
      %2610 = vmatprep.subr.mxu0 0.0
      %2611 = vmatpush1.msra.mxu0 0.0
      %2612 = vmatprep.subr.mxu0 0.0
      %2613 = vmatpush1.msra.mxu0 0.0
      %2614 = vmatprep.subr.mxu0 0.0
      %2615 = vmatpush1.msra.mxu0 0.0
      %2616 = vmatprep.subr.mxu0 0.0
      %2617 = vmatpush1.msra.mxu0 0.0
      %2618 = vmatprep.subr.mxu0 0.0
      %2619 = vmatpush1.msra.mxu0 0.0
      %2620 = vmatprep.subr.mxu0 0.0
      %2621 = vmatpush1.msra.mxu0 0.0
      %2622 = vmatprep.subr.mxu0 0.0
      %2623 = vmatpush1.msra.mxu0 0.0
      %2624 = vmatprep.subr.mxu0 0.0
      %2625 = vmatpush1.msra.mxu0 0.0
      %2626 = vmatprep.mubr.f32.mxu0 0.0
      %2627 = vmatmul.mubr.f32.gmra.mrb[0].mxu0 %v2560
      %v2628 = vpop.f32.mrb[0].mxu0
      %v2629 = vadd.f32 0.0, %v2628
      %v2630 = vpop.f32.mrb[0].mxu0
      %2631 = vdwg.mxu0
      %2632 = vrot.lane.b32.xlu0 %v2463, 120
      %v2633 = vpop.permute.xlu0 %2632
      %2634 = vrot.lane.b32.xlu0 %v2463, 88
      %v2635 = vpop.permute.xlu0 %2634
      %v2636 = vsel %vm1173, %v2633, 0
      %v2638 = vsel %vm1173, %v2635, 0
      %2640 = vmatprep.subr.mxu0 0.0
      %2641 = vmatpush1.xpose.msra.mxu0 %v2638
      %2642 = vmatprep.subr.mxu0 0.0
      %2643 = vmatpush1.xpose.msra.mxu0 0.0
      %2644 = vmatprep.subr.mxu0 0.0
      %2645 = vmatpush1.xpose.msra.mxu0 0.0
      %2646 = vmatprep.subr.mxu0 0.0
      %2647 = vmatpush1.xpose.msra.mxu0 0.0
      %2648 = vmatprep.subr.mxu0 0.0
      %2649 = vmatpush1.xpose.msra.mxu0 0.0
      %2650 = vmatprep.subr.mxu0 0.0
      %2651 = vmatpush1.xpose.msra.mxu0 0.0
      %2652 = vmatprep.subr.mxu0 0.0
      %2653 = vmatpush1.xpose.msra.mxu0 0.0
      %2654 = vmatprep.subr.mxu0 0.0
      %2655 = vmatpush1.xpose.msra.mxu0 0.0
      %2656 = vmatprep.subr.mxu0 0.0
      %2657 = vmatpush1.xpose.msra.mxu0 0.0
      %2658 = vmatprep.subr.mxu0 0.0
      %2659 = vmatpush1.xpose.msra.mxu0 0.0
      %2660 = vmatprep.subr.mxu0 0.0
      %2661 = vmatpush1.xpose.msra.mxu0 0.0
      %2662 = vmatprep.subr.mxu0 0.0
      %2663 = vmatpush1.xpose.msra.mxu0 0.0
      %2664 = vmatprep.subr.mxu0 0.0
      %2665 = vmatpush1.xpose.msra.mxu0 0.0
      %2666 = vmatprep.subr.mxu0 0.0
      %2667 = vmatpush1.xpose.msra.mxu0 0.0
      %2668 = vmatprep.subr.mxu0 0.0
      %2669 = vmatpush1.xpose.msra.mxu0 0.0
      %2670 = vmatprep.subr.mxu0 0.0
      %2671 = vmatpush1.xpose.msra.mxu0 0.0
      %2672 = vmatprep.subr.mxu0 0.0
      %2673 = vmatpush1.xpose.msra.mxu0 0.0
      %2674 = vmatprep.subr.mxu0 0.0
      %2675 = vmatpush1.xpose.msra.mxu0 0.0
      %2676 = vmatprep.subr.mxu0 0.0
      %2677 = vmatpush1.xpose.msra.mxu0 0.0
      %2678 = vmatprep.subr.mxu0 0.0
      %2679 = vmatpush1.xpose.msra.mxu0 0.0
      %2680 = vmatprep.subr.mxu0 0.0
      %2681 = vmatpush1.xpose.msra.mxu0 0.0
      %2682 = vmatprep.subr.mxu0 0.0
      %2683 = vmatpush1.xpose.msra.mxu0 0.0
      %2684 = vmatprep.subr.mxu0 0.0
      %2685 = vmatpush1.xpose.msra.mxu0 0.0
      %2686 = vmatprep.subr.mxu0 0.0
      %2687 = vmatpush1.xpose.msra.mxu0 0.0
      %2688 = vmatprep.subr.mxu0 0.0
      %2689 = vmatpush1.xpose.msra.mxu0 0.0
      %2690 = vmatprep.subr.mxu0 0.0
      %2691 = vmatpush1.xpose.msra.mxu0 0.0
      %2692 = vmatprep.subr.mxu0 0.0
      %2693 = vmatpush1.xpose.msra.mxu0 0.0
      %2694 = vmatprep.subr.mxu0 0.0
      %2695 = vmatpush1.xpose.msra.mxu0 0.0
      %2696 = vmatprep.subr.mxu0 0.0
      %2697 = vmatpush1.xpose.msra.mxu0 0.0
      %2698 = vmatprep.subr.mxu0 0.0
      %2699 = vmatpush1.xpose.msra.mxu0 0.0
      %2700 = vmatprep.subr.mxu0 0.0
      %2701 = vmatpush1.xpose.msra.mxu0 0.0
      %2702 = vmatprep.subr.mxu0 0.0
      %2703 = vmatpush1.xpose.msra.mxu0 0.0
      %2704 = vmatprep.mubr.f32.mxu0 0.0
      %2705 = vmatmul.mubr.f32.gmra.mrb[0].mxu0 %v2636
      %v2706 = vpop.f32.mrb[0].mxu0
      %v2707 = vadd.f32 0.0, %v2706
      %v2708 = vpop.f32.mrb[0].mxu0
      %2709 = vdwg.mxu0
      %v2710 = vmul.f32 %v2707, 0.35355338
      %v2711 = vsel %vm1253, -1e+09, %v2710
      %v2712 = vsel %vm1173, %v2711, -inf
      %2713 = vmax.xlane.f32.xlu0 %v2712
      %v2714 = vpop.xlane.xlu0 %2713
      %v2715 = vsub.f32 %v2711, %v2714
      %v2716 = vmul.f32 %v2715, 1.442695
      %v2717 = vpow.pop %v2716
      %v2718 = vsel %vm1173, %v2717, 0.0
      %2719 = vadd.xlane.f32.xlu0 %v2718
      %v2720 = vpop.xlane.xlu0 %2719
      %v2721 = vrcp.pop %v2720
      %v2722 = vmul.f32 %v2717, %v2721
      %2723 = vrot.lane.b32.xlu0 %v2463, 56
      %v2724 = vpop.permute.xlu0 %2723
      %v2727 = vsel %vm1173, %v2722, 0
      %2729 = vmatprep.subr.mxu0 0.0
      %2730 = vmatpush1.msra.mxu0 %v2724
      %2731 = vmatprep.subr.mxu0 0.0
      %2732 = vmatpush1.msra.mxu0 0.0
      %2733 = vmatprep.subr.mxu0 0.0
      %2734 = vmatpush1.msra.mxu0 0.0
      %2735 = vmatprep.subr.mxu0 0.0
      %2736 = vmatpush1.msra.mxu0 0.0
      %2737 = vmatprep.subr.mxu0 0.0
      %2738 = vmatpush1.msra.mxu0 0.0
      %2739 = vmatprep.subr.mxu0 0.0
      %2740 = vmatpush1.msra.mxu0 0.0
      %2741 = vmatprep.subr.mxu0 0.0
      %2742 = vmatpush1.msra.mxu0 0.0
      %2743 = vmatprep.subr.mxu0 0.0
      %2744 = vmatpush1.msra.mxu0 0.0
      %2745 = vmatprep.subr.mxu0 0.0
      %2746 = vmatpush1.msra.mxu0 0.0
      %2747 = vmatprep.subr.mxu0 0.0
      %2748 = vmatpush1.msra.mxu0 0.0
      %2749 = vmatprep.subr.mxu0 0.0
      %2750 = vmatpush1.msra.mxu0 0.0
      %2751 = vmatprep.subr.mxu0 0.0
      %2752 = vmatpush1.msra.mxu0 0.0
      %2753 = vmatprep.subr.mxu0 0.0
      %2754 = vmatpush1.msra.mxu0 0.0
      %2755 = vmatprep.subr.mxu0 0.0
      %2756 = vmatpush1.msra.mxu0 0.0
      %2757 = vmatprep.subr.mxu0 0.0
      %2758 = vmatpush1.msra.mxu0 0.0
      %2759 = vmatprep.subr.mxu0 0.0
      %2760 = vmatpush1.msra.mxu0 0.0
      %2761 = vmatprep.subr.mxu0 0.0
      %2762 = vmatpush1.msra.mxu0 0.0
      %2763 = vmatprep.subr.mxu0 0.0
      %2764 = vmatpush1.msra.mxu0 0.0
      %2765 = vmatprep.subr.mxu0 0.0
      %2766 = vmatpush1.msra.mxu0 0.0
      %2767 = vmatprep.subr.mxu0 0.0
      %2768 = vmatpush1.msra.mxu0 0.0
      %2769 = vmatprep.subr.mxu0 0.0
      %2770 = vmatpush1.msra.mxu0 0.0
      %2771 = vmatprep.subr.mxu0 0.0
      %2772 = vmatpush1.msra.mxu0 0.0
      %2773 = vmatprep.subr.mxu0 0.0
      %2774 = vmatpush1.msra.mxu0 0.0
      %2775 = vmatprep.subr.mxu0 0.0
      %2776 = vmatpush1.msra.mxu0 0.0
      %2777 = vmatprep.subr.mxu0 0.0
      %2778 = vmatpush1.msra.mxu0 0.0
      %2779 = vmatprep.subr.mxu0 0.0
      %2780 = vmatpush1.msra.mxu0 0.0
      %2781 = vmatprep.subr.mxu0 0.0
      %2782 = vmatpush1.msra.mxu0 0.0
      %2783 = vmatprep.subr.mxu0 0.0
      %2784 = vmatpush1.msra.mxu0 0.0
      %2785 = vmatprep.subr.mxu0 0.0
      %2786 = vmatpush1.msra.mxu0 0.0
      %2787 = vmatprep.subr.mxu0 0.0
      %2788 = vmatpush1.msra.mxu0 0.0
      %2789 = vmatprep.subr.mxu0 0.0
      %2790 = vmatpush1.msra.mxu0 0.0
      %2791 = vmatprep.subr.mxu0 0.0
      %2792 = vmatpush1.msra.mxu0 0.0
      %2793 = vmatprep.mubr.f32.mxu0 0.0
      %2794 = vmatmul.mubr.f32.gmra.mrb[0].mxu0 %v2727
      %v2795 = vpop.f32.mrb[0].mxu0
      %v2796 = vadd.f32 0.0, %v2795
      %v2797 = vpop.f32.mrb[0].mxu0
      %2798 = vdwg.mxu0
      %v2800 = vsel %vm1173, %v2796, 0
      %2802 = vmatprep.subr.mxu0 0.0
      %2803 = vmatpush1.msra.mxu0 %v2354
      %2804 = vmatprep.subr.mxu0 0.0
      %2805 = vmatpush1.msra.mxu0 0.0
      %2806 = vmatprep.subr.mxu0 0.0
      %2807 = vmatpush1.msra.mxu0 0.0
      %2808 = vmatprep.subr.mxu0 0.0
      %2809 = vmatpush1.msra.mxu0 0.0
      %2810 = vmatprep.subr.mxu0 0.0
      %2811 = vmatpush1.msra.mxu0 0.0
      %2812 = vmatprep.subr.mxu0 0.0
      %2813 = vmatpush1.msra.mxu0 0.0
      %2814 = vmatprep.subr.mxu0 0.0
      %2815 = vmatpush1.msra.mxu0 0.0
      %2816 = vmatprep.subr.mxu0 0.0
      %2817 = vmatpush1.msra.mxu0 0.0
      %2818 = vmatprep.subr.mxu0 0.0
      %2819 = vmatpush1.msra.mxu0 0.0
      %2820 = vmatprep.subr.mxu0 0.0
      %2821 = vmatpush1.msra.mxu0 0.0
      %2822 = vmatprep.subr.mxu0 0.0
      %2823 = vmatpush1.msra.mxu0 0.0
      %2824 = vmatprep.subr.mxu0 0.0
      %2825 = vmatpush1.msra.mxu0 0.0
      %2826 = vmatprep.subr.mxu0 0.0
      %2827 = vmatpush1.msra.mxu0 0.0
      %2828 = vmatprep.subr.mxu0 0.0
      %2829 = vmatpush1.msra.mxu0 0.0
      %2830 = vmatprep.subr.mxu0 0.0
      %2831 = vmatpush1.msra.mxu0 0.0
      %2832 = vmatprep.subr.mxu0 0.0
      %2833 = vmatpush1.msra.mxu0 0.0
      %2834 = vmatprep.subr.mxu0 0.0
      %2835 = vmatpush1.msra.mxu0 0.0
      %2836 = vmatprep.subr.mxu0 0.0
      %2837 = vmatpush1.msra.mxu0 0.0
      %2838 = vmatprep.subr.mxu0 0.0
      %2839 = vmatpush1.msra.mxu0 0.0
      %2840 = vmatprep.subr.mxu0 0.0
      %2841 = vmatpush1.msra.mxu0 0.0
      %2842 = vmatprep.subr.mxu0 0.0
      %2843 = vmatpush1.msra.mxu0 0.0
      %2844 = vmatprep.subr.mxu0 0.0
      %2845 = vmatpush1.msra.mxu0 0.0
      %2846 = vmatprep.subr.mxu0 0.0
      %2847 = vmatpush1.msra.mxu0 0.0
      %2848 = vmatprep.subr.mxu0 0.0
      %2849 = vmatpush1.msra.mxu0 0.0
      %2850 = vmatprep.subr.mxu0 0.0
      %2851 = vmatpush1.msra.mxu0 0.0
      %2852 = vmatprep.subr.mxu0 0.0
      %2853 = vmatpush1.msra.mxu0 0.0
      %2854 = vmatprep.subr.mxu0 0.0
      %2855 = vmatpush1.msra.mxu0 0.0
      %2856 = vmatprep.subr.mxu0 0.0
      %2857 = vmatpush1.msra.mxu0 0.0
      %2858 = vmatprep.subr.mxu0 0.0
      %2859 = vmatpush1.msra.mxu0 0.0
      %2860 = vmatprep.subr.mxu0 0.0
      %2861 = vmatpush1.msra.mxu0 0.0
      %2862 = vmatprep.subr.mxu0 0.0
      %2863 = vmatpush1.msra.mxu0 0.0
      %2864 = vmatprep.subr.mxu0 0.0
      %2865 = vmatpush1.msra.mxu0 0.0
      %2866 = vmatprep.mubr.f32.mxu0 0.0
      %2867 = vmatmul.mubr.f32.gmra.mrb[0].mxu0 %v2800
      %v2868 = vpop.f32.mrb[0].mxu0
      %v2869 = vadd.f32 0.0, %v2868
      %v2870 = vpop.f32.mrb[0].mxu0
      %2871 = vdwg.mxu0
      %v2873 = vsel %vm1173, %v2629, 0
      %2875 = vmatprep.subr.mxu0 0.0
      %2876 = vmatpush1.msra.mxu0 %v2353
      %2877 = vmatprep.subr.mxu0 0.0
      %2878 = vmatpush1.msra.mxu0 0.0
      %2879 = vmatprep.subr.mxu0 0.0
      %2880 = vmatpush1.msra.mxu0 0.0
      %2881 = vmatprep.subr.mxu0 0.0
      %2882 = vmatpush1.msra.mxu0 0.0
      %2883 = vmatprep.subr.mxu0 0.0
      %2884 = vmatpush1.msra.mxu0 0.0
      %2885 = vmatprep.subr.mxu0 0.0
      %2886 = vmatpush1.msra.mxu0 0.0
      %2887 = vmatprep.subr.mxu0 0.0
      %2888 = vmatpush1.msra.mxu0 0.0
      %2889 = vmatprep.subr.mxu0 0.0
      %2890 = vmatpush1.msra.mxu0 0.0
      %2891 = vmatprep.subr.mxu0 0.0
      %2892 = vmatpush1.msra.mxu0 0.0
      %2893 = vmatprep.subr.mxu0 0.0
      %2894 = vmatpush1.msra.mxu0 0.0
      %2895 = vmatprep.subr.mxu0 0.0
      %2896 = vmatpush1.msra.mxu0 0.0
      %2897 = vmatprep.subr.mxu0 0.0
      %2898 = vmatpush1.msra.mxu0 0.0
      %2899 = vmatprep.subr.mxu0 0.0
      %2900 = vmatpush1.msra.mxu0 0.0
      %2901 = vmatprep.subr.mxu0 0.0
      %2902 = vmatpush1.msra.mxu0 0.0
      %2903 = vmatprep.subr.mxu0 0.0
      %2904 = vmatpush1.msra.mxu0 0.0
      %2905 = vmatprep.subr.mxu0 0.0
      %2906 = vmatpush1.msra.mxu0 0.0
      %2907 = vmatprep.subr.mxu0 0.0
      %2908 = vmatpush1.msra.mxu0 0.0
      %2909 = vmatprep.subr.mxu0 0.0
      %2910 = vmatpush1.msra.mxu0 0.0
      %2911 = vmatprep.subr.mxu0 0.0
      %2912 = vmatpush1.msra.mxu0 0.0
      %2913 = vmatprep.subr.mxu0 0.0
      %2914 = vmatpush1.msra.mxu0 0.0
      %2915 = vmatprep.subr.mxu0 0.0
      %2916 = vmatpush1.msra.mxu0 0.0
      %2917 = vmatprep.subr.mxu0 0.0
      %2918 = vmatpush1.msra.mxu0 0.0
      %2919 = vmatprep.subr.mxu0 0.0
      %2920 = vmatpush1.msra.mxu0 0.0
      %2921 = vmatprep.subr.mxu0 0.0
      %2922 = vmatpush1.msra.mxu0 0.0
      %2923 = vmatprep.subr.mxu0 0.0
      %2924 = vmatpush1.msra.mxu0 0.0
      %2925 = vmatprep.subr.mxu0 0.0
      %2926 = vmatpush1.msra.mxu0 0.0
      %2927 = vmatprep.subr.mxu0 0.0
      %2928 = vmatpush1.msra.mxu0 0.0
      %2929 = vmatprep.subr.mxu0 0.0
      %2930 = vmatpush1.msra.mxu0 0.0
      %2931 = vmatprep.subr.mxu0 0.0
      %2932 = vmatpush1.msra.mxu0 0.0
      %2933 = vmatprep.subr.mxu0 0.0
      %2934 = vmatpush1.msra.mxu0 0.0
      %2935 = vmatprep.subr.mxu0 0.0
      %2936 = vmatpush1.msra.mxu0 0.0
      %2937 = vmatprep.subr.mxu0 0.0
      %2938 = vmatpush1.msra.mxu0 0.0
      %2939 = vmatprep.mubr.f32.mxu0 0.0
      %2940 = vmatmul.mubr.f32.gmra.mrb[0].mxu0 %v2873
      %v2941 = vpop.f32.mrb[0].mxu0
      %v2942 = vadd.f32 %v2869, %v2941
      %v2943 = vpop.f32.mrb[0].mxu0
      %2944 = vdwg.mxu0
      %2945 = vrot.lane.b32.xlu0 %v2463, 112
      %v2946 = vpop.permute.xlu0 %2945
      %2947 = vrot.lane.b32.xlu0 %v2463, 80
      %v2948 = vpop.permute.xlu0 %2947
      %v2949 = vsel %vm1173, %v2946, 0
      %v2951 = vsel %vm1173, %v2948, 0
      %2953 = vmatprep.subr.mxu0 0.0
      %2954 = vmatpush1.xpose.msra.mxu0 %v2951
      %2955 = vmatprep.subr.mxu0 0.0
      %2956 = vmatpush1.xpose.msra.mxu0 0.0
      %2957 = vmatprep.subr.mxu0 0.0
      %2958 = vmatpush1.xpose.msra.mxu0 0.0
      %2959 = vmatprep.subr.mxu0 0.0
      %2960 = vmatpush1.xpose.msra.mxu0 0.0
      %2961 = vmatprep.subr.mxu0 0.0
      %2962 = vmatpush1.xpose.msra.mxu0 0.0
      %2963 = vmatprep.subr.mxu0 0.0
      %2964 = vmatpush1.xpose.msra.mxu0 0.0
      %2965 = vmatprep.subr.mxu0 0.0
      %2966 = vmatpush1.xpose.msra.mxu0 0.0
      %2967 = vmatprep.subr.mxu0 0.0
      %2968 = vmatpush1.xpose.msra.mxu0 0.0
      %2969 = vmatprep.subr.mxu0 0.0
      %2970 = vmatpush1.xpose.msra.mxu0 0.0
      %2971 = vmatprep.subr.mxu0 0.0
      %2972 = vmatpush1.xpose.msra.mxu0 0.0
      %2973 = vmatprep.subr.mxu0 0.0
      %2974 = vmatpush1.xpose.msra.mxu0 0.0
      %2975 = vmatprep.subr.mxu0 0.0
      %2976 = vmatpush1.xpose.msra.mxu0 0.0
      %2977 = vmatprep.subr.mxu0 0.0
      %2978 = vmatpush1.xpose.msra.mxu0 0.0
      %2979 = vmatprep.subr.mxu0 0.0
      %2980 = vmatpush1.xpose.msra.mxu0 0.0
      %2981 = vmatprep.subr.mxu0 0.0
      %2982 = vmatpush1.xpose.msra.mxu0 0.0
      %2983 = vmatprep.subr.mxu0 0.0
      %2984 = vmatpush1.xpose.msra.mxu0 0.0
      %2985 = vmatprep.subr.mxu0 0.0
      %2986 = vmatpush1.xpose.msra.mxu0 0.0
      %2987 = vmatprep.subr.mxu0 0.0
      %2988 = vmatpush1.xpose.msra.mxu0 0.0
      %2989 = vmatprep.subr.mxu0 0.0
      %2990 = vmatpush1.xpose.msra.mxu0 0.0
      %2991 = vmatprep.subr.mxu0 0.0
      %2992 = vmatpush1.xpose.msra.mxu0 0.0
      %2993 = vmatprep.subr.mxu0 0.0
      %2994 = vmatpush1.xpose.msra.mxu0 0.0
      %2995 = vmatprep.subr.mxu0 0.0
      %2996 = vmatpush1.xpose.msra.mxu0 0.0
      %2997 = vmatprep.subr.mxu0 0.0
      %2998 = vmatpush1.xpose.msra.mxu0 0.0
      %2999 = vmatprep.subr.mxu0 0.0
      %3000 = vmatpush1.xpose.msra.mxu0 0.0
      %3001 = vmatprep.subr.mxu0 0.0
      %3002 = vmatpush1.xpose.msra.mxu0 0.0
      %3003 = vmatprep.subr.mxu0 0.0
      %3004 = vmatpush1.xpose.msra.mxu0 0.0
      %3005 = vmatprep.subr.mxu0 0.0
      %3006 = vmatpush1.xpose.msra.mxu0 0.0
      %3007 = vmatprep.subr.mxu0 0.0
      %3008 = vmatpush1.xpose.msra.mxu0 0.0
      %3009 = vmatprep.subr.mxu0 0.0
      %3010 = vmatpush1.xpose.msra.mxu0 0.0
      %3011 = vmatprep.subr.mxu0 0.0
      %3012 = vmatpush1.xpose.msra.mxu0 0.0
      %3013 = vmatprep.subr.mxu0 0.0
      %3014 = vmatpush1.xpose.msra.mxu0 0.0
      %3015 = vmatprep.subr.mxu0 0.0
      %3016 = vmatpush1.xpose.msra.mxu0 0.0
      %3017 = vmatprep.mubr.f32.mxu0 0.0
      %3018 = vmatmul.mubr.f32.gmra.mrb[0].mxu0 %v2949
      %v3019 = vpop.f32.mrb[0].mxu0
      %v3020 = vadd.f32 0.0, %v3019
      %v3021 = vpop.f32.mrb[0].mxu0
      %3022 = vdwg.mxu0
      %v3023 = vmul.f32 %v3020, 0.35355338
      %v3024 = vsel %vm1253, -1e+09, %v3023
      %v3025 = vsel %vm1173, %v3024, -inf
      %3026 = vmax.xlane.f32.xlu0 %v3025
      %v3027 = vpop.xlane.xlu0 %3026
      %v3028 = vsub.f32 %v3024, %v3027
      %v3029 = vmul.f32 %v3028, 1.442695
      %v3030 = vpow.pop %v3029
      %v3031 = vsel %vm1173, %v3030, 0.0
      %3032 = vadd.xlane.f32.xlu0 %v3031
      %v3033 = vpop.xlane.xlu0 %3032
      %v3034 = vrcp.pop %v3033
      %v3035 = vmul.f32 %v3030, %v3034
      %3036 = vrot.lane.b32.xlu0 %v2463, 48
      %v3037 = vpop.permute.xlu0 %3036
      %v3040 = vsel %vm1173, %v3035, 0
      %3042 = vmatprep.subr.mxu0 0.0
      %3043 = vmatpush1.msra.mxu0 %v3037
      %3044 = vmatprep.subr.mxu0 0.0
      %3045 = vmatpush1.msra.mxu0 0.0
      %3046 = vmatprep.subr.mxu0 0.0
      %3047 = vmatpush1.msra.mxu0 0.0
      %3048 = vmatprep.subr.mxu0 0.0
      %3049 = vmatpush1.msra.mxu0 0.0
      %3050 = vmatprep.subr.mxu0 0.0
      %3051 = vmatpush1.msra.mxu0 0.0
      %3052 = vmatprep.subr.mxu0 0.0
      %3053 = vmatpush1.msra.mxu0 0.0
      %3054 = vmatprep.subr.mxu0 0.0
      %3055 = vmatpush1.msra.mxu0 0.0
      %3056 = vmatprep.subr.mxu0 0.0
      %3057 = vmatpush1.msra.mxu0 0.0
      %3058 = vmatprep.subr.mxu0 0.0
      %3059 = vmatpush1.msra.mxu0 0.0
      %3060 = vmatprep.subr.mxu0 0.0
      %3061 = vmatpush1.msra.mxu0 0.0
      %3062 = vmatprep.subr.mxu0 0.0
      %3063 = vmatpush1.msra.mxu0 0.0
      %3064 = vmatprep.subr.mxu0 0.0
      %3065 = vmatpush1.msra.mxu0 0.0
      %3066 = vmatprep.subr.mxu0 0.0
      %3067 = vmatpush1.msra.mxu0 0.0
      %3068 = vmatprep.subr.mxu0 0.0
      %3069 = vmatpush1.msra.mxu0 0.0
      %3070 = vmatprep.subr.mxu0 0.0
      %3071 = vmatpush1.msra.mxu0 0.0
      %3072 = vmatprep.subr.mxu0 0.0
      %3073 = vmatpush1.msra.mxu0 0.0
      %3074 = vmatprep.subr.mxu0 0.0
      %3075 = vmatpush1.msra.mxu0 0.0
      %3076 = vmatprep.subr.mxu0 0.0
      %3077 = vmatpush1.msra.mxu0 0.0
      %3078 = vmatprep.subr.mxu0 0.0
      %3079 = vmatpush1.msra.mxu0 0.0
      %3080 = vmatprep.subr.mxu0 0.0
      %3081 = vmatpush1.msra.mxu0 0.0
      %3082 = vmatprep.subr.mxu0 0.0
      %3083 = vmatpush1.msra.mxu0 0.0
      %3084 = vmatprep.subr.mxu0 0.0
      %3085 = vmatpush1.msra.mxu0 0.0
      %3086 = vmatprep.subr.mxu0 0.0
      %3087 = vmatpush1.msra.mxu0 0.0
      %3088 = vmatprep.subr.mxu0 0.0
      %3089 = vmatpush1.msra.mxu0 0.0
      %3090 = vmatprep.subr.mxu0 0.0
      %3091 = vmatpush1.msra.mxu0 0.0
      %3092 = vmatprep.subr.mxu0 0.0
      %3093 = vmatpush1.msra.mxu0 0.0
      %3094 = vmatprep.subr.mxu0 0.0
      %3095 = vmatpush1.msra.mxu0 0.0
      %3096 = vmatprep.subr.mxu0 0.0
      %3097 = vmatpush1.msra.mxu0 0.0
      %3098 = vmatprep.subr.mxu0 0.0
      %3099 = vmatpush1.msra.mxu0 0.0
      %3100 = vmatprep.subr.mxu0 0.0
      %3101 = vmatpush1.msra.mxu0 0.0
      %3102 = vmatprep.subr.mxu0 0.0
      %3103 = vmatpush1.msra.mxu0 0.0
      %3104 = vmatprep.subr.mxu0 0.0
      %3105 = vmatpush1.msra.mxu0 0.0
      %3106 = vmatprep.mubr.f32.mxu0 0.0
      %3107 = vmatmul.mubr.f32.gmra.mrb[0].mxu0 %v3040
      %v3108 = vpop.f32.mrb[0].mxu0
      %v3109 = vadd.f32 0.0, %v3108
      %v3110 = vpop.f32.mrb[0].mxu0
      %3111 = vdwg.mxu0
      %v3113 = vsel %vm1173, %v3109, 0
      %3115 = vmatprep.subr.mxu0 0.0
      %3116 = vmatpush1.msra.mxu0 %v2355
      %3117 = vmatprep.subr.mxu0 0.0
      %3118 = vmatpush1.msra.mxu0 0.0
      %3119 = vmatprep.subr.mxu0 0.0
      %3120 = vmatpush1.msra.mxu0 0.0
      %3121 = vmatprep.subr.mxu0 0.0
      %3122 = vmatpush1.msra.mxu0 0.0
      %3123 = vmatprep.subr.mxu0 0.0
      %3124 = vmatpush1.msra.mxu0 0.0
      %3125 = vmatprep.subr.mxu0 0.0
      %3126 = vmatpush1.msra.mxu0 0.0
      %3127 = vmatprep.subr.mxu0 0.0
      %3128 = vmatpush1.msra.mxu0 0.0
      %3129 = vmatprep.subr.mxu0 0.0
      %3130 = vmatpush1.msra.mxu0 0.0
      %3131 = vmatprep.subr.mxu0 0.0
      %3132 = vmatpush1.msra.mxu0 0.0
      %3133 = vmatprep.subr.mxu0 0.0
      %3134 = vmatpush1.msra.mxu0 0.0
      %3135 = vmatprep.subr.mxu0 0.0
      %3136 = vmatpush1.msra.mxu0 0.0
      %3137 = vmatprep.subr.mxu0 0.0
      %3138 = vmatpush1.msra.mxu0 0.0
      %3139 = vmatprep.subr.mxu0 0.0
      %3140 = vmatpush1.msra.mxu0 0.0
      %3141 = vmatprep.subr.mxu0 0.0
      %3142 = vmatpush1.msra.mxu0 0.0
      %3143 = vmatprep.subr.mxu0 0.0
      %3144 = vmatpush1.msra.mxu0 0.0
      %3145 = vmatprep.subr.mxu0 0.0
      %3146 = vmatpush1.msra.mxu0 0.0
      %3147 = vmatprep.subr.mxu0 0.0
      %3148 = vmatpush1.msra.mxu0 0.0
      %3149 = vmatprep.subr.mxu0 0.0
      %3150 = vmatpush1.msra.mxu0 0.0
      %3151 = vmatprep.subr.mxu0 0.0
      %3152 = vmatpush1.msra.mxu0 0.0
      %3153 = vmatprep.subr.mxu0 0.0
      %3154 = vmatpush1.msra.mxu0 0.0
      %3155 = vmatprep.subr.mxu0 0.0
      %3156 = vmatpush1.msra.mxu0 0.0
      %3157 = vmatprep.subr.mxu0 0.0
      %3158 = vmatpush1.msra.mxu0 0.0
      %3159 = vmatprep.subr.mxu0 0.0
      %3160 = vmatpush1.msra.mxu0 0.0
      %3161 = vmatprep.subr.mxu0 0.0
      %3162 = vmatpush1.msra.mxu0 0.0
      %3163 = vmatprep.subr.mxu0 0.0
      %3164 = vmatpush1.msra.mxu0 0.0
      %3165 = vmatprep.subr.mxu0 0.0
      %3166 = vmatpush1.msra.mxu0 0.0
      %3167 = vmatprep.subr.mxu0 0.0
      %3168 = vmatpush1.msra.mxu0 0.0
      %3169 = vmatprep.subr.mxu0 0.0
      %3170 = vmatpush1.msra.mxu0 0.0
      %3171 = vmatprep.subr.mxu0 0.0
      %3172 = vmatpush1.msra.mxu0 0.0
      %3173 = vmatprep.subr.mxu0 0.0
      %3174 = vmatpush1.msra.mxu0 0.0
      %3175 = vmatprep.subr.mxu0 0.0
      %3176 = vmatpush1.msra.mxu0 0.0
      %3177 = vmatprep.subr.mxu0 0.0
      %3178 = vmatpush1.msra.mxu0 0.0
      %3179 = vmatprep.mubr.f32.mxu0 0.0
      %3180 = vmatmul.mubr.f32.gmra.mrb[0].mxu0 %v3113
      %v3181 = vpop.f32.mrb[0].mxu0
      %v3182 = vadd.f32 0.0, %v3181
      %v3183 = vpop.f32.mrb[0].mxu0
      %3184 = vdwg.mxu0
      %v3185 = vadd.f32 %v2942, %v3182
      %3186 = vrot.lane.b32.xlu0 %v2463, 104
      %v3187 = vpop.permute.xlu0 %3186
      %3188 = vrot.lane.b32.xlu0 %v2463, 72
      %v3189 = vpop.permute.xlu0 %3188
      %v3190 = vsel %vm1173, %v3187, 0
      %v3192 = vsel %vm1173, %v3189, 0
      %3194 = vmatprep.subr.mxu0 0.0
      %3195 = vmatpush1.xpose.msra.mxu0 %v3192
      %3196 = vmatprep.subr.mxu0 0.0
      %3197 = vmatpush1.xpose.msra.mxu0 0.0
      %3198 = vmatprep.subr.mxu0 0.0
      %3199 = vmatpush1.xpose.msra.mxu0 0.0
      %3200 = vmatprep.subr.mxu0 0.0
      %3201 = vmatpush1.xpose.msra.mxu0 0.0
      %3202 = vmatprep.subr.mxu0 0.0
      %3203 = vmatpush1.xpose.msra.mxu0 0.0
      %3204 = vmatprep.subr.mxu0 0.0
      %3205 = vmatpush1.xpose.msra.mxu0 0.0
      %3206 = vmatprep.subr.mxu0 0.0
      %3207 = vmatpush1.xpose.msra.mxu0 0.0
      %3208 = vmatprep.subr.mxu0 0.0
      %3209 = vmatpush1.xpose.msra.mxu0 0.0
      %3210 = vmatprep.subr.mxu0 0.0
      %3211 = vmatpush1.xpose.msra.mxu0 0.0
      %3212 = vmatprep.subr.mxu0 0.0
      %3213 = vmatpush1.xpose.msra.mxu0 0.0
      %3214 = vmatprep.subr.mxu0 0.0
      %3215 = vmatpush1.xpose.msra.mxu0 0.0
      %3216 = vmatprep.subr.mxu0 0.0
      %3217 = vmatpush1.xpose.msra.mxu0 0.0
      %3218 = vmatprep.subr.mxu0 0.0
      %3219 = vmatpush1.xpose.msra.mxu0 0.0
      %3220 = vmatprep.subr.mxu0 0.0
      %3221 = vmatpush1.xpose.msra.mxu0 0.0
      %3222 = vmatprep.subr.mxu0 0.0
      %3223 = vmatpush1.xpose.msra.mxu0 0.0
      %3224 = vmatprep.subr.mxu0 0.0
      %3225 = vmatpush1.xpose.msra.mxu0 0.0
      %3226 = vmatprep.subr.mxu0 0.0
      %3227 = vmatpush1.xpose.msra.mxu0 0.0
      %3228 = vmatprep.subr.mxu0 0.0
      %3229 = vmatpush1.xpose.msra.mxu0 0.0
      %3230 = vmatprep.subr.mxu0 0.0
      %3231 = vmatpush1.xpose.msra.mxu0 0.0
      %3232 = vmatprep.subr.mxu0 0.0
      %3233 = vmatpush1.xpose.msra.mxu0 0.0
      %3234 = vmatprep.subr.mxu0 0.0
      %3235 = vmatpush1.xpose.msra.mxu0 0.0
      %3236 = vmatprep.subr.mxu0 0.0
      %3237 = vmatpush1.xpose.msra.mxu0 0.0
      %3238 = vmatprep.subr.mxu0 0.0
      %3239 = vmatpush1.xpose.msra.mxu0 0.0
      %3240 = vmatprep.subr.mxu0 0.0
      %3241 = vmatpush1.xpose.msra.mxu0 0.0
      %3242 = vmatprep.subr.mxu0 0.0
      %3243 = vmatpush1.xpose.msra.mxu0 0.0
      %3244 = vmatprep.subr.mxu0 0.0
      %3245 = vmatpush1.xpose.msra.mxu0 0.0
      %3246 = vmatprep.subr.mxu0 0.0
      %3247 = vmatpush1.xpose.msra.mxu0 0.0
      %3248 = vmatprep.subr.mxu0 0.0
      %3249 = vmatpush1.xpose.msra.mxu0 0.0
      %3250 = vmatprep.subr.mxu0 0.0
      %3251 = vmatpush1.xpose.msra.mxu0 0.0
      %3252 = vmatprep.subr.mxu0 0.0
      %3253 = vmatpush1.xpose.msra.mxu0 0.0
      %3254 = vmatprep.subr.mxu0 0.0
      %3255 = vmatpush1.xpose.msra.mxu0 0.0
      %3256 = vmatprep.subr.mxu0 0.0
      %3257 = vmatpush1.xpose.msra.mxu0 0.0
      %3258 = vmatprep.mubr.f32.mxu0 0.0
      %3259 = vmatmul.mubr.f32.gmra.mrb[0].mxu0 %v3190
      %v3260 = vpop.f32.mrb[0].mxu0
      %v3261 = vadd.f32 0.0, %v3260
      %v3262 = vpop.f32.mrb[0].mxu0
      %3263 = vdwg.mxu0
      %v3264 = vmul.f32 %v3261, 0.35355338
      %v3265 = vsel %vm1253, -1e+09, %v3264
      %v3266 = vsel %vm1173, %v3265, -inf
      %3267 = vmax.xlane.f32.xlu0 %v3266
      %v3268 = vpop.xlane.xlu0 %3267
      %v3269 = vsub.f32 %v3265, %v3268
      %v3270 = vmul.f32 %v3269, 1.442695
      %v3271 = vpow.pop %v3270
      %v3272 = vsel %vm1173, %v3271, 0.0
      %3273 = vadd.xlane.f32.xlu0 %v3272
      %v3274 = vpop.xlane.xlu0 %3273
      %v3275 = vrcp.pop %v3274
      %v3276 = vmul.f32 %v3271, %v3275
      %3277 = vrot.lane.b32.xlu0 %v2463, 40
      %v3278 = vpop.permute.xlu0 %3277
      %v3281 = vsel %vm1173, %v3276, 0
      %3283 = vmatprep.subr.mxu0 0.0
      %3284 = vmatpush1.msra.mxu0 %v3278
      %3285 = vmatprep.subr.mxu0 0.0
      %3286 = vmatpush1.msra.mxu0 0.0
      %3287 = vmatprep.subr.mxu0 0.0
      %3288 = vmatpush1.msra.mxu0 0.0
      %3289 = vmatprep.subr.mxu0 0.0
      %3290 = vmatpush1.msra.mxu0 0.0
      %3291 = vmatprep.subr.mxu0 0.0
      %3292 = vmatpush1.msra.mxu0 0.0
      %3293 = vmatprep.subr.mxu0 0.0
      %3294 = vmatpush1.msra.mxu0 0.0
      %3295 = vmatprep.subr.mxu0 0.0
      %3296 = vmatpush1.msra.mxu0 0.0
      %3297 = vmatprep.subr.mxu0 0.0
      %3298 = vmatpush1.msra.mxu0 0.0
      %3299 = vmatprep.subr.mxu0 0.0
      %3300 = vmatpush1.msra.mxu0 0.0
      %3301 = vmatprep.subr.mxu0 0.0
      %3302 = vmatpush1.msra.mxu0 0.0
      %3303 = vmatprep.subr.mxu0 0.0
      %3304 = vmatpush1.msra.mxu0 0.0
      %3305 = vmatprep.subr.mxu0 0.0
      %3306 = vmatpush1.msra.mxu0 0.0
      %3307 = vmatprep.subr.mxu0 0.0
      %3308 = vmatpush1.msra.mxu0 0.0
      %3309 = vmatprep.subr.mxu0 0.0
      %3310 = vmatpush1.msra.mxu0 0.0
      %3311 = vmatprep.subr.mxu0 0.0
      %3312 = vmatpush1.msra.mxu0 0.0
      %3313 = vmatprep.subr.mxu0 0.0
      %3314 = vmatpush1.msra.mxu0 0.0
      %3315 = vmatprep.subr.mxu0 0.0
      %3316 = vmatpush1.msra.mxu0 0.0
      %3317 = vmatprep.subr.mxu0 0.0
      %3318 = vmatpush1.msra.mxu0 0.0
      %3319 = vmatprep.subr.mxu0 0.0
      %3320 = vmatpush1.msra.mxu0 0.0
      %3321 = vmatprep.subr.mxu0 0.0
      %3322 = vmatpush1.msra.mxu0 0.0
      %3323 = vmatprep.subr.mxu0 0.0
      %3324 = vmatpush1.msra.mxu0 0.0
      %3325 = vmatprep.subr.mxu0 0.0
      %3326 = vmatpush1.msra.mxu0 0.0
      %3327 = vmatprep.subr.mxu0 0.0
      %3328 = vmatpush1.msra.mxu0 0.0
      %3329 = vmatprep.subr.mxu0 0.0
      %3330 = vmatpush1.msra.mxu0 0.0
      %3331 = vmatprep.subr.mxu0 0.0
      %3332 = vmatpush1.msra.mxu0 0.0
      %3333 = vmatprep.subr.mxu0 0.0
      %3334 = vmatpush1.msra.mxu0 0.0
      %3335 = vmatprep.subr.mxu0 0.0
      %3336 = vmatpush1.msra.mxu0 0.0
      %3337 = vmatprep.subr.mxu0 0.0
      %3338 = vmatpush1.msra.mxu0 0.0
      %3339 = vmatprep.subr.mxu0 0.0
      %3340 = vmatpush1.msra.mxu0 0.0
      %3341 = vmatprep.subr.mxu0 0.0
      %3342 = vmatpush1.msra.mxu0 0.0
      %3343 = vmatprep.subr.mxu0 0.0
      %3344 = vmatpush1.msra.mxu0 0.0
      %3345 = vmatprep.subr.mxu0 0.0
      %3346 = vmatpush1.msra.mxu0 0.0
      %3347 = vmatprep.mubr.f32.mxu0 0.0
      %3348 = vmatmul.mubr.f32.gmra.mrb[0].mxu0 %v3281
      %v3349 = vpop.f32.mrb[0].mxu0
      %v3350 = vadd.f32 0.0, %v3349
      %v3351 = vpop.f32.mrb[0].mxu0
      %3352 = vdwg.mxu0
      %v3354 = vsel %vm1173, %v3350, 0
      %3356 = vmatprep.subr.mxu0 0.0
      %3357 = vmatpush1.msra.mxu0 %v2356
      %3358 = vmatprep.subr.mxu0 0.0
      %3359 = vmatpush1.msra.mxu0 0.0
      %3360 = vmatprep.subr.mxu0 0.0
      %3361 = vmatpush1.msra.mxu0 0.0
      %3362 = vmatprep.subr.mxu0 0.0
      %3363 = vmatpush1.msra.mxu0 0.0
      %3364 = vmatprep.subr.mxu0 0.0
      %3365 = vmatpush1.msra.mxu0 0.0
      %3366 = vmatprep.subr.mxu0 0.0
      %3367 = vmatpush1.msra.mxu0 0.0
      %3368 = vmatprep.subr.mxu0 0.0
      %3369 = vmatpush1.msra.mxu0 0.0
      %3370 = vmatprep.subr.mxu0 0.0
      %3371 = vmatpush1.msra.mxu0 0.0
      %3372 = vmatprep.subr.mxu0 0.0
      %3373 = vmatpush1.msra.mxu0 0.0
      %3374 = vmatprep.subr.mxu0 0.0
      %3375 = vmatpush1.msra.mxu0 0.0
      %3376 = vmatprep.subr.mxu0 0.0
      %3377 = vmatpush1.msra.mxu0 0.0
      %3378 = vmatprep.subr.mxu0 0.0
      %3379 = vmatpush1.msra.mxu0 0.0
      %3380 = vmatprep.subr.mxu0 0.0
      %3381 = vmatpush1.msra.mxu0 0.0
      %3382 = vmatprep.subr.mxu0 0.0
      %3383 = vmatpush1.msra.mxu0 0.0
      %3384 = vmatprep.subr.mxu0 0.0
      %3385 = vmatpush1.msra.mxu0 0.0
      %3386 = vmatprep.subr.mxu0 0.0
      %3387 = vmatpush1.msra.mxu0 0.0
      %3388 = vmatprep.subr.mxu0 0.0
      %3389 = vmatpush1.msra.mxu0 0.0
      %3390 = vmatprep.subr.mxu0 0.0
      %3391 = vmatpush1.msra.mxu0 0.0
      %3392 = vmatprep.subr.mxu0 0.0
      %3393 = vmatpush1.msra.mxu0 0.0
      %3394 = vmatprep.subr.mxu0 0.0
      %3395 = vmatpush1.msra.mxu0 0.0
      %3396 = vmatprep.subr.mxu0 0.0
      %3397 = vmatpush1.msra.mxu0 0.0
      %3398 = vmatprep.subr.mxu0 0.0
      %3399 = vmatpush1.msra.mxu0 0.0
      %3400 = vmatprep.subr.mxu0 0.0
      %3401 = vmatpush1.msra.mxu0 0.0
      %3402 = vmatprep.subr.mxu0 0.0
      %3403 = vmatpush1.msra.mxu0 0.0
      %3404 = vmatprep.subr.mxu0 0.0
      %3405 = vmatpush1.msra.mxu0 0.0
      %3406 = vmatprep.subr.mxu0 0.0
      %3407 = vmatpush1.msra.mxu0 0.0
      %3408 = vmatprep.subr.mxu0 0.0
      %3409 = vmatpush1.msra.mxu0 0.0
      %3410 = vmatprep.subr.mxu0 0.0
      %3411 = vmatpush1.msra.mxu0 0.0
      %3412 = vmatprep.subr.mxu0 0.0
      %3413 = vmatpush1.msra.mxu0 0.0
      %3414 = vmatprep.subr.mxu0 0.0
      %3415 = vmatpush1.msra.mxu0 0.0
      %3416 = vmatprep.subr.mxu0 0.0
      %3417 = vmatpush1.msra.mxu0 0.0
      %3418 = vmatprep.subr.mxu0 0.0
      %3419 = vmatpush1.msra.mxu0 0.0
      %3420 = vmatprep.mubr.f32.mxu0 0.0
      %3421 = vmatmul.mubr.f32.gmra.mrb[0].mxu0 %v3354
      %v3422 = vpop.f32.mrb[0].mxu0
      %v3423 = vadd.f32 0.0, %v3422
      %v3424 = vpop.f32.mrb[0].mxu0
      %3425 = vdwg.mxu0
      %v3426 = vadd.f32 %v3185, %v3423
      %v3427 = vadd.f32 %v2349, %v3426
      %v3428 = vlaneseq
      %v3429 = vshrl.u32 %v3428, 7
      %v3430 = vsub.s32 2, %v3429
      %v3431 = vrot.slane %v2351, %v3430
      %v3432 = vadd.f32 %v3427, %v3431
      %v3433 = vsel %vm624, %v3432, 0.0
      %3434 = vadd.xlane.f32.xlu0 %v3433
      %v3435 = vpop.xlane.xlu0 %3434
      %v3436 = vmul.f32 %v3435, %v1065
      %v3437 = vsub.f32 %v3432, %v3436
      %v3438 = vmul.f32 %v3437, %v3437
      %v3439 = vsel %vm624, %v3438, 0.0
      %3440 = vadd.xlane.f32.xlu0 %v3439
      %v3441 = vpop.xlane.xlu0 %3440
      %v3442 = vmul.f32 %v3441, %v1065
      %v3443 = vadd.f32 %v3442, 1e-12
      %v3444 = vrsqrt.pop %v3443
      %v3445 = vmul.f32 %v3437, %v3444
      %v3446 = vlaneseq
      %v3447 = vshrl.u32 %v3446, 7
      %v3448 = vsub.s32 3, %v3447
      %v3449 = vrot.slane %v2351, %v3448
      %v3450 = vmul.f32 %v3449, %v3445
      %v3451 = vlaneseq
      %v3452 = vshrl.u32 %v3451, 7
      %v3453 = vsub.s32 4, %v3452
      %v3454 = vrot.slane %v2351, %v3453
      %v3455 = vadd.f32 %v3450, %v3454
      %s3456 = scalar_lea.vmem %s12, 32
      %v3457 = vld [vmem:[%s3456] sm:$0xff]
      %v3458 = vld [vmem:[%s3456 + $0x8] sm:$0xff]
      %v3459 = vld [vmem:[%s3456 + $0x10] sm:$0xff]
      %v3460 = vld [vmem:[%s3456 + $0x18] sm:$0xff]
      %s3461 = scalar_lea.vmem %s13, 1
      %v3462 = vld [vmem:[%s3461] sm:$0x1]
      %v3464 = vlaneseq
      %v3465 = vshrl.u32 %v3464, 7
      %v3466 = vsub.s32 0, %v3465
      %v3467 = vrot.slane %v3462, %v3466
      %v3470 = vsel %vm624, %v3455, 0
      %3472 = vmatprep.subr.mxu0 0.0
      %3473 = vmatpush1.msra.mxu0 %v3457
      %3474 = vmatprep.subr.mxu0 0.0
      %3475 = vmatpush1.msra.mxu0 %v3458
      %3476 = vmatprep.subr.mxu0 0.0
      %3477 = vmatpush1.msra.mxu0 %v3459
      %3478 = vmatprep.subr.mxu0 0.0
      %3479 = vmatpush1.msra.mxu0 %v3460
      %3480 = vmatprep.subr.mxu0 0.0
      %3481 = vmatpush1.msra.mxu0 0.0
      %3482 = vmatprep.subr.mxu0 0.0
      %3483 = vmatpush1.msra.mxu0 0.0
      %3484 = vmatprep.subr.mxu0 0.0
      %3485 = vmatpush1.msra.mxu0 0.0
      %3486 = vmatprep.subr.mxu0 0.0
      %3487 = vmatpush1.msra.mxu0 0.0
      %3488 = vmatprep.subr.mxu0 0.0
      %3489 = vmatpush1.msra.mxu0 0.0
      %3490 = vmatprep.subr.mxu0 0.0
      %3491 = vmatpush1.msra.mxu0 0.0
      %3492 = vmatprep.subr.mxu0 0.0
      %3493 = vmatpush1.msra.mxu0 0.0
      %3494 = vmatprep.subr.mxu0 0.0
      %3495 = vmatpush1.msra.mxu0 0.0
      %3496 = vmatprep.subr.mxu0 0.0
      %3497 = vmatpush1.msra.mxu0 0.0
      %3498 = vmatprep.subr.mxu0 0.0
      %3499 = vmatpush1.msra.mxu0 0.0
      %3500 = vmatprep.subr.mxu0 0.0
      %3501 = vmatpush1.msra.mxu0 0.0
      %3502 = vmatprep.subr.mxu0 0.0
      %3503 = vmatpush1.msra.mxu0 0.0
      %3504 = vmatprep.subr.mxu0 0.0
      %3505 = vmatpush1.msra.mxu0 0.0
      %3506 = vmatprep.subr.mxu0 0.0
      %3507 = vmatpush1.msra.mxu0 0.0
      %3508 = vmatprep.subr.mxu0 0.0
      %3509 = vmatpush1.msra.mxu0 0.0
      %3510 = vmatprep.subr.mxu0 0.0
      %3511 = vmatpush1.msra.mxu0 0.0
      %3512 = vmatprep.subr.mxu0 0.0
      %3513 = vmatpush1.msra.mxu0 0.0
      %3514 = vmatprep.subr.mxu0 0.0
      %3515 = vmatpush1.msra.mxu0 0.0
      %3516 = vmatprep.subr.mxu0 0.0
      %3517 = vmatpush1.msra.mxu0 0.0
      %3518 = vmatprep.subr.mxu0 0.0
      %3519 = vmatpush1.msra.mxu0 0.0
      %3520 = vmatprep.subr.mxu0 0.0
      %3521 = vmatpush1.msra.mxu0 0.0
      %3522 = vmatprep.subr.mxu0 0.0
      %3523 = vmatpush1.msra.mxu0 0.0
      %3524 = vmatprep.subr.mxu0 0.0
      %3525 = vmatpush1.msra.mxu0 0.0
      %3526 = vmatprep.subr.mxu0 0.0
      %3527 = vmatpush1.msra.mxu0 0.0
      %3528 = vmatprep.subr.mxu0 0.0
      %3529 = vmatpush1.msra.mxu0 0.0
      %3530 = vmatprep.subr.mxu0 0.0
      %3531 = vmatpush1.msra.mxu0 0.0
      %3532 = vmatprep.subr.mxu0 0.0
      %3533 = vmatpush1.msra.mxu0 0.0
      %3534 = vmatprep.subr.mxu0 0.0
      %3535 = vmatpush1.msra.mxu0 0.0
      %3536 = vmatprep.mubr.f32.mxu0 0.0
      %3537 = vmatmul.mubr.f32.gmra.mrb[0].mxu0 %v3470
      %v3538 = vpop.f32.mrb[0].mxu0
      %v3539 = vadd.f32 %v3467, %v3538
      %v3540 = vpop.f32.mrb[0].mxu0
      %3541 = vdwg.mxu0
      %v3542 = vmul.f32 %v3539, 0.5
      %v3543 = vmul.f32 %v3539, 0.044715
      %v3544 = vmul.f32 %v3543, %v3539
      %v3545 = vmul.f32 %v3544, %v3539
      %v3546 = vadd.f32 %v3539, %v3545
      %v3547 = vmul.f32 %v3546, 0.7978846
      %v3548 = vtanh.pop %v3547
      %v3549 = vadd.f32 %v3548, 1.0
      %v3550 = vmul.f32 %v3542, %v3549
      %s3551 = scalar_lea.vmem %s14, 128
      %v3552 = vld [vmem:[%s3551] sm:$0xff]
      %v3553 = vld [vmem:[%s3551 + $0x8] sm:$0xff]
      %v3554 = vld [vmem:[%s3551 + $0x10] sm:$0xff]
      %v3555 = vld [vmem:[%s3551 + $0x18] sm:$0xff]
      %v3556 = vld [vmem:[%s3551 + $0x20] sm:$0xff]
      %v3557 = vld [vmem:[%s3551 + $0x28] sm:$0xff]
      %v3558 = vld [vmem:[%s3551 + $0x30] sm:$0xff]
      %v3559 = vld [vmem:[%s3551 + $0x38] sm:$0xff]
      %v3560 = vld [vmem:[%s3551 + $0x40] sm:$0xff]
      %v3561 = vld [vmem:[%s3551 + $0x48] sm:$0xff]
      %v3562 = vld [vmem:[%s3551 + $0x50] sm:$0xff]
      %v3563 = vld [vmem:[%s3551 + $0x58] sm:$0xff]
      %v3564 = vld [vmem:[%s3551 + $0x60] sm:$0xff]
      %v3565 = vld [vmem:[%s3551 + $0x68] sm:$0xff]
      %v3566 = vld [vmem:[%s3551 + $0x70] sm:$0xff]
      %v3567 = vld [vmem:[%s3551 + $0x78] sm:$0xff]
      %v3568 = vlaneseq
      %v3569 = vshrl.u32 %v3568, 7
      %v3570 = vsub.s32 5, %v3569
      %v3571 = vrot.slane %v2351, %v3570
      %3572 = vmatprep.subr.mxu0 0.0
      %3573 = vmatpush1.msra.mxu0 %v3552
      %3574 = vmatprep.subr.mxu0 0.0
      %3575 = vmatpush1.msra.mxu0 %v3553
      %3576 = vmatprep.subr.mxu0 0.0
      %3577 = vmatpush1.msra.mxu0 %v3554
      %3578 = vmatprep.subr.mxu0 0.0
      %3579 = vmatpush1.msra.mxu0 %v3555
      %3580 = vmatprep.subr.mxu0 0.0
      %3581 = vmatpush1.msra.mxu0 %v3556
      %3582 = vmatprep.subr.mxu0 0.0
      %3583 = vmatpush1.msra.mxu0 %v3557
      %3584 = vmatprep.subr.mxu0 0.0
      %3585 = vmatpush1.msra.mxu0 %v3558
      %3586 = vmatprep.subr.mxu0 0.0
      %3587 = vmatpush1.msra.mxu0 %v3559
      %3588 = vmatprep.subr.mxu0 0.0
      %3589 = vmatpush1.msra.mxu0 %v3560
      %3590 = vmatprep.subr.mxu0 0.0
      %3591 = vmatpush1.msra.mxu0 %v3561
      %3592 = vmatprep.subr.mxu0 0.0
      %3593 = vmatpush1.msra.mxu0 %v3562
      %3594 = vmatprep.subr.mxu0 0.0
      %3595 = vmatpush1.msra.mxu0 %v3563
      %3596 = vmatprep.subr.mxu0 0.0
      %3597 = vmatpush1.msra.mxu0 %v3564
      %3598 = vmatprep.subr.mxu0 0.0
      %3599 = vmatpush1.msra.mxu0 %v3565
      %3600 = vmatprep.subr.mxu0 0.0
      %3601 = vmatpush1.msra.mxu0 %v3566
      %3602 = vmatprep.subr.mxu0 0.0
      %3603 = vmatpush1.msra.mxu0 %v3567
      %3604 = vmatprep.subr.mxu0 0.0
      %3605 = vmatpush1.msra.mxu0 0.0
      %3606 = vmatprep.subr.mxu0 0.0
      %3607 = vmatpush1.msra.mxu0 0.0
      %3608 = vmatprep.subr.mxu0 0.0
      %3609 = vmatpush1.msra.mxu0 0.0
      %3610 = vmatprep.subr.mxu0 0.0
      %3611 = vmatpush1.msra.mxu0 0.0
      %3612 = vmatprep.subr.mxu0 0.0
      %3613 = vmatpush1.msra.mxu0 0.0
      %3614 = vmatprep.subr.mxu0 0.0
      %3615 = vmatpush1.msra.mxu0 0.0
      %3616 = vmatprep.subr.mxu0 0.0
      %3617 = vmatpush1.msra.mxu0 0.0
      %3618 = vmatprep.subr.mxu0 0.0
      %3619 = vmatpush1.msra.mxu0 0.0
      %3620 = vmatprep.subr.mxu0 0.0
      %3621 = vmatpush1.msra.mxu0 0.0
      %3622 = vmatprep.subr.mxu0 0.0
      %3623 = vmatpush1.msra.mxu0 0.0
      %3624 = vmatprep.subr.mxu0 0.0
      %3625 = vmatpush1.msra.mxu0 0.0
      %3626 = vmatprep.subr.mxu0 0.0
      %3627 = vmatpush1.msra.mxu0 0.0
      %3628 = vmatprep.subr.mxu0 0.0
      %3629 = vmatpush1.msra.mxu0 0.0
      %3630 = vmatprep.subr.mxu0 0.0
      %3631 = vmatpush1.msra.mxu0 0.0
      %3632 = vmatprep.subr.mxu0 0.0
      %3633 = vmatpush1.msra.mxu0 0.0
      %3634 = vmatprep.subr.mxu0 0.0
      %3635 = vmatpush1.msra.mxu0 0.0
      %3636 = vmatprep.mubr.f32.mxu0 0.0
      %3637 = vmatmul.mubr.f32.gmra.mrb[0].mxu0 %v3550
      %v3638 = vpop.f32.mrb[0].mxu0
      %v3639 = vadd.f32 %v3571, %v3638
      %v3640 = vpop.f32.mrb[0].mxu0
      %3641 = vdwg.mxu0
      %v3642 = vadd.f32 %v3432, %v3639
      %v3643 = vsel %vm624, %v3642, 0.0
      %3644 = vadd.xlane.f32.xlu0 %v3643
      %v3645 = vpop.xlane.xlu0 %3644
      %v3646 = vmul.f32 %v3645, %v1065
      %v3647 = vsub.f32 %v3642, %v3646
      %v3648 = vmul.f32 %v3647, %v3647
      %v3649 = vsel %vm624, %v3648, 0.0
      %3650 = vadd.xlane.f32.xlu0 %v3649
      %v3651 = vpop.xlane.xlu0 %3650
      %v3652 = vmul.f32 %v3651, %v1065
      %v3653 = vadd.f32 %v3652, 1e-12
      %v3654 = vrsqrt.pop %v3653
      %v3655 = vmul.f32 %v3647, %v3654
      %v3656 = vlaneseq
      %v3657 = vshrl.u32 %v3656, 7
      %v3658 = vsub.s32 5, %v3657
      %v3659 = vrot.slane %v617, %v3658
      %v3660 = vmul.f32 %v3659, %v3655
      %v3661 = vlaneseq
      %v3662 = vshrl.u32 %v3661, 7
      %v3663 = vsub.s32 6, %v3662
      %v3664 = vrot.slane %v617, %v3663
      %v3665 = vadd.f32 %v3660, %v3664
      %3666 = vst.msk [vmem:[%s612] sm:$0xff] %vm624, %v3665
      %p3667 = scmp.lt.s32.totalorder %s29, 1
      %s3668 = scalar_select %p3667, %s29, 1
      %s3669 = smul.addr %s3668, 8
      %s3670 = scalar_lea.vmem %s16, %s3669
      %p3671 = scmp.lt.s32.totalorder %s29, 1
      %s3672 = scalar_select %p3671, %s29, 1
      %s3673 = smul.addr %s3672, 8
      %s3674 = scalar_lea.vmem %s17, %s3673
      // Predicated region
      $region85: #{diffu_xstart_forward.1} parent=83 // pred_check
        %p3675 = pneg %p408
      $region86: #{diffu_xstart_forward.1} parent=83 // pred_check_branch
        %3677 = sbr.rel (%p3675) target = $region88
      $region87: #{diffu_xstart_forward.1} parent=83 // pred_region
        _
      $region88: #{diffu_xstart_forward.1} parent=83 // pred_fallthru
        _
      // Predicated region
      $region89: #{diffu_xstart_forward.1} parent=83 // pred_check
        %p3678 = pneg %p434
      $region90: #{diffu_xstart_forward.1} parent=83 // pred_check_branch
        %3680 = sbr.rel (%p3678) target = $region92
      $region91: #{diffu_xstart_forward.1} parent=83 // pred_region
        _
      $region92: #{diffu_xstart_forward.1} parent=83 // pred_fallthru
        _
    $region84: #{diffu_xstart_forward.1} parent=5 // pred_fallthru
      _
    %p3681 = scmp.le.s32.totalorder 2, %s24
    // Predicated region
    $region93: #{diffu_xstart_forward.1} parent=5 // pred_check
      %p3682 = pneg %p3681
    $region94: #{diffu_xstart_forward.1} parent=5 // pred_check_branch
      %3684 = sbr.rel (%p3682) target = $region96
    $region95: #{diffu_xstart_forward.1} parent=5 // pred_region
      %s3685 = ssub.s32 %s24, 2
      // Predicated region
      $region97: #{diffu_xstart_forward.1} parent=95 // pred_check
        %p3686 = pneg %p414
      $region98: #{diffu_xstart_forward.1} parent=95 // pred_check_branch
        %3688 = sbr.rel (%p3686) target = $region100
      $region99: #{diffu_xstart_forward.1} parent=95 // pred_region
        %p3689 = scmp.lt.s32.totalorder %s30, 1
        %s3690 = scalar_select %p3689, %s30, 1
        %s3691 = smul.addr %s3690, 8
        %s3692 = scalar_lea.vmem %s16, %s3691
      $region100: #{diffu_xstart_forward.1} parent=95 // pred_fallthru
        _
      // Predicated region
      $region101: #{diffu_xstart_forward.1} parent=95 // pred_check
        %p3693 = pneg %p440
      $region102: #{diffu_xstart_forward.1} parent=95 // pred_check_branch
        %3695 = sbr.rel (%p3693) target = $region104
      $region103: #{diffu_xstart_forward.1} parent=95 // pred_region
        %p3696 = scmp.lt.s32.totalorder %s30, 1
        %s3697 = scalar_select %p3696, %s30, 1
        %s3698 = smul.addr %s3697, 8
        %s3699 = scalar_lea.vmem %s17, %s3698
      $region104: #{diffu_xstart_forward.1} parent=95 // pred_fallthru
        _
    $region96: #{diffu_xstart_forward.1} parent=5 // pred_fallthru
      _
  $region6: #{diffu_xstart_forward.1} parent=0 // loop_footer
    %s28 = sadd.s32 1, %s24
  $region7: #{diffu_xstart_forward.1} parent=0 // loop_footer_branch
    %23 = sbr.rel target = $region3
  $region8: #{diffu_xstart_forward.1} parent=0 // loop_exit
    _

</llo_original>
